<compile_context>
chip_gen: v6e
topology: v6e:2x2x1
jax: 0.10.0
libtpu: 0.0.40
codegen_flags: <defaults>
</compile_context>

<pallas_src>
import functools

import jax
import jax.numpy as jnp
from jax.experimental import pallas as pl
from jax.experimental.pallas import tpu as pltpu


# --------------------------------------------------------------------------
# Host-side weight folding (plain JAX, runs once, tiny tensors)
# --------------------------------------------------------------------------

def _conv_band(w_oihw, g_in, g_out, dil_in):
    """Fold a PyTorch (Cout, Cin, KH, KW) conv weight into KH band matrices.

    Band i maps a lane-folded input row (lane = Cin*g + c, g = "W group") to a
    lane-folded output row (lane = Cout*wo + f):
        out[:, Cout*wo + f] += in[:, Cin*(dil_in*(wo + j)) + c] * w[f, c, i, j]
    `dil_in` = 2 lets the band read from a W-dilated (un-compacted) pooled input.
    Returns (KH, g_in*Cin, g_out*Cout), float32.
    """
    cout, cin, kh, kw = w_oihw.shape
    wt = jnp.transpose(w_oihw, (2, 3, 1, 0)).astype(jnp.float32)   # (kh, kw, cin, cout)
    gi = jnp.arange(g_in)
    wo = jnp.arange(g_out)
    jj = jnp.arange(kw)
    sel = (gi[None, :, None] == dil_in * (wo[None, None, :] + jj[:, None, None]))
    sel = sel.astype(jnp.float32)                                  # (kw, g_in, g_out)
    band = jnp.einsum('jab,ijcf->iacbf', sel, wt)                  # (kh, g_in, cin, g_out, cout)
    return band.reshape(kh, g_in * cin, g_out * cout)


def _fold_fc1(fc1_w):
    """Fold fc1 (120, 400) [PyTorch CHW flatten: idx = c*25 + h*5 + w] into
    5 per-row matrices of shape (240, 120) matching the dilated pooled-2 layout
    (valid inputs at lane 32*wp + c of row 4*hp)."""
    w = fc1_w.astype(jnp.float32).reshape(120, 16, 5, 5)   # (o, c, h, w)
    w = jnp.transpose(w, (2, 3, 1, 0))                     # (h, w, c, o)
    w = jnp.pad(w, ((0, 0), (0, 0), (0, 16), (0, 0)))      # channel stride 16 -> 32
    w = w.reshape(5, 5 * 32, 120)                          # row index = 32*w + c
    w = jnp.pad(w, ((0, 0), (0, 240 - 160), (0, 0)))       # (5, 240, 120)
    return w


# --------------------------------------------------------------------------
# The fused Pallas kernel (processes `ips` images per grid step)
# --------------------------------------------------------------------------

def _netmp_kernel(x_ref, c1w_ref, c1b_ref, c2w_ref, c2b_ref,
                  f1w_ref, f1b_ref, f2w_ref, f2b_ref, f3w_ref, f3b_ref,
                  out_ref, *, ips):
    for k in range(ips):
        # folded input image: rows = H (36, zero padded), lanes = W*C (108), bf16
        x = x_ref[k]                                                    # (36, 108)

        # ---- conv1 + bias + ReLU: 5 banded matmuls (one per kernel row) ----
        acc1 = jnp.dot(x[0:32, :], c1w_ref[0], preferred_element_type=jnp.float32)
        for i in range(1, 5):
            acc1 = acc1 + jnp.dot(x[i:i + 32, :], c1w_ref[i],
                                  preferred_element_type=jnp.float32)
        y1 = jnp.maximum(acc1 + c1b_ref[...], 0.0)                      # (32, 192)

        # ---- maxpool 2x2 #1, kept dilated (valid at even rows / lane 12*b) ----
        p1 = jnp.maximum(y1[0:31, :], y1[1:32, :])                      # H pairs
        p1 = jnp.maximum(p1[:, 0:186], p1[:, 6:192])                    # W pairs
        p1 = p1.astype(jnp.bfloat16)                                    # (31, 186)

        # ---- conv2 + bias + ReLU on the dilated pooled map ----
        acc2 = jnp.dot(p1[0:20, :], c2w_ref[0], preferred_element_type=jnp.float32)
        for i in range(1, 5):
            acc2 = acc2 + jnp.dot(p1[2 * i:2 * i + 20, :], c2w_ref[i],
                                  preferred_element_type=jnp.float32)
        y2 = jnp.maximum(acc2 + c2b_ref[...], 0.0)                      # (20, 256)

        # ---- maxpool 2x2 #2 (valid at rows 4*e, lanes 32*wp + c) ----
        p2 = jnp.maximum(y2[0:18, :], y2[2:20, :])
        p2 = jnp.maximum(p2[:, 0:240], p2[:, 16:256])
        p2 = p2.astype(jnp.bfloat16)                                    # (18, 240)

        # ---- fc1 + ReLU (flatten folded into the (5, 240, 120) weight) ----
        h = jnp.dot(p2[0:1, :], f1w_ref[0], preferred_element_type=jnp.float32)
        for r in range(1, 5):
            h = h + jnp.dot(p2[4 * r:4 * r + 1, :], f1w_ref[r],
                            preferred_element_type=jnp.float32)
        h = jnp.maximum(h + f1b_ref[...], 0.0)                          # (1, 120)

        # ---- fc2 + ReLU, fc3 ----
        h = jnp.maximum(
            jnp.dot(h.astype(jnp.bfloat16), f2w_ref[...],
                    preferred_element_type=jnp.float32) + f2b_ref[...], 0.0)
        logits = jnp.dot(h.astype(jnp.bfloat16), f3w_ref[...],
                         preferred_element_type=jnp.float32) + f3b_ref[...]
        out_ref[k] = logits                                             # (1, 10)


# --------------------------------------------------------------------------
# Wrapper
# --------------------------------------------------------------------------

def _pick_images_per_step(n):
    for d in (8, 4, 2, 1):
        if n % d == 0:
            return d
    return 1


def netmp_forward(params, x_nchw):
    n = x_nchw.shape[0]
    ips = _pick_images_per_step(n)

    # NCHW -> NHWC, zero-pad H,W 32 -> 36, fold (W, C) into the lane dim.
    xh = jnp.transpose(x_nchw, (0, 2, 3, 1)).astype(jnp.float32)
    xh = jnp.pad(xh, ((0, 0), (0, 4), (0, 4), (0, 0)))
    xf = xh.reshape(n, 36, 36 * 3).astype(jnp.bfloat16)

    # Fold weights / biases once (bf16 band matrices, f32 biases).
    c1w = _conv_band(params['conv1_w'], 36, 32, 1).astype(jnp.bfloat16)   # (5, 108, 192)
    c2w = _conv_band(params['conv2_w'], 31, 16, 2).astype(jnp.bfloat16)   # (5, 186, 256)
    f1w = _fold_fc1(params['fc1_w']).astype(jnp.bfloat16)                 # (5, 240, 120)
    f2w = jnp.transpose(params['fc2_w']).astype(jnp.bfloat16)             # (120, 84)
    f3w = jnp.transpose(params['fc3_w']).astype(jnp.bfloat16)             # (84, 10)
    c1b = jnp.tile(params['conv1_b'].astype(jnp.float32), 32)[None, :]    # (1, 192)
    c2b = jnp.tile(params['conv2_b'].astype(jnp.float32), 16)[None, :]    # (1, 256)
    f1b = params['fc1_b'].astype(jnp.float32)[None, :]
    f2b = params['fc2_b'].astype(jnp.float32)[None, :]
    f3b = params['fc3_b'].astype(jnp.float32)[None, :]

    def full(shape):
        return pl.BlockSpec(shape, lambda i, _s=len(shape): (0,) * _s)

    flops = n * (5 * 2 * 32 * 108 * 192 + 5 * 2 * 20 * 186 * 256
                 + 5 * 2 * 240 * 120 + 2 * 120 * 84 + 2 * 84 * 10)
    bytes_accessed = (xf.size * 2 + n * 10 * 4
                      + (c1w.size + c2w.size + f1w.size + f2w.size + f3w.size) * 2
                      + (c1b.size + c2b.size + f1b.size + f2b.size + f3b.size) * 4)

    out = pl.pallas_call(
        functools.partial(_netmp_kernel, ips=ips),
        out_shape=jax.ShapeDtypeStruct((n, 1, 10), jnp.float32),
        grid=(n // ips,),
        in_specs=[
            pl.BlockSpec((ips, 36, 108), lambda i: (i, 0, 0)),
            full((5, 108, 192)), full((1, 192)),
            full((5, 186, 256)), full((1, 256)),
            full((5, 240, 120)), full((1, 120)),
            full((120, 84)), full((1, 84)),
            full((84, 10)), full((1, 10)),
        ],
        out_specs=pl.BlockSpec((ips, 1, 10), lambda i: (i, 0, 0)),
        compiler_params=pltpu.CompilerParams(
            dimension_semantics=("parallel",),
            vmem_limit_bytes=32 * 1024 * 1024),
        cost_estimate=pl.CostEstimate(flops=int(flops), transcendentals=0,
                                      bytes_accessed=int(bytes_accessed)),
    )(xf, c1w, c1b, c2w, c2b, f1w, f1b, f2w, f2b, f3w, f3b)
    return out.reshape(n, 10)


# --------------------------------------------------------------------------
# Pure-JAX reference (PyTorch semantics), parameters, demo
# --------------------------------------------------------------------------

def netmp_reference(params, x_nchw):
    x = x_nchw.astype(jnp.float32)

    def conv(x, w, b):
        y = jax.lax.conv_general_dilated(
            x, w.astype(jnp.float32), window_strides=(1, 1), padding='VALID',
            dimension_numbers=('NCHW', 'OIHW', 'NCHW'))
        return jax.nn.relu(y + b.astype(jnp.float32)[None, :, None, None])

    def pool(x):
        return jax.lax.reduce_window(x, -jnp.inf, jax.lax.max,
                                     (1, 1, 2, 2), (1, 1, 2, 2), 'VALID')

    x = pool(conv(x, params['conv1_w'], params['conv1_b']))
    x = pool(conv(x, params['conv2_w'], params['conv2_b']))
    x = x.reshape(x.shape[0], -1)                       # PyTorch CHW flatten
    x = jax.nn.relu(x @ params['fc1_w'].T + params['fc1_b'])
    x = jax.nn.relu(x @ params['fc2_w'].T + params['fc2_b'])
    return x @ params['fc3_w'].T + params['fc3_b']


def init_params(key, scale=0.3):
    # PyTorch tensor layouts; scale chosen so the numeric self-check is meaningful.
    ks = jax.random.split(key, 10)
    u = lambda k, shape: jax.random.uniform(k, shape, jnp.float32, -scale, scale)
    return {
        'conv1_w': u(ks[0], (6, 3, 5, 5)),   'conv1_b': u(ks[1], (6,)),
        'conv2_w': u(ks[2], (16, 6, 5, 5)),  'conv2_b': u(ks[3], (16,)),
        'fc1_w':   u(ks[4], (120, 400)),     'fc1_b':   u(ks[5], (120,)),
        'fc2_w':   u(ks[6], (84, 120)),      'fc2_b':   u(ks[7], (84,)),
        'fc3_w':   u(ks[8], (10, 84)),       'fc3_b':   u(ks[9], (10,)),
    }


if __name__ == "__main__":
    key = jax.random.PRNGKey(0)
    pkey, xkey = jax.random.split(key)
    params = init_params(pkey)
    x = jax.random.normal(xkey, (2, 3, 32, 32), jnp.float32)

    out = jax.jit(netmp_forward)(params, x)
    out = jax.block_until_ready(out)
    assert out.shape == (2, 10) and out.dtype == jnp.float32

    ref = netmp_reference(params, x)
    err = float(jnp.max(jnp.abs(out - ref)))
    tol = 0.05 * (float(jnp.max(jnp.abs(ref))) + 1.0)   # bf16-matmul tolerance
    assert err < tol, f"mismatch vs reference: max abs err {err} (tol {tol})"

    print("KERNEL_OK")
</pallas_src>

<mosaic_0001>
module attributes {stable_mosaic.version = 11 : i64} {
  func.func @_netmp_kernel(%arg0: i32, %arg1: memref<2x36x108xbf16, #tpu.memory_space<vmem>>, %arg2: memref<5x108x192xbf16, #tpu.memory_space<vmem>>, %arg3: memref<1x192xf32, #tpu.memory_space<vmem>>, %arg4: memref<5x186x256xbf16, #tpu.memory_space<vmem>>, %arg5: memref<1x256xf32, #tpu.memory_space<vmem>>, %arg6: memref<5x240x120xbf16, #tpu.memory_space<vmem>>, %arg7: memref<1x120xf32, #tpu.memory_space<vmem>>, %arg8: memref<120x84xbf16, #tpu.memory_space<vmem>>, %arg9: memref<1x84xf32, #tpu.memory_space<vmem>>, %arg10: memref<84x10xbf16, #tpu.memory_space<vmem>>, %arg11: memref<1x10xf32, #tpu.memory_space<vmem>>, %arg12: memref<2x1x10xf32, #tpu.memory_space<vmem>>) attributes {dimension_semantics = [#tpu.dimension_semantics<parallel>], iteration_bounds = array<i64: 1>, scalar_prefetch = 0 : i64, scratch_operands = 0 : i64, tpu.core_type = #tpu.core_type<tc>, window_params = [{transform_indices = @transform_0, window_bounds = array<i64: 2, 36, 108>}, {pipeline_mode = #tpu.pipeline_mode<synchronous>, transform_indices = @transform_1, window_bounds = array<i64: 5, 108, 192>}, {pipeline_mode = #tpu.pipeline_mode<synchronous>, transform_indices = @transform_2, window_bounds = array<i64: 1, 192>}, {pipeline_mode = #tpu.pipeline_mode<synchronous>, transform_indices = @transform_3, window_bounds = array<i64: 5, 186, 256>}, {pipeline_mode = #tpu.pipeline_mode<synchronous>, transform_indices = @transform_4, window_bounds = array<i64: 1, 256>}, {pipeline_mode = #tpu.pipeline_mode<synchronous>, transform_indices = @transform_5, window_bounds = array<i64: 5, 240, 120>}, {pipeline_mode = #tpu.pipeline_mode<synchronous>, transform_indices = @transform_6, window_bounds = array<i64: 1, 120>}, {pipeline_mode = #tpu.pipeline_mode<synchronous>, transform_indices = @transform_7, window_bounds = array<i64: 120, 84>}, {pipeline_mode = #tpu.pipeline_mode<synchronous>, transform_indices = @transform_8, window_bounds = array<i64: 1, 84>}, {pipeline_mode = #tpu.pipeline_mode<synchronous>, transform_indices = @transform_9, window_bounds = array<i64: 84, 10>}, {pipeline_mode = #tpu.pipeline_mode<synchronous>, transform_indices = @transform_10, window_bounds = array<i64: 1, 10>}, {transform_indices = @transform_11, window_bounds = array<i64: 2, 1, 10>}]} {
    %c0 = arith.constant 0 : index
    %c0_0 = arith.constant 0 : index
    %c0_1 = arith.constant 0 : index
    %0 = vector.load %arg1[%c0, %c0_0, %c0_1] : memref<2x36x108xbf16, #tpu.memory_space<vmem>>, vector<1x36x108xbf16>
    %1 = vector.shape_cast %0 : vector<1x36x108xbf16> to vector<36x108xbf16>
    %2 = vector.extract_strided_slice %1 {offsets = [0, 0], sizes = [32, 108], strides = [1, 1]} : vector<36x108xbf16> to vector<32x108xbf16>
    %c0_2 = arith.constant 0 : index
    %c0_3 = arith.constant 0 : index
    %c0_4 = arith.constant 0 : index
    %3 = vector.load %arg2[%c0_2, %c0_3, %c0_4] : memref<5x108x192xbf16, #tpu.memory_space<vmem>>, vector<1x108x192xbf16>
    %4 = vector.shape_cast %3 : vector<1x108x192xbf16> to vector<108x192xbf16>
    %cst = arith.constant dense<0.000000e+00> : vector<32x192xf32>
    %5 = tpu.matmul %2, %4, %cst {dimension_numbers = #tpu.dot_dimension_numbers<[1], [0], [0], [1], [0, 0, 1, 1], [], []>} : vector<32x108xbf16>, vector<108x192xbf16>, vector<32x192xf32> -> vector<32x192xf32>
    %6 = vector.extract_strided_slice %1 {offsets = [1, 0], sizes = [32, 108], strides = [1, 1]} : vector<36x108xbf16> to vector<32x108xbf16>
    %c1 = arith.constant 1 : index
    %c0_5 = arith.constant 0 : index
    %c0_6 = arith.constant 0 : index
    %7 = vector.load %arg2[%c1, %c0_5, %c0_6] : memref<5x108x192xbf16, #tpu.memory_space<vmem>>, vector<1x108x192xbf16>
    %8 = vector.shape_cast %7 : vector<1x108x192xbf16> to vector<108x192xbf16>
    %cst_7 = arith.constant dense<0.000000e+00> : vector<32x192xf32>
    %9 = tpu.matmul %6, %8, %cst_7 {dimension_numbers = #tpu.dot_dimension_numbers<[1], [0], [0], [1], [0, 0, 1, 1], [], []>} : vector<32x108xbf16>, vector<108x192xbf16>, vector<32x192xf32> -> vector<32x192xf32>
    %10 = arith.addf %5, %9 : vector<32x192xf32>
    %11 = vector.extract_strided_slice %1 {offsets = [2, 0], sizes = [32, 108], strides = [1, 1]} : vector<36x108xbf16> to vector<32x108xbf16>
    %c2 = arith.constant 2 : index
    %c0_8 = arith.constant 0 : index
    %c0_9 = arith.constant 0 : index
    %12 = vector.load %arg2[%c2, %c0_8, %c0_9] : memref<5x108x192xbf16, #tpu.memory_space<vmem>>, vector<1x108x192xbf16>
    %13 = vector.shape_cast %12 : vector<1x108x192xbf16> to vector<108x192xbf16>
    %cst_10 = arith.constant dense<0.000000e+00> : vector<32x192xf32>
    %14 = tpu.matmul %11, %13, %cst_10 {dimension_numbers = #tpu.dot_dimension_numbers<[1], [0], [0], [1], [0, 0, 1, 1], [], []>} : vector<32x108xbf16>, vector<108x192xbf16>, vector<32x192xf32> -> vector<32x192xf32>
    %15 = arith.addf %10, %14 : vector<32x192xf32>
    %16 = vector.extract_strided_slice %1 {offsets = [3, 0], sizes = [32, 108], strides = [1, 1]} : vector<36x108xbf16> to vector<32x108xbf16>
    %c3 = arith.constant 3 : index
    %c0_11 = arith.constant 0 : index
    %c0_12 = arith.constant 0 : index
    %17 = vector.load %arg2[%c3, %c0_11, %c0_12] : memref<5x108x192xbf16, #tpu.memory_space<vmem>>, vector<1x108x192xbf16>
    %18 = vector.shape_cast %17 : vector<1x108x192xbf16> to vector<108x192xbf16>
    %cst_13 = arith.constant dense<0.000000e+00> : vector<32x192xf32>
    %19 = tpu.matmul %16, %18, %cst_13 {dimension_numbers = #tpu.dot_dimension_numbers<[1], [0], [0], [1], [0, 0, 1, 1], [], []>} : vector<32x108xbf16>, vector<108x192xbf16>, vector<32x192xf32> -> vector<32x192xf32>
    %20 = arith.addf %15, %19 : vector<32x192xf32>
    %21 = vector.extract_strided_slice %1 {offsets = [4, 0], sizes = [32, 108], strides = [1, 1]} : vector<36x108xbf16> to vector<32x108xbf16>
    %c4 = arith.constant 4 : index
    %c0_14 = arith.constant 0 : index
    %c0_15 = arith.constant 0 : index
    %22 = vector.load %arg2[%c4, %c0_14, %c0_15] : memref<5x108x192xbf16, #tpu.memory_space<vmem>>, vector<1x108x192xbf16>
    %23 = vector.shape_cast %22 : vector<1x108x192xbf16> to vector<108x192xbf16>
    %cst_16 = arith.constant dense<0.000000e+00> : vector<32x192xf32>
    %24 = tpu.matmul %21, %23, %cst_16 {dimension_numbers = #tpu.dot_dimension_numbers<[1], [0], [0], [1], [0, 0, 1, 1], [], []>} : vector<32x108xbf16>, vector<108x192xbf16>, vector<32x192xf32> -> vector<32x192xf32>
    %25 = arith.addf %20, %24 : vector<32x192xf32>
    %c0_17 = arith.constant 0 : index
    %c0_18 = arith.constant 0 : index
    %26 = vector.load %arg3[%c0_17, %c0_18] : memref<1x192xf32, #tpu.memory_space<vmem>>, vector<1x192xf32>
    %27 = vector.broadcast %26 : vector<1x192xf32> to vector<32x192xf32>
    %28 = arith.addf %25, %27 : vector<32x192xf32>
    %cst_19 = arith.constant 0.000000e+00 : f32
    %29 = vector.broadcast %cst_19 : f32 to vector<32x192xf32>
    %30 = arith.maximumf %28, %29 : vector<32x192xf32>
    %31 = vector.extract_strided_slice %30 {offsets = [0, 0], sizes = [31, 192], strides = [1, 1]} : vector<32x192xf32> to vector<31x192xf32>
    %32 = vector.extract_strided_slice %30 {offsets = [1, 0], sizes = [31, 192], strides = [1, 1]} : vector<32x192xf32> to vector<31x192xf32>
    %33 = arith.maximumf %31, %32 : vector<31x192xf32>
    %34 = vector.extract_strided_slice %33 {offsets = [0, 0], sizes = [31, 186], strides = [1, 1]} : vector<31x192xf32> to vector<31x186xf32>
    %35 = vector.extract_strided_slice %33 {offsets = [0, 6], sizes = [31, 186], strides = [1, 1]} : vector<31x192xf32> to vector<31x186xf32>
    %36 = arith.maximumf %34, %35 : vector<31x186xf32>
    %37 = arith.truncf %36 : vector<31x186xf32> to vector<31x186xbf16>
    %38 = vector.extract_strided_slice %37 {offsets = [0, 0], sizes = [20, 186], strides = [1, 1]} : vector<31x186xbf16> to vector<20x186xbf16>
    %c0_20 = arith.constant 0 : index
    %c0_21 = arith.constant 0 : index
    %c0_22 = arith.constant 0 : index
    %39 = vector.load %arg4[%c0_20, %c0_21, %c0_22] : memref<5x186x256xbf16, #tpu.memory_space<vmem>>, vector<1x186x256xbf16>
    %40 = vector.shape_cast %39 : vector<1x186x256xbf16> to vector<186x256xbf16>
    %cst_23 = arith.constant dense<0.000000e+00> : vector<20x256xf32>
    %41 = tpu.matmul %38, %40, %cst_23 {dimension_numbers = #tpu.dot_dimension_numbers<[1], [0], [0], [1], [0, 0, 1, 1], [], []>} : vector<20x186xbf16>, vector<186x256xbf16>, vector<20x256xf32> -> vector<20x256xf32>
    %42 = vector.extract_strided_slice %37 {offsets = [2, 0], sizes = [20, 186], strides = [1, 1]} : vector<31x186xbf16> to vector<20x186xbf16>
    %c1_24 = arith.constant 1 : index
    %c0_25 = arith.constant 0 : index
    %c0_26 = arith.constant 0 : index
    %43 = vector.load %arg4[%c1_24, %c0_25, %c0_26] : memref<5x186x256xbf16, #tpu.memory_space<vmem>>, vector<1x186x256xbf16>
    %44 = vector.shape_cast %43 : vector<1x186x256xbf16> to vector<186x256xbf16>
    %cst_27 = arith.constant dense<0.000000e+00> : vector<20x256xf32>
    %45 = tpu.matmul %42, %44, %cst_27 {dimension_numbers = #tpu.dot_dimension_numbers<[1], [0], [0], [1], [0, 0, 1, 1], [], []>} : vector<20x186xbf16>, vector<186x256xbf16>, vector<20x256xf32> -> vector<20x256xf32>
    %46 = arith.addf %41, %45 : vector<20x256xf32>
    %47 = vector.extract_strided_slice %37 {offsets = [4, 0], sizes = [20, 186], strides = [1, 1]} : vector<31x186xbf16> to vector<20x186xbf16>
    %c2_28 = arith.constant 2 : index
    %c0_29 = arith.constant 0 : index
    %c0_30 = arith.constant 0 : index
    %48 = vector.load %arg4[%c2_28, %c0_29, %c0_30] : memref<5x186x256xbf16, #tpu.memory_space<vmem>>, vector<1x186x256xbf16>
    %49 = vector.shape_cast %48 : vector<1x186x256xbf16> to vector<186x256xbf16>
    %cst_31 = arith.constant dense<0.000000e+00> : vector<20x256xf32>
    %50 = tpu.matmul %47, %49, %cst_31 {dimension_numbers = #tpu.dot_dimension_numbers<[1], [0], [0], [1], [0, 0, 1, 1], [], []>} : vector<20x186xbf16>, vector<186x256xbf16>, vector<20x256xf32> -> vector<20x256xf32>
    %51 = arith.addf %46, %50 : vector<20x256xf32>
    %52 = vector.extract_strided_slice %37 {offsets = [6, 0], sizes = [20, 186], strides = [1, 1]} : vector<31x186xbf16> to vector<20x186xbf16>
    %c3_32 = arith.constant 3 : index
    %c0_33 = arith.constant 0 : index
    %c0_34 = arith.constant 0 : index
    %53 = vector.load %arg4[%c3_32, %c0_33, %c0_34] : memref<5x186x256xbf16, #tpu.memory_space<vmem>>, vector<1x186x256xbf16>
    %54 = vector.shape_cast %53 : vector<1x186x256xbf16> to vector<186x256xbf16>
    %cst_35 = arith.constant dense<0.000000e+00> : vector<20x256xf32>
    %55 = tpu.matmul %52, %54, %cst_35 {dimension_numbers = #tpu.dot_dimension_numbers<[1], [0], [0], [1], [0, 0, 1, 1], [], []>} : vector<20x186xbf16>, vector<186x256xbf16>, vector<20x256xf32> -> vector<20x256xf32>
    %56 = arith.addf %51, %55 : vector<20x256xf32>
    %57 = vector.extract_strided_slice %37 {offsets = [8, 0], sizes = [20, 186], strides = [1, 1]} : vector<31x186xbf16> to vector<20x186xbf16>
    %c4_36 = arith.constant 4 : index
    %c0_37 = arith.constant 0 : index
    %c0_38 = arith.constant 0 : index
    %58 = vector.load %arg4[%c4_36, %c0_37, %c0_38] : memref<5x186x256xbf16, #tpu.memory_space<vmem>>, vector<1x186x256xbf16>
    %59 = vector.shape_cast %58 : vector<1x186x256xbf16> to vector<186x256xbf16>
    %cst_39 = arith.constant dense<0.000000e+00> : vector<20x256xf32>
    %60 = tpu.matmul %57, %59, %cst_39 {dimension_numbers = #tpu.dot_dimension_numbers<[1], [0], [0], [1], [0, 0, 1, 1], [], []>} : vector<20x186xbf16>, vector<186x256xbf16>, vector<20x256xf32> -> vector<20x256xf32>
    %61 = arith.addf %56, %60 : vector<20x256xf32>
    %c0_40 = arith.constant 0 : index
    %c0_41 = arith.constant 0 : index
    %62 = vector.load %arg5[%c0_40, %c0_41] : memref<1x256xf32, #tpu.memory_space<vmem>>, vector<1x256xf32>
    %63 = vector.broadcast %62 : vector<1x256xf32> to vector<20x256xf32>
    %64 = arith.addf %61, %63 : vector<20x256xf32>
    %cst_42 = arith.constant 0.000000e+00 : f32
    %65 = vector.broadcast %cst_42 : f32 to vector<20x256xf32>
    %66 = arith.maximumf %64, %65 : vector<20x256xf32>
    %67 = vector.extract_strided_slice %66 {offsets = [0, 0], sizes = [18, 256], strides = [1, 1]} : vector<20x256xf32> to vector<18x256xf32>
    %68 = vector.extract_strided_slice %66 {offsets = [2, 0], sizes = [18, 256], strides = [1, 1]} : vector<20x256xf32> to vector<18x256xf32>
    %69 = arith.maximumf %67, %68 : vector<18x256xf32>
    %70 = vector.extract_strided_slice %69 {offsets = [0, 0], sizes = [18, 240], strides = [1, 1]} : vector<18x256xf32> to vector<18x240xf32>
    %71 = vector.extract_strided_slice %69 {offsets = [0, 16], sizes = [18, 240], strides = [1, 1]} : vector<18x256xf32> to vector<18x240xf32>
    %72 = arith.maximumf %70, %71 : vector<18x240xf32>
    %73 = arith.truncf %72 : vector<18x240xf32> to vector<18x240xbf16>
    %74 = vector.extract_strided_slice %73 {offsets = [0, 0], sizes = [1, 240], strides = [1, 1]} : vector<18x240xbf16> to vector<1x240xbf16>
    %c0_43 = arith.constant 0 : index
    %c0_44 = arith.constant 0 : index
    %c0_45 = arith.constant 0 : index
    %75 = vector.load %arg6[%c0_43, %c0_44, %c0_45] : memref<5x240x120xbf16, #tpu.memory_space<vmem>>, vector<1x240x120xbf16>
    %76 = vector.shape_cast %75 : vector<1x240x120xbf16> to vector<240x120xbf16>
    %cst_46 = arith.constant dense<0.000000e+00> : vector<1x120xf32>
    %77 = tpu.matmul %74, %76, %cst_46 {dimension_numbers = #tpu.dot_dimension_numbers<[1], [0], [0], [1], [0, 0, 1, 1], [], []>} : vector<1x240xbf16>, vector<240x120xbf16>, vector<1x120xf32> -> vector<1x120xf32>
    %78 = vector.extract_strided_slice %73 {offsets = [4, 0], sizes = [1, 240], strides = [1, 1]} : vector<18x240xbf16> to vector<1x240xbf16>
    %c1_47 = arith.constant 1 : index
    %c0_48 = arith.constant 0 : index
    %c0_49 = arith.constant 0 : index
    %79 = vector.load %arg6[%c1_47, %c0_48, %c0_49] : memref<5x240x120xbf16, #tpu.memory_space<vmem>>, vector<1x240x120xbf16>
    %80 = vector.shape_cast %79 : vector<1x240x120xbf16> to vector<240x120xbf16>
    %cst_50 = arith.constant dense<0.000000e+00> : vector<1x120xf32>
    %81 = tpu.matmul %78, %80, %cst_50 {dimension_numbers = #tpu.dot_dimension_numbers<[1], [0], [0], [1], [0, 0, 1, 1], [], []>} : vector<1x240xbf16>, vector<240x120xbf16>, vector<1x120xf32> -> vector<1x120xf32>
    %82 = arith.addf %77, %81 : vector<1x120xf32>
    %83 = vector.extract_strided_slice %73 {offsets = [8, 0], sizes = [1, 240], strides = [1, 1]} : vector<18x240xbf16> to vector<1x240xbf16>
    %c2_51 = arith.constant 2 : index
    %c0_52 = arith.constant 0 : index
    %c0_53 = arith.constant 0 : index
    %84 = vector.load %arg6[%c2_51, %c0_52, %c0_53] : memref<5x240x120xbf16, #tpu.memory_space<vmem>>, vector<1x240x120xbf16>
    %85 = vector.shape_cast %84 : vector<1x240x120xbf16> to vector<240x120xbf16>
    %cst_54 = arith.constant dense<0.000000e+00> : vector<1x120xf32>
    %86 = tpu.matmul %83, %85, %cst_54 {dimension_numbers = #tpu.dot_dimension_numbers<[1], [0], [0], [1], [0, 0, 1, 1], [], []>} : vector<1x240xbf16>, vector<240x120xbf16>, vector<1x120xf32> -> vector<1x120xf32>
    %87 = arith.addf %82, %86 : vector<1x120xf32>
    %88 = vector.extract_strided_slice %73 {offsets = [12, 0], sizes = [1, 240], strides = [1, 1]} : vector<18x240xbf16> to vector<1x240xbf16>
    %c3_55 = arith.constant 3 : index
    %c0_56 = arith.constant 0 : index
    %c0_57 = arith.constant 0 : index
    %89 = vector.load %arg6[%c3_55, %c0_56, %c0_57] : memref<5x240x120xbf16, #tpu.memory_space<vmem>>, vector<1x240x120xbf16>
    %90 = vector.shape_cast %89 : vector<1x240x120xbf16> to vector<240x120xbf16>
    %cst_58 = arith.constant dense<0.000000e+00> : vector<1x120xf32>
    %91 = tpu.matmul %88, %90, %cst_58 {dimension_numbers = #tpu.dot_dimension_numbers<[1], [0], [0], [1], [0, 0, 1, 1], [], []>} : vector<1x240xbf16>, vector<240x120xbf16>, vector<1x120xf32> -> vector<1x120xf32>
    %92 = arith.addf %87, %91 : vector<1x120xf32>
    %93 = vector.extract_strided_slice %73 {offsets = [16, 0], sizes = [1, 240], strides = [1, 1]} : vector<18x240xbf16> to vector<1x240xbf16>
    %c4_59 = arith.constant 4 : index
    %c0_60 = arith.constant 0 : index
    %c0_61 = arith.constant 0 : index
    %94 = vector.load %arg6[%c4_59, %c0_60, %c0_61] : memref<5x240x120xbf16, #tpu.memory_space<vmem>>, vector<1x240x120xbf16>
    %95 = vector.shape_cast %94 : vector<1x240x120xbf16> to vector<240x120xbf16>
    %cst_62 = arith.constant dense<0.000000e+00> : vector<1x120xf32>
    %96 = tpu.matmul %93, %95, %cst_62 {dimension_numbers = #tpu.dot_dimension_numbers<[1], [0], [0], [1], [0, 0, 1, 1], [], []>} : vector<1x240xbf16>, vector<240x120xbf16>, vector<1x120xf32> -> vector<1x120xf32>
    %97 = arith.addf %92, %96 : vector<1x120xf32>
    %c0_63 = arith.constant 0 : index
    %c0_64 = arith.constant 0 : index
    %98 = vector.load %arg7[%c0_63, %c0_64] : memref<1x120xf32, #tpu.memory_space<vmem>>, vector<1x120xf32>
    %99 = arith.addf %97, %98 : vector<1x120xf32>
    %cst_65 = arith.constant 0.000000e+00 : f32
    %100 = vector.broadcast %cst_65 : f32 to vector<1x120xf32>
    %101 = arith.maximumf %99, %100 : vector<1x120xf32>
    %102 = arith.truncf %101 : vector<1x120xf32> to vector<1x120xbf16>
    %c0_66 = arith.constant 0 : index
    %c0_67 = arith.constant 0 : index
    %103 = vector.load %arg8[%c0_66, %c0_67] : memref<120x84xbf16, #tpu.memory_space<vmem>>, vector<120x84xbf16>
    %cst_68 = arith.constant dense<0.000000e+00> : vector<1x84xf32>
    %104 = tpu.matmul %102, %103, %cst_68 {dimension_numbers = #tpu.dot_dimension_numbers<[1], [0], [0], [1], [0, 0, 1, 1], [], []>} : vector<1x120xbf16>, vector<120x84xbf16>, vector<1x84xf32> -> vector<1x84xf32>
    %c0_69 = arith.constant 0 : index
    %c0_70 = arith.constant 0 : index
    %105 = vector.load %arg9[%c0_69, %c0_70] : memref<1x84xf32, #tpu.memory_space<vmem>>, vector<1x84xf32>
    %106 = arith.addf %104, %105 : vector<1x84xf32>
    %cst_71 = arith.constant 0.000000e+00 : f32
    %107 = vector.broadcast %cst_71 : f32 to vector<1x84xf32>
    %108 = arith.maximumf %106, %107 : vector<1x84xf32>
    %109 = arith.truncf %108 : vector<1x84xf32> to vector<1x84xbf16>
    %c0_72 = arith.constant 0 : index
    %c0_73 = arith.constant 0 : index
    %110 = vector.load %arg10[%c0_72, %c0_73] : memref<84x10xbf16, #tpu.memory_space<vmem>>, vector<84x10xbf16>
    %cst_74 = arith.constant dense<0.000000e+00> : vector<1x10xf32>
    %111 = tpu.matmul %109, %110, %cst_74 {dimension_numbers = #tpu.dot_dimension_numbers<[1], [0], [0], [1], [0, 0, 1, 1], [], []>} : vector<1x84xbf16>, vector<84x10xbf16>, vector<1x10xf32> -> vector<1x10xf32>
    %c0_75 = arith.constant 0 : index
    %c0_76 = arith.constant 0 : index
    %112 = vector.load %arg11[%c0_75, %c0_76] : memref<1x10xf32, #tpu.memory_space<vmem>>, vector<1x10xf32>
    %113 = arith.addf %111, %112 : vector<1x10xf32>
    %c0_77 = arith.constant 0 : index
    %c0_78 = arith.constant 0 : index
    %c0_79 = arith.constant 0 : index
    %114 = vector.load %arg12[%c0_77, %c0_78, %c0_79] : memref<2x1x10xf32, #tpu.memory_space<vmem>>, vector<1x1x10xf32>
    %115 = vector.shape_cast %114 : vector<1x1x10xf32> to vector<1x10xf32>
    %116 = vector.shape_cast %113 : vector<1x10xf32> to vector<1x1x10xf32>
    tpu.vector_store %arg12[%c0_77, %c0_78, %c0_79], %116 {strides = array<i32>} : memref<2x1x10xf32, #tpu.memory_space<vmem>>, vector<1x1x10xf32>,
    %c1_80 = arith.constant 1 : index
    %c0_81 = arith.constant 0 : index
    %c0_82 = arith.constant 0 : index
    %117 = vector.load %arg1[%c1_80, %c0_81, %c0_82] : memref<2x36x108xbf16, #tpu.memory_space<vmem>>, vector<1x36x108xbf16>
    %118 = vector.shape_cast %117 : vector<1x36x108xbf16> to vector<36x108xbf16>
    %119 = vector.extract_strided_slice %118 {offsets = [0, 0], sizes = [32, 108], strides = [1, 1]} : vector<36x108xbf16> to vector<32x108xbf16>
    %c0_83 = arith.constant 0 : index
    %c0_84 = arith.constant 0 : index
    %c0_85 = arith.constant 0 : index
    %120 = vector.load %arg2[%c0_83, %c0_84, %c0_85] : memref<5x108x192xbf16, #tpu.memory_space<vmem>>, vector<1x108x192xbf16>
    %121 = vector.shape_cast %120 : vector<1x108x192xbf16> to vector<108x192xbf16>
    %cst_86 = arith.constant dense<0.000000e+00> : vector<32x192xf32>
    %122 = tpu.matmul %119, %121, %cst_86 {dimension_numbers = #tpu.dot_dimension_numbers<[1], [0], [0], [1], [0, 0, 1, 1], [], []>} : vector<32x108xbf16>, vector<108x192xbf16>, vector<32x192xf32> -> vector<32x192xf32>
    %123 = vector.extract_strided_slice %118 {offsets = [1, 0], sizes = [32, 108], strides = [1, 1]} : vector<36x108xbf16> to vector<32x108xbf16>
    %c1_87 = arith.constant 1 : index
    %c0_88 = arith.constant 0 : index
    %c0_89 = arith.constant 0 : index
    %124 = vector.load %arg2[%c1_87, %c0_88, %c0_89] : memref<5x108x192xbf16, #tpu.memory_space<vmem>>, vector<1x108x192xbf16>
    %125 = vector.shape_cast %124 : vector<1x108x192xbf16> to vector<108x192xbf16>
    %cst_90 = arith.constant dense<0.000000e+00> : vector<32x192xf32>
    %126 = tpu.matmul %123, %125, %cst_90 {dimension_numbers = #tpu.dot_dimension_numbers<[1], [0], [0], [1], [0, 0, 1, 1], [], []>} : vector<32x108xbf16>, vector<108x192xbf16>, vector<32x192xf32> -> vector<32x192xf32>
    %127 = arith.addf %122, %126 : vector<32x192xf32>
    %128 = vector.extract_strided_slice %118 {offsets = [2, 0], sizes = [32, 108], strides = [1, 1]} : vector<36x108xbf16> to vector<32x108xbf16>
    %c2_91 = arith.constant 2 : index
    %c0_92 = arith.constant 0 : index
    %c0_93 = arith.constant 0 : index
    %129 = vector.load %arg2[%c2_91, %c0_92, %c0_93] : memref<5x108x192xbf16, #tpu.memory_space<vmem>>, vector<1x108x192xbf16>
    %130 = vector.shape_cast %129 : vector<1x108x192xbf16> to vector<108x192xbf16>
    %cst_94 = arith.constant dense<0.000000e+00> : vector<32x192xf32>
    %131 = tpu.matmul %128, %130, %cst_94 {dimension_numbers = #tpu.dot_dimension_numbers<[1], [0], [0], [1], [0, 0, 1, 1], [], []>} : vector<32x108xbf16>, vector<108x192xbf16>, vector<32x192xf32> -> vector<32x192xf32>
    %132 = arith.addf %127, %131 : vector<32x192xf32>
    %133 = vector.extract_strided_slice %118 {offsets = [3, 0], sizes = [32, 108], strides = [1, 1]} : vector<36x108xbf16> to vector<32x108xbf16>
    %c3_95 = arith.constant 3 : index
    %c0_96 = arith.constant 0 : index
    %c0_97 = arith.constant 0 : index
    %134 = vector.load %arg2[%c3_95, %c0_96, %c0_97] : memref<5x108x192xbf16, #tpu.memory_space<vmem>>, vector<1x108x192xbf16>
    %135 = vector.shape_cast %134 : vector<1x108x192xbf16> to vector<108x192xbf16>
    %cst_98 = arith.constant dense<0.000000e+00> : vector<32x192xf32>
    %136 = tpu.matmul %133, %135, %cst_98 {dimension_numbers = #tpu.dot_dimension_numbers<[1], [0], [0], [1], [0, 0, 1, 1], [], []>} : vector<32x108xbf16>, vector<108x192xbf16>, vector<32x192xf32> -> vector<32x192xf32>
    %137 = arith.addf %132, %136 : vector<32x192xf32>
    %138 = vector.extract_strided_slice %118 {offsets = [4, 0], sizes = [32, 108], strides = [1, 1]} : vector<36x108xbf16> to vector<32x108xbf16>
    %c4_99 = arith.constant 4 : index
    %c0_100 = arith.constant 0 : index
    %c0_101 = arith.constant 0 : index
    %139 = vector.load %arg2[%c4_99, %c0_100, %c0_101] : memref<5x108x192xbf16, #tpu.memory_space<vmem>>, vector<1x108x192xbf16>
    %140 = vector.shape_cast %139 : vector<1x108x192xbf16> to vector<108x192xbf16>
    %cst_102 = arith.constant dense<0.000000e+00> : vector<32x192xf32>
    %141 = tpu.matmul %138, %140, %cst_102 {dimension_numbers = #tpu.dot_dimension_numbers<[1], [0], [0], [1], [0, 0, 1, 1], [], []>} : vector<32x108xbf16>, vector<108x192xbf16>, vector<32x192xf32> -> vector<32x192xf32>
    %142 = arith.addf %137, %141 : vector<32x192xf32>
    %c0_103 = arith.constant 0 : index
    %c0_104 = arith.constant 0 : index
    %143 = vector.load %arg3[%c0_103, %c0_104] : memref<1x192xf32, #tpu.memory_space<vmem>>, vector<1x192xf32>
    %144 = vector.broadcast %143 : vector<1x192xf32> to vector<32x192xf32>
    %145 = arith.addf %142, %144 : vector<32x192xf32>
    %cst_105 = arith.constant 0.000000e+00 : f32
    %146 = vector.broadcast %cst_105 : f32 to vector<32x192xf32>
    %147 = arith.maximumf %145, %146 : vector<32x192xf32>
    %148 = vector.extract_strided_slice %147 {offsets = [0, 0], sizes = [31, 192], strides = [1, 1]} : vector<32x192xf32> to vector<31x192xf32>
    %149 = vector.extract_strided_slice %147 {offsets = [1, 0], sizes = [31, 192], strides = [1, 1]} : vector<32x192xf32> to vector<31x192xf32>
    %150 = arith.maximumf %148, %149 : vector<31x192xf32>
    %151 = vector.extract_strided_slice %150 {offsets = [0, 0], sizes = [31, 186], strides = [1, 1]} : vector<31x192xf32> to vector<31x186xf32>
    %152 = vector.extract_strided_slice %150 {offsets = [0, 6], sizes = [31, 186], strides = [1, 1]} : vector<31x192xf32> to vector<31x186xf32>
    %153 = arith.maximumf %151, %152 : vector<31x186xf32>
    %154 = arith.truncf %153 : vector<31x186xf32> to vector<31x186xbf16>
    %155 = vector.extract_strided_slice %154 {offsets = [0, 0], sizes = [20, 186], strides = [1, 1]} : vector<31x186xbf16> to vector<20x186xbf16>
    %c0_106 = arith.constant 0 : index
    %c0_107 = arith.constant 0 : index
    %c0_108 = arith.constant 0 : index
    %156 = vector.load %arg4[%c0_106, %c0_107, %c0_108] : memref<5x186x256xbf16, #tpu.memory_space<vmem>>, vector<1x186x256xbf16>
    %157 = vector.shape_cast %156 : vector<1x186x256xbf16> to vector<186x256xbf16>
    %cst_109 = arith.constant dense<0.000000e+00> : vector<20x256xf32>
    %158 = tpu.matmul %155, %157, %cst_109 {dimension_numbers = #tpu.dot_dimension_numbers<[1], [0], [0], [1], [0, 0, 1, 1], [], []>} : vector<20x186xbf16>, vector<186x256xbf16>, vector<20x256xf32> -> vector<20x256xf32>
    %159 = vector.extract_strided_slice %154 {offsets = [2, 0], sizes = [20, 186], strides = [1, 1]} : vector<31x186xbf16> to vector<20x186xbf16>
    %c1_110 = arith.constant 1 : index
    %c0_111 = arith.constant 0 : index
    %c0_112 = arith.constant 0 : index
    %160 = vector.load %arg4[%c1_110, %c0_111, %c0_112] : memref<5x186x256xbf16, #tpu.memory_space<vmem>>, vector<1x186x256xbf16>
    %161 = vector.shape_cast %160 : vector<1x186x256xbf16> to vector<186x256xbf16>
    %cst_113 = arith.constant dense<0.000000e+00> : vector<20x256xf32>
    %162 = tpu.matmul %159, %161, %cst_113 {dimension_numbers = #tpu.dot_dimension_numbers<[1], [0], [0], [1], [0, 0, 1, 1], [], []>} : vector<20x186xbf16>, vector<186x256xbf16>, vector<20x256xf32> -> vector<20x256xf32>
    %163 = arith.addf %158, %162 : vector<20x256xf32>
    %164 = vector.extract_strided_slice %154 {offsets = [4, 0], sizes = [20, 186], strides = [1, 1]} : vector<31x186xbf16> to vector<20x186xbf16>
    %c2_114 = arith.constant 2 : index
    %c0_115 = arith.constant 0 : index
    %c0_116 = arith.constant 0 : index
    %165 = vector.load %arg4[%c2_114, %c0_115, %c0_116] : memref<5x186x256xbf16, #tpu.memory_space<vmem>>, vector<1x186x256xbf16>
    %166 = vector.shape_cast %165 : vector<1x186x256xbf16> to vector<186x256xbf16>
    %cst_117 = arith.constant dense<0.000000e+00> : vector<20x256xf32>
    %167 = tpu.matmul %164, %166, %cst_117 {dimension_numbers = #tpu.dot_dimension_numbers<[1], [0], [0], [1], [0, 0, 1, 1], [], []>} : vector<20x186xbf16>, vector<186x256xbf16>, vector<20x256xf32> -> vector<20x256xf32>
    %168 = arith.addf %163, %167 : vector<20x256xf32>
    %169 = vector.extract_strided_slice %154 {offsets = [6, 0], sizes = [20, 186], strides = [1, 1]} : vector<31x186xbf16> to vector<20x186xbf16>
    %c3_118 = arith.constant 3 : index
    %c0_119 = arith.constant 0 : index
    %c0_120 = arith.constant 0 : index
    %170 = vector.load %arg4[%c3_118, %c0_119, %c0_120] : memref<5x186x256xbf16, #tpu.memory_space<vmem>>, vector<1x186x256xbf16>
    %171 = vector.shape_cast %170 : vector<1x186x256xbf16> to vector<186x256xbf16>
    %cst_121 = arith.constant dense<0.000000e+00> : vector<20x256xf32>
    %172 = tpu.matmul %169, %171, %cst_121 {dimension_numbers = #tpu.dot_dimension_numbers<[1], [0], [0], [1], [0, 0, 1, 1], [], []>} : vector<20x186xbf16>, vector<186x256xbf16>, vector<20x256xf32> -> vector<20x256xf32>
    %173 = arith.addf %168, %172 : vector<20x256xf32>
    %174 = vector.extract_strided_slice %154 {offsets = [8, 0], sizes = [20, 186], strides = [1, 1]} : vector<31x186xbf16> to vector<20x186xbf16>
    %c4_122 = arith.constant 4 : index
    %c0_123 = arith.constant 0 : index
    %c0_124 = arith.constant 0 : index
    %175 = vector.load %arg4[%c4_122, %c0_123, %c0_124] : memref<5x186x256xbf16, #tpu.memory_space<vmem>>, vector<1x186x256xbf16>
    %176 = vector.shape_cast %175 : vector<1x186x256xbf16> to vector<186x256xbf16>
    %cst_125 = arith.constant dense<0.000000e+00> : vector<20x256xf32>
    %177 = tpu.matmul %174, %176, %cst_125 {dimension_numbers = #tpu.dot_dimension_numbers<[1], [0], [0], [1], [0, 0, 1, 1], [], []>} : vector<20x186xbf16>, vector<186x256xbf16>, vector<20x256xf32> -> vector<20x256xf32>
    %178 = arith.addf %173, %177 : vector<20x256xf32>
    %c0_126 = arith.constant 0 : index
    %c0_127 = arith.constant 0 : index
    %179 = vector.load %arg5[%c0_126, %c0_127] : memref<1x256xf32, #tpu.memory_space<vmem>>, vector<1x256xf32>
    %180 = vector.broadcast %179 : vector<1x256xf32> to vector<20x256xf32>
    %181 = arith.addf %178, %180 : vector<20x256xf32>
    %cst_128 = arith.constant 0.000000e+00 : f32
    %182 = vector.broadcast %cst_128 : f32 to vector<20x256xf32>
    %183 = arith.maximumf %181, %182 : vector<20x256xf32>
    %184 = vector.extract_strided_slice %183 {offsets = [0, 0], sizes = [18, 256], strides = [1, 1]} : vector<20x256xf32> to vector<18x256xf32>
    %185 = vector.extract_strided_slice %183 {offsets = [2, 0], sizes = [18, 256], strides = [1, 1]} : vector<20x256xf32> to vector<18x256xf32>
    %186 = arith.maximumf %184, %185 : vector<18x256xf32>
    %187 = vector.extract_strided_slice %186 {offsets = [0, 0], sizes = [18, 240], strides = [1, 1]} : vector<18x256xf32> to vector<18x240xf32>
    %188 = vector.extract_strided_slice %186 {offsets = [0, 16], sizes = [18, 240], strides = [1, 1]} : vector<18x256xf32> to vector<18x240xf32>
    %189 = arith.maximumf %187, %188 : vector<18x240xf32>
    %190 = arith.truncf %189 : vector<18x240xf32> to vector<18x240xbf16>
    %191 = vector.extract_strided_slice %190 {offsets = [0, 0], sizes = [1, 240], strides = [1, 1]} : vector<18x240xbf16> to vector<1x240xbf16>
    %c0_129 = arith.constant 0 : index
    %c0_130 = arith.constant 0 : index
    %c0_131 = arith.constant 0 : index
    %192 = vector.load %arg6[%c0_129, %c0_130, %c0_131] : memref<5x240x120xbf16, #tpu.memory_space<vmem>>, vector<1x240x120xbf16>
    %193 = vector.shape_cast %192 : vector<1x240x120xbf16> to vector<240x120xbf16>
    %cst_132 = arith.constant dense<0.000000e+00> : vector<1x120xf32>
    %194 = tpu.matmul %191, %193, %cst_132 {dimension_numbers = #tpu.dot_dimension_numbers<[1], [0], [0], [1], [0, 0, 1, 1], [], []>} : vector<1x240xbf16>, vector<240x120xbf16>, vector<1x120xf32> -> vector<1x120xf32>
    %195 = vector.extract_strided_slice %190 {offsets = [4, 0], sizes = [1, 240], strides = [1, 1]} : vector<18x240xbf16> to vector<1x240xbf16>
    %c1_133 = arith.constant 1 : index
    %c0_134 = arith.constant 0 : index
    %c0_135 = arith.constant 0 : index
    %196 = vector.load %arg6[%c1_133, %c0_134, %c0_135] : memref<5x240x120xbf16, #tpu.memory_space<vmem>>, vector<1x240x120xbf16>
    %197 = vector.shape_cast %196 : vector<1x240x120xbf16> to vector<240x120xbf16>
    %cst_136 = arith.constant dense<0.000000e+00> : vector<1x120xf32>
    %198 = tpu.matmul %195, %197, %cst_136 {dimension_numbers = #tpu.dot_dimension_numbers<[1], [0], [0], [1], [0, 0, 1, 1], [], []>} : vector<1x240xbf16>, vector<240x120xbf16>, vector<1x120xf32> -> vector<1x120xf32>
    %199 = arith.addf %194, %198 : vector<1x120xf32>
    %200 = vector.extract_strided_slice %190 {offsets = [8, 0], sizes = [1, 240], strides = [1, 1]} : vector<18x240xbf16> to vector<1x240xbf16>
    %c2_137 = arith.constant 2 : index
    %c0_138 = arith.constant 0 : index
    %c0_139 = arith.constant 0 : index
    %201 = vector.load %arg6[%c2_137, %c0_138, %c0_139] : memref<5x240x120xbf16, #tpu.memory_space<vmem>>, vector<1x240x120xbf16>
    %202 = vector.shape_cast %201 : vector<1x240x120xbf16> to vector<240x120xbf16>
    %cst_140 = arith.constant dense<0.000000e+00> : vector<1x120xf32>
    %203 = tpu.matmul %200, %202, %cst_140 {dimension_numbers = #tpu.dot_dimension_numbers<[1], [0], [0], [1], [0, 0, 1, 1], [], []>} : vector<1x240xbf16>, vector<240x120xbf16>, vector<1x120xf32> -> vector<1x120xf32>
    %204 = arith.addf %199, %203 : vector<1x120xf32>
    %205 = vector.extract_strided_slice %190 {offsets = [12, 0], sizes = [1, 240], strides = [1, 1]} : vector<18x240xbf16> to vector<1x240xbf16>
    %c3_141 = arith.constant 3 : index
    %c0_142 = arith.constant 0 : index
    %c0_143 = arith.constant 0 : index
    %206 = vector.load %arg6[%c3_141, %c0_142, %c0_143] : memref<5x240x120xbf16, #tpu.memory_space<vmem>>, vector<1x240x120xbf16>
    %207 = vector.shape_cast %206 : vector<1x240x120xbf16> to vector<240x120xbf16>
    %cst_144 = arith.constant dense<0.000000e+00> : vector<1x120xf32>
    %208 = tpu.matmul %205, %207, %cst_144 {dimension_numbers = #tpu.dot_dimension_numbers<[1], [0], [0], [1], [0, 0, 1, 1], [], []>} : vector<1x240xbf16>, vector<240x120xbf16>, vector<1x120xf32> -> vector<1x120xf32>
    %209 = arith.addf %204, %208 : vector<1x120xf32>
    %210 = vector.extract_strided_slice %190 {offsets = [16, 0], sizes = [1, 240], strides = [1, 1]} : vector<18x240xbf16> to vector<1x240xbf16>
    %c4_145 = arith.constant 4 : index
    %c0_146 = arith.constant 0 : index
    %c0_147 = arith.constant 0 : index
    %211 = vector.load %arg6[%c4_145, %c0_146, %c0_147] : memref<5x240x120xbf16, #tpu.memory_space<vmem>>, vector<1x240x120xbf16>
    %212 = vector.shape_cast %211 : vector<1x240x120xbf16> to vector<240x120xbf16>
    %cst_148 = arith.constant dense<0.000000e+00> : vector<1x120xf32>
    %213 = tpu.matmul %210, %212, %cst_148 {dimension_numbers = #tpu.dot_dimension_numbers<[1], [0], [0], [1], [0, 0, 1, 1], [], []>} : vector<1x240xbf16>, vector<240x120xbf16>, vector<1x120xf32> -> vector<1x120xf32>
    %214 = arith.addf %209, %213 : vector<1x120xf32>
    %c0_149 = arith.constant 0 : index
    %c0_150 = arith.constant 0 : index
    %215 = vector.load %arg7[%c0_149, %c0_150] : memref<1x120xf32, #tpu.memory_space<vmem>>, vector<1x120xf32>
    %216 = arith.addf %214, %215 : vector<1x120xf32>
    %cst_151 = arith.constant 0.000000e+00 : f32
    %217 = vector.broadcast %cst_151 : f32 to vector<1x120xf32>
    %218 = arith.maximumf %216, %217 : vector<1x120xf32>
    %219 = arith.truncf %218 : vector<1x120xf32> to vector<1x120xbf16>
    %c0_152 = arith.constant 0 : index
    %c0_153 = arith.constant 0 : index
    %220 = vector.load %arg8[%c0_152, %c0_153] : memref<120x84xbf16, #tpu.memory_space<vmem>>, vector<120x84xbf16>
    %cst_154 = arith.constant dense<0.000000e+00> : vector<1x84xf32>
    %221 = tpu.matmul %219, %220, %cst_154 {dimension_numbers = #tpu.dot_dimension_numbers<[1], [0], [0], [1], [0, 0, 1, 1], [], []>} : vector<1x120xbf16>, vector<120x84xbf16>, vector<1x84xf32> -> vector<1x84xf32>
    %c0_155 = arith.constant 0 : index
    %c0_156 = arith.constant 0 : index
    %222 = vector.load %arg9[%c0_155, %c0_156] : memref<1x84xf32, #tpu.memory_space<vmem>>, vector<1x84xf32>
    %223 = arith.addf %221, %222 : vector<1x84xf32>
    %cst_157 = arith.constant 0.000000e+00 : f32
    %224 = vector.broadcast %cst_157 : f32 to vector<1x84xf32>
    %225 = arith.maximumf %223, %224 : vector<1x84xf32>
    %226 = arith.truncf %225 : vector<1x84xf32> to vector<1x84xbf16>
    %c0_158 = arith.constant 0 : index
    %c0_159 = arith.constant 0 : index
    %227 = vector.load %arg10[%c0_158, %c0_159] : memref<84x10xbf16, #tpu.memory_space<vmem>>, vector<84x10xbf16>
    %cst_160 = arith.constant dense<0.000000e+00> : vector<1x10xf32>
    %228 = tpu.matmul %226, %227, %cst_160 {dimension_numbers = #tpu.dot_dimension_numbers<[1], [0], [0], [1], [0, 0, 1, 1], [], []>} : vector<1x84xbf16>, vector<84x10xbf16>, vector<1x10xf32> -> vector<1x10xf32>
    %c0_161 = arith.constant 0 : index
    %c0_162 = arith.constant 0 : index
    %229 = vector.load %arg11[%c0_161, %c0_162] : memref<1x10xf32, #tpu.memory_space<vmem>>, vector<1x10xf32>
    %230 = arith.addf %228, %229 : vector<1x10xf32>
    %c1_163 = arith.constant 1 : index
    %c0_164 = arith.constant 0 : index
    %c0_165 = arith.constant 0 : index
    %231 = vector.load %arg12[%c1_163, %c0_164, %c0_165] : memref<2x1x10xf32, #tpu.memory_space<vmem>>, vector<1x1x10xf32>
    %232 = vector.shape_cast %231 : vector<1x1x10xf32> to vector<1x10xf32>
    %233 = vector.shape_cast %230 : vector<1x10xf32> to vector<1x1x10xf32>
    tpu.vector_store %arg12[%c1_163, %c0_164, %c0_165], %233 {strides = array<i32>} : memref<2x1x10xf32, #tpu.memory_space<vmem>>, vector<1x1x10xf32>,
    return
  }
  func.func @transform_0(%arg0: i32) -> (i32, i32, i32) {
    %c0_i32 = arith.constant 0 : i32
    %c0_i32_0 = arith.constant 0 : i32
    %c0_i32_1 = arith.constant 0 : i32
    return %arg0, %c0_i32, %c0_i32_0 : i32, i32, i32
  }
  func.func @transform_1(%arg0: i32) -> (i32, i32, i32) {
    %c0_i32 = arith.constant 0 : i32
    %c0_i32_0 = arith.constant 0 : i32
    %c0_i32_1 = arith.constant 0 : i32
    %c0_i32_2 = arith.constant 0 : i32
    return %c0_i32, %c0_i32_0, %c0_i32_1 : i32, i32, i32
  }
  func.func @transform_2(%arg0: i32) -> (i32, i32) {
    %c0_i32 = arith.constant 0 : i32
    %c0_i32_0 = arith.constant 0 : i32
    %c0_i32_1 = arith.constant 0 : i32
    return %c0_i32, %c0_i32_0 : i32, i32
  }
  func.func @transform_3(%arg0: i32) -> (i32, i32, i32) {
    %c0_i32 = arith.constant 0 : i32
    %c0_i32_0 = arith.constant 0 : i32
    %c0_i32_1 = arith.constant 0 : i32
    %c0_i32_2 = arith.constant 0 : i32
    return %c0_i32, %c0_i32_0, %c0_i32_1 : i32, i32, i32
  }
  func.func @transform_4(%arg0: i32) -> (i32, i32) {
    %c0_i32 = arith.constant 0 : i32
    %c0_i32_0 = arith.constant 0 : i32
    %c0_i32_1 = arith.constant 0 : i32
    return %c0_i32, %c0_i32_0 : i32, i32
  }
  func.func @transform_5(%arg0: i32) -> (i32, i32, i32) {
    %c0_i32 = arith.constant 0 : i32
    %c0_i32_0 = arith.constant 0 : i32
    %c0_i32_1 = arith.constant 0 : i32
    %c0_i32_2 = arith.constant 0 : i32
    return %c0_i32, %c0_i32_0, %c0_i32_1 : i32, i32, i32
  }
  func.func @transform_6(%arg0: i32) -> (i32, i32) {
    %c0_i32 = arith.constant 0 : i32
    %c0_i32_0 = arith.constant 0 : i32
    %c0_i32_1 = arith.constant 0 : i32
    return %c0_i32, %c0_i32_0 : i32, i32
  }
  func.func @transform_7(%arg0: i32) -> (i32, i32) {
    %c0_i32 = arith.constant 0 : i32
    %c0_i32_0 = arith.constant 0 : i32
    %c0_i32_1 = arith.constant 0 : i32
    return %c0_i32, %c0_i32_0 : i32, i32
  }
  func.func @transform_8(%arg0: i32) -> (i32, i32) {
    %c0_i32 = arith.constant 0 : i32
    %c0_i32_0 = arith.constant 0 : i32
    %c0_i32_1 = arith.constant 0 : i32
    return %c0_i32, %c0_i32_0 : i32, i32
  }
  func.func @transform_9(%arg0: i32) -> (i32, i32) {
    %c0_i32 = arith.constant 0 : i32
    %c0_i32_0 = arith.constant 0 : i32
    %c0_i32_1 = arith.constant 0 : i32
    return %c0_i32, %c0_i32_0 : i32, i32
  }
  func.func @transform_10(%arg0: i32) -> (i32, i32) {
    %c0_i32 = arith.constant 0 : i32
    %c0_i32_0 = arith.constant 0 : i32
    %c0_i32_1 = arith.constant 0 : i32
    return %c0_i32, %c0_i32_0 : i32, i32
  }
  func.func @transform_11(%arg0: i32) -> (i32, i32, i32) {
    %c0_i32 = arith.constant 0 : i32
    %c0_i32_0 = arith.constant 0 : i32
    %c0_i32_1 = arith.constant 0 : i32
    return %arg0, %c0_i32, %c0_i32_0 : i32, i32, i32
  }
}

</mosaic_0001>

<llo_original>
// kernel: tile.13
$region0: #{tile.13}
  #allocation0 [shape = 's32[1]{0}', space=sflag, size = 0x4, scoped, tag = 'scoped memory for tile.13']
  %s0 = inlined_call_operand.vmem [shape: f32[6], index: 0, kind: input, shape index: {}]
  %s1 = inlined_call_operand.vmem [shape: f32[32,6], index: 1, kind: output, shape index: {}]
  // Predicated region
  $region2: #{tile.13} parent=0 // pred_check
    _
  $region3: #{tile.13} parent=0 // pred_check_branch
    %3 = sbr.rel (0) target = $region5
  $region4: #{tile.13} parent=0 // pred_region
    _
  $region5: #{tile.13} parent=0 // pred_fallthru
    _
  %v4 = vld [vmem:[%s0] ss:$0 sm:$0xff]
  %5 = vst [vmem:[%s1] sm:$0xff] %v4
  %s6 = scalar_lea.vmem %s1, 8
  %7 = vst [vmem:[%s6] sm:$0xff] %v4
  %s8 = scalar_lea.vmem %s1, 16
  %9 = vst [vmem:[%s8] sm:$0xff] %v4
  %s10 = scalar_lea.vmem %s1, 24
  %11 = vst [vmem:[%s10] sm:$0xff] %v4

// kernel: tile.14
$region0: #{tile.14}
  %s0 = inlined_call_operand.vmem [shape: f32[32,6], index: 0, kind: input, shape index: {}]
  %s1 = inlined_call_operand.vmem [shape: f32[1,192], index: 1, kind: output, shape index: {}]
  $region1: #{tile.14} parent=0
    #allocation0 [shape = 'u8[8192]{0}', space=vmem, size = 0x2000, scoped, tag = 'scoped mem for output reshape']
    %v2 = vld [vmem:[%s0] sm:$0x1]
    %vm3 = vcmask 48128
    %4 = vst.msk [vmem:[#allocation0] sm:$0x1] %vm3, %v2
    %s5 = scalar_lea.vmem %s0, 21
    %v6 = vld [vmem:[%s5] sm:$0x1]
    %s7 = scalar_lea.vmem %s0, 21
    %v8 = vld [vmem:[%s7] sm:$0x1]
    %vm9 = vcmask 15360
    %v10 = vsel %vm9, %v8, %v6
    %11 = vrot.lane.b32.xlu0 %v10, 126
    %v12 = vpop.permute.xlu0 %11
    %vm13 = vcmask 31744
    %s14 = scalar_lea.vmem [#allocation0], 8
    %15 = vst.msk [vmem:[%s14] sm:$0x1] %vm13, %v12
    %vm16 = vcmask 1048560
    %17 = vst.msk [vmem:[#allocation0] sm:$0x1] %vm16, %v12
    %s18 = scalar_lea.vmem %s0, 20
    %v19 = vld [vmem:[%s18] sm:$0x1]
    %20 = vrot.lane.b32.xlu0 %v19, 120
    %v21 = vpop.permute.xlu0 %20
    %vm22 = vcmask 1032128
    %23 = vst.msk [vmem:[#allocation0] sm:$0x1] %vm22, %v21
    %s24 = scalar_lea.vmem %s0, 19
    %v25 = vld [vmem:[%s24] sm:$0x1]
    %26 = vrot.lane.b32.xlu0 %v25, 114
    %v27 = vpop.permute.xlu0 %26
    %vm28 = vcmask 982928
    %29 = vst.msk [vmem:[#allocation0] sm:$0x1] %vm28, %v27
    %s30 = scalar_lea.vmem %s0, 18
    %v31 = vld [vmem:[%s30] sm:$0x1]
    %32 = vrot.lane.b32.xlu0 %v31, 108
    %v33 = vpop.permute.xlu0 %32
    %vm34 = vcmask 933728
    %35 = vst.msk [vmem:[#allocation0] sm:$0x1] %vm34, %v33
    %s36 = scalar_lea.vmem %s0, 17
    %v37 = vld [vmem:[%s36] sm:$0x1]
    %38 = vrot.lane.b32.xlu0 %v37, 102
    %v39 = vpop.permute.xlu0 %38
    %vm40 = vcmask 884528
    %41 = vst.msk [vmem:[#allocation0] sm:$0x1] %vm40, %v39
    %s42 = scalar_lea.vmem %s0, 16
    %v43 = vld [vmem:[%s42] sm:$0x1]
    %44 = vrot.lane.b32.xlu0 %v43, 96
    %v45 = vpop.permute.xlu0 %44
    %vm46 = vcmask 835328
    %47 = vst.msk [vmem:[#allocation0] sm:$0x1] %vm46, %v45
    %s48 = scalar_lea.vmem %s0, 15
    %v49 = vld [vmem:[%s48] sm:$0x1]
    %50 = vrot.lane.b32.xlu0 %v49, 90
    %v51 = vpop.permute.xlu0 %50
    %vm52 = vcmask 786128
    %53 = vst.msk [vmem:[#allocation0] sm:$0x1] %vm52, %v51
    %s54 = scalar_lea.vmem %s0, 14
    %v55 = vld [vmem:[%s54] sm:$0x1]
    %56 = vrot.lane.b32.xlu0 %v55, 84
    %v57 = vpop.permute.xlu0 %56
    %vm58 = vcmask 736928
    %59 = vst.msk [vmem:[#allocation0] sm:$0x1] %vm58, %v57
    %s60 = scalar_lea.vmem %s0, 13
    %v61 = vld [vmem:[%s60] sm:$0x1]
    %62 = vrot.lane.b32.xlu0 %v61, 78
    %v63 = vpop.permute.xlu0 %62
    %vm64 = vcmask 687728
    %65 = vst.msk [vmem:[#allocation0] sm:$0x1] %vm64, %v63
    %s66 = scalar_lea.vmem %s0, 12
    %v67 = vld [vmem:[%s66] sm:$0x1]
    %68 = vrot.lane.b32.xlu0 %v67, 72
    %v69 = vpop.permute.xlu0 %68
    %vm70 = vcmask 638528
    %71 = vst.msk [vmem:[#allocation0] sm:$0x1] %vm70, %v69
    %s72 = scalar_lea.vmem %s0, 11
    %v73 = vld [vmem:[%s72] sm:$0x1]
    %74 = vrot.lane.b32.xlu0 %v73, 66
    %v75 = vpop.permute.xlu0 %74
    %vm76 = vcmask 589328
    %77 = vst.msk [vmem:[#allocation0] sm:$0x1] %vm76, %v75
    %s78 = scalar_lea.vmem %s0, 10
    %v79 = vld [vmem:[%s78] sm:$0x1]
    %80 = vrot.lane.b32.xlu0 %v79, 60
    %v81 = vpop.permute.xlu0 %80
    %vm82 = vcmask 540128
    %83 = vst.msk [vmem:[#allocation0] sm:$0x1] %vm82, %v81
    %s84 = scalar_lea.vmem %s0, 31
    %v85 = vld [vmem:[%s84] sm:$0x1]
    %86 = vrot.lane.b32.xlu0 %v85, 58
    %v87 = vpop.permute.xlu0 %86
    %vm88 = vcmask 523728
    %s89 = scalar_lea.vmem [#allocation0], 8
    %90 = vst.msk [vmem:[%s89] sm:$0x1] %vm88, %v87
    %s91 = scalar_lea.vmem %s0, 9
    %v92 = vld [vmem:[%s91] sm:$0x1]
    %93 = vrot.lane.b32.xlu0 %v92, 54
    %v94 = vpop.permute.xlu0 %93
    %vm95 = vcmask 490928
    %96 = vst.msk [vmem:[#allocation0] sm:$0x1] %vm95, %v94
    %s97 = scalar_lea.vmem %s0, 30
    %v98 = vld [vmem:[%s97] sm:$0x1]
    %99 = vrot.lane.b32.xlu0 %v98, 52
    %v100 = vpop.permute.xlu0 %99
    %vm101 = vcmask 474528
    %s102 = scalar_lea.vmem [#allocation0], 8
    %103 = vst.msk [vmem:[%s102] sm:$0x1] %vm101, %v100
    %s104 = scalar_lea.vmem %s0, 8
    %v105 = vld [vmem:[%s104] sm:$0x1]
    %106 = vrot.lane.b32.xlu0 %v105, 48
    %v107 = vpop.permute.xlu0 %106
    %vm108 = vcmask 441728
    %109 = vst.msk [vmem:[#allocation0] sm:$0x1] %vm108, %v107
    %s110 = scalar_lea.vmem %s0, 29
    %v111 = vld [vmem:[%s110] sm:$0x1]
    %112 = vrot.lane.b32.xlu0 %v111, 46
    %v113 = vpop.permute.xlu0 %112
    %vm114 = vcmask 425328
    %s115 = scalar_lea.vmem [#allocation0], 8
    %116 = vst.msk [vmem:[%s115] sm:$0x1] %vm114, %v113
    %s117 = scalar_lea.vmem %s0, 7
    %v118 = vld [vmem:[%s117] sm:$0x1]
    %119 = vrot.lane.b32.xlu0 %v118, 42
    %v120 = vpop.permute.xlu0 %119
    %vm121 = vcmask 392528
    %122 = vst.msk [vmem:[#allocation0] sm:$0x1] %vm121, %v120
    %s123 = scalar_lea.vmem %s0, 28
    %v124 = vld [vmem:[%s123] sm:$0x1]
    %125 = vrot.lane.b32.xlu0 %v124, 40
    %v126 = vpop.permute.xlu0 %125
    %vm127 = vcmask 376128
    %s128 = scalar_lea.vmem [#allocation0], 8
    %129 = vst.msk [vmem:[%s128] sm:$0x1] %vm127, %v126
    %s130 = scalar_lea.vmem %s0, 6
    %v131 = vld [vmem:[%s130] sm:$0x1]
    %132 = vrot.lane.b32.xlu0 %v131, 36
    %v133 = vpop.permute.xlu0 %132
    %vm134 = vcmask 343328
    %135 = vst.msk [vmem:[#allocation0] sm:$0x1] %vm134, %v133
    %s136 = scalar_lea.vmem %s0, 27
    %v137 = vld [vmem:[%s136] sm:$0x1]
    %138 = vrot.lane.b32.xlu0 %v137, 34
    %v139 = vpop.permute.xlu0 %138
    %vm140 = vcmask 326928
    %s141 = scalar_lea.vmem [#allocation0], 8
    %142 = vst.msk [vmem:[%s141] sm:$0x1] %vm140, %v139
    %s143 = scalar_lea.vmem %s0, 5
    %v144 = vld [vmem:[%s143] sm:$0x1]
    %145 = vrot.lane.b32.xlu0 %v144, 30
    %v146 = vpop.permute.xlu0 %145
    %vm147 = vcmask 294128
    %148 = vst.msk [vmem:[#allocation0] sm:$0x1] %vm147, %v146
    %s149 = scalar_lea.vmem %s0, 26
    %v150 = vld [vmem:[%s149] sm:$0x1]
    %151 = vrot.lane.b32.xlu0 %v150, 28
    %v152 = vpop.permute.xlu0 %151
    %vm153 = vcmask 277728
    %s154 = scalar_lea.vmem [#allocation0], 8
    %155 = vst.msk [vmem:[%s154] sm:$0x1] %vm153, %v152
    %s156 = scalar_lea.vmem %s0, 4
    %v157 = vld [vmem:[%s156] sm:$0x1]
    %158 = vrot.lane.b32.xlu0 %v157, 24
    %v159 = vpop.permute.xlu0 %158
    %vm160 = vcmask 244928
    %161 = vst.msk [vmem:[#allocation0] sm:$0x1] %vm160, %v159
    %s162 = scalar_lea.vmem %s0, 25
    %v163 = vld [vmem:[%s162] sm:$0x1]
    %164 = vrot.lane.b32.xlu0 %v163, 22
    %v165 = vpop.permute.xlu0 %164
    %vm166 = vcmask 228528
    %s167 = scalar_lea.vmem [#allocation0], 8
    %168 = vst.msk [vmem:[%s167] sm:$0x1] %vm166, %v165
    %s169 = scalar_lea.vmem %s0, 3
    %v170 = vld [vmem:[%s169] sm:$0x1]
    %171 = vrot.lane.b32.xlu0 %v170, 18
    %v172 = vpop.permute.xlu0 %171
    %vm173 = vcmask 195728
    %174 = vst.msk [vmem:[#allocation0] sm:$0x1] %vm173, %v172
    %s175 = scalar_lea.vmem %s0, 24
    %v176 = vld [vmem:[%s175] sm:$0x1]
    %177 = vrot.lane.b32.xlu0 %v176, 16
    %v178 = vpop.permute.xlu0 %177
    %vm179 = vcmask 179328
    %s180 = scalar_lea.vmem [#allocation0], 8
    %181 = vst.msk [vmem:[%s180] sm:$0x1] %vm179, %v178
    %s182 = scalar_lea.vmem %s0, 2
    %v183 = vld [vmem:[%s182] sm:$0x1]
    %184 = vrot.lane.b32.xlu0 %v183, 12
    %v185 = vpop.permute.xlu0 %184
    %vm186 = vcmask 146528
    %187 = vst.msk [vmem:[#allocation0] sm:$0x1] %vm186, %v185
    %s188 = scalar_lea.vmem %s0, 23
    %v189 = vld [vmem:[%s188] sm:$0x1]
    %190 = vrot.lane.b32.xlu0 %v189, 10
    %v191 = vpop.permute.xlu0 %190
    %vm192 = vcmask 130128
    %s193 = scalar_lea.vmem [#allocation0], 8
    %194 = vst.msk [vmem:[%s193] sm:$0x1] %vm192, %v191
    %s195 = scalar_lea.vmem %s0, 1
    %v196 = vld [vmem:[%s195] sm:$0x1]
    %197 = vrot.lane.b32.xlu0 %v196, 6
    %v198 = vpop.permute.xlu0 %197
    %vm199 = vcmask 97328
    %200 = vst.msk [vmem:[#allocation0] sm:$0x1] %vm199, %v198
    %s201 = scalar_lea.vmem %s0, 22
    %v202 = vld [vmem:[%s201] sm:$0x1]
    %203 = vrot.lane.b32.xlu0 %v202, 4
    %v204 = vpop.permute.xlu0 %203
    %vm205 = vcmask 80928
    %s206 = scalar_lea.vmem [#allocation0], 8
    %207 = vst.msk [vmem:[%s206] sm:$0x1] %vm205, %v204
    %s209 = sshll.u32 1, 1
    %s210 = ssub.s32 %s209, 1
    %v212 = vld [vmem:[#allocation0] sm:%s210]
    %s213 = sshll.u32 1, 1
    %s214 = ssub.s32 %s213, 1
    %215 = vst [vmem:[%s1] sm:%s214] %v212
    %s216 = scalar_lea.vmem [#allocation0], 8
    %v217 = vld [vmem:[%s216] sm:%s210]
    %s218 = sshll.u32 1, 1
    %s219 = ssub.s32 %s218, 1
    %s220 = scalar_lea.vmem %s1, 1
    %221 = vst [vmem:[%s220] sm:%s219] %v217

// kernel: tile.18
$region0: #{tile.18}
  #allocation0 [shape = 's32[1]{0}', space=sflag, size = 0x4, scoped, tag = 'scoped memory for tile.18']
  %s0 = inlined_call_operand.vmem [shape: f32[16], index: 0, kind: input, shape index: {}]
  %s1 = inlined_call_operand.vmem [shape: f32[16,16], index: 1, kind: output, shape index: {}]
  // Predicated region
  $region2: #{tile.18} parent=0 // pred_check
    _
  $region3: #{tile.18} parent=0 // pred_check_branch
    %3 = sbr.rel (0) target = $region5
  $region4: #{tile.18} parent=0 // pred_region
    _
  $region5: #{tile.18} parent=0 // pred_fallthru
    _
  %v4 = vld [vmem:[%s0] ss:$0 sm:$0xff]
  %5 = vst [vmem:[%s1] sm:$0xff] %v4
  %s6 = scalar_lea.vmem %s1, 8
  %7 = vst [vmem:[%s6] sm:$0xff] %v4

// kernel: tile.19
$region0: #{tile.19}
  %s0 = inlined_call_operand.vmem [shape: f32[16,16], index: 0, kind: input, shape index: {}]
  %s1 = inlined_call_operand.vmem [shape: f32[1,256], index: 1, kind: output, shape index: {}]
  $region1: #{tile.19} parent=0
    #allocation0 [shape = 'u8[8192]{0}', space=vmem, size = 0x2000, scoped, tag = 'scoped mem for output reshape']
    %s2 = smov 3
    %v3 = vld [vmem:[%s0] ss:$8 sm:%s2]
    %vm4 = vcmask 130048
    %5 = vst.msk [vmem:[#allocation0] ss:$8 sm:$0x3] %vm4, %v3
    %s6 = scalar_lea.vmem %s0, 7
    %s7 = smov 3
    %v8 = vld [vmem:[%s6] ss:$8 sm:%s7]
    %9 = vrot.lane.b32.xlu0 %v8, 112
    %v10 = vpop.permute.xlu0 %9
    %vm11 = vcmask 1048448
    %12 = vst.msk [vmem:[#allocation0] ss:$8 sm:$0x3] %vm11, %v10
    %s13 = scalar_lea.vmem %s0, 6
    %s14 = smov 3
    %v15 = vld [vmem:[%s13] ss:$8 sm:%s14]
    %16 = vrot.lane.b32.xlu0 %v15, 96
    %v17 = vpop.permute.xlu0 %16
    %vm18 = vcmask 917248
    %19 = vst.msk [vmem:[#allocation0] ss:$8 sm:$0x3] %vm18, %v17
    %s20 = scalar_lea.vmem %s0, 5
    %s21 = smov 3
    %v22 = vld [vmem:[%s20] ss:$8 sm:%s21]
    %23 = vrot.lane.b32.xlu0 %v22, 80
    %v24 = vpop.permute.xlu0 %23
    %vm25 = vcmask 786048
    %26 = vst.msk [vmem:[#allocation0] ss:$8 sm:$0x3] %vm25, %v24
    %s27 = scalar_lea.vmem %s0, 4
    %s28 = smov 3
    %v29 = vld [vmem:[%s27] ss:$8 sm:%s28]
    %30 = vrot.lane.b32.xlu0 %v29, 64
    %v31 = vpop.permute.xlu0 %30
    %vm32 = vcmask 654848
    %33 = vst.msk [vmem:[#allocation0] ss:$8 sm:$0x3] %vm32, %v31
    %s34 = scalar_lea.vmem %s0, 3
    %s35 = smov 3
    %v36 = vld [vmem:[%s34] ss:$8 sm:%s35]
    %37 = vrot.lane.b32.xlu0 %v36, 48
    %v38 = vpop.permute.xlu0 %37
    %vm39 = vcmask 523648
    %40 = vst.msk [vmem:[#allocation0] ss:$8 sm:$0x3] %vm39, %v38
    %s41 = scalar_lea.vmem %s0, 2
    %s42 = smov 3
    %v43 = vld [vmem:[%s41] ss:$8 sm:%s42]
    %44 = vrot.lane.b32.xlu0 %v43, 32
    %v45 = vpop.permute.xlu0 %44
    %vm46 = vcmask 392448
    %47 = vst.msk [vmem:[#allocation0] ss:$8 sm:$0x3] %vm46, %v45
    %s48 = scalar_lea.vmem %s0, 1
    %s49 = smov 3
    %v50 = vld [vmem:[%s48] ss:$8 sm:%s49]
    %51 = vrot.lane.b32.xlu0 %v50, 16
    %v52 = vpop.permute.xlu0 %51
    %vm53 = vcmask 261248
    %54 = vst.msk [vmem:[#allocation0] ss:$8 sm:$0x3] %vm53, %v52
    %s56 = sshll.u32 1, 1
    %s57 = ssub.s32 %s56, 1
    %v59 = vld [vmem:[#allocation0] sm:%s57]
    %s60 = sshll.u32 1, 1
    %s61 = ssub.s32 %s60, 1
    %62 = vst [vmem:[%s1] sm:%s61] %v59
    %s63 = scalar_lea.vmem [#allocation0], 8
    %v64 = vld [vmem:[%s63] sm:%s57]
    %s65 = sshll.u32 1, 1
    %s66 = ssub.s32 %s65, 1
    %s67 = scalar_lea.vmem %s1, 1
    %68 = vst [vmem:[%s67] sm:%s66] %v64

// kernel: netmp_forward.1
$region0: #{netmp_forward.1}
  #allocation0 [shape = 'u32[]', space=smem, size = 0x4, offset = 0x4, fixed_abs, tag = 'smem constant byte address 0x4 - core index']
  #allocation1 [shape = 'u32[144,128]{1,0:T(1,128)}', space=vmem, size = 0x12000, scoped, tag = 'internal scratch']
  %s0 = inlined_call_operand.vmem [shape: bf16[2,36,108], index: 0, kind: input, shape index: {}]
  %s1 = inlined_call_operand.vmem [shape: bf16[5,108,192], index: 1, kind: input, shape index: {}]
  %s2 = inlined_call_operand.vmem [shape: f32[1,192], index: 2, kind: input, shape index: {}]
  %s3 = inlined_call_operand.vmem [shape: bf16[5,186,256], index: 3, kind: input, shape index: {}]
  %s4 = inlined_call_operand.vmem [shape: f32[1,256], index: 4, kind: input, shape index: {}]
  %s5 = inlined_call_operand.vmem [shape: bf16[5,240,120], index: 5, kind: input, shape index: {}]
  %s6 = inlined_call_operand.vmem [shape: f32[1,120], index: 6, kind: input, shape index: {}]
  %s7 = inlined_call_operand.vmem [shape: bf16[120,84], index: 7, kind: input, shape index: {}]
  %s8 = inlined_call_operand.vmem [shape: f32[1,84], index: 8, kind: input, shape index: {}]
  %s9 = inlined_call_operand.vmem [shape: bf16[84,10], index: 9, kind: input, shape index: {}]
  %s10 = inlined_call_operand.vmem [shape: f32[1,10], index: 10, kind: input, shape index: {}]
  %s11 = inlined_call_operand.hbm [shape: f32[2,1,10], index: 11, kind: output, shape index: {}]
  %s12 = sld [smem:[#allocation0]]
  $region54: #{netmp_forward.1} parent=0
    _
  %s14 = ssub.s32 1, %s12
  %s15 = scalar_select 0, %s14, %s12
  $region1: #{netmp_forward.1} parent=0
    #allocation2 [shape = 'u8[1024]{0}', space=vmem, size = 0x400, scoped, tag = 'output window, operand 0, single buffered']
    #allocation3 [shape = 's32[1]{0}', space=sflag, size = 0x4, scoped, tag = 'scoped memory for netmp_forward.1']
    %16 = vsyncpa [#allocation3], 0
    // Predicated region
    $region2: #{netmp_forward.1} parent=1 // pred_check
      _
    $region3: #{netmp_forward.1} parent=1 // pred_check_branch
      %18 = sbr.rel (0) target = $region5
    $region4: #{netmp_forward.1} parent=1 // pred_region
      _
    $region5: #{netmp_forward.1} parent=1 // pred_fallthru
      _
    // Predicated region
    $region6: #{netmp_forward.1} parent=1 // pred_check
      _
    $region7: #{netmp_forward.1} parent=1 // pred_check_branch
      %20 = sbr.rel (0) target = $region9
    $region8: #{netmp_forward.1} parent=1 // pred_region
      _
    $region9: #{netmp_forward.1} parent=1 // pred_fallthru
      _
    // Predicated region
    $region10: #{netmp_forward.1} parent=1 // pred_check
      _
    $region11: #{netmp_forward.1} parent=1 // pred_check_branch
      %22 = sbr.rel (0) target = $region13
    $region12: #{netmp_forward.1} parent=1 // pred_region
      _
    $region13: #{netmp_forward.1} parent=1 // pred_fallthru
      _
    // Predicated region
    $region14: #{netmp_forward.1} parent=1 // pred_check
      _
    $region15: #{netmp_forward.1} parent=1 // pred_check_branch
      %24 = sbr.rel (0) target = $region17
    $region16: #{netmp_forward.1} parent=1 // pred_region
      _
    $region17: #{netmp_forward.1} parent=1 // pred_fallthru
      _
    // Predicated region
    $region18: #{netmp_forward.1} parent=1 // pred_check
      _
    $region19: #{netmp_forward.1} parent=1 // pred_check_branch
      %26 = sbr.rel (0) target = $region21
    $region20: #{netmp_forward.1} parent=1 // pred_region
      _
    $region21: #{netmp_forward.1} parent=1 // pred_fallthru
      _
    // Predicated region
    $region22: #{netmp_forward.1} parent=1 // pred_check
      _
    $region23: #{netmp_forward.1} parent=1 // pred_check_branch
      %28 = sbr.rel (0) target = $region25
    $region24: #{netmp_forward.1} parent=1 // pred_region
      _
    $region25: #{netmp_forward.1} parent=1 // pred_fallthru
      _
    // Predicated region
    $region26: #{netmp_forward.1} parent=1 // pred_check
      _
    $region27: #{netmp_forward.1} parent=1 // pred_check_branch
      %30 = sbr.rel (0) target = $region29
    $region28: #{netmp_forward.1} parent=1 // pred_region
      _
    $region29: #{netmp_forward.1} parent=1 // pred_fallthru
      _
    // Predicated region
    $region30: #{netmp_forward.1} parent=1 // pred_check
      _
    $region31: #{netmp_forward.1} parent=1 // pred_check_branch
      %32 = sbr.rel (0) target = $region33
    $region32: #{netmp_forward.1} parent=1 // pred_region
      _
    $region33: #{netmp_forward.1} parent=1 // pred_fallthru
      _
    // Predicated region
    $region34: #{netmp_forward.1} parent=1 // pred_check
      _
    $region35: #{netmp_forward.1} parent=1 // pred_check_branch
      %34 = sbr.rel (0) target = $region37
    $region36: #{netmp_forward.1} parent=1 // pred_region
      _
    $region37: #{netmp_forward.1} parent=1 // pred_fallthru
      _
    // Predicated region
    $region38: #{netmp_forward.1} parent=1 // pred_check
      _
    $region39: #{netmp_forward.1} parent=1 // pred_check_branch
      %36 = sbr.rel (0) target = $region41
    $region40: #{netmp_forward.1} parent=1 // pred_region
      _
    $region41: #{netmp_forward.1} parent=1 // pred_fallthru
      _
    // Predicated region
    $region42: #{netmp_forward.1} parent=1 // pred_check
      _
    $region43: #{netmp_forward.1} parent=1 // pred_check_branch
      %38 = sbr.rel (0) target = $region45
    $region44: #{netmp_forward.1} parent=1 // pred_region
      _
    $region45: #{netmp_forward.1} parent=1 // pred_fallthru
      _
    %v40 = vld [vmem:[%s0] sm:$0xf]
    %v41 = vld [vmem:[%s0 + $0x4] sm:$0xf]
    %v42 = vld [vmem:[%s0 + $0x8] sm:$0xf]
    %v43 = vld [vmem:[%s0 + $0xc] sm:$0xf]
    %v44 = vld [vmem:[%s0 + $0x10] sm:$0x3]
    %v45 = vld [vmem:[%s1] sm:$0xff]
    %v46 = vld [vmem:[%s1 + $0x8] sm:$0xff]
    %v47 = vld [vmem:[%s1 + $0x10] sm:$0xff]
    %v48 = vld [vmem:[%s1 + $0x18] sm:$0xff]
    %v49 = vld [vmem:[%s1 + $0x20] sm:$0xff]
    %v50 = vld [vmem:[%s1 + $0x28] sm:$0xff]
    %v51 = vld [vmem:[%s1 + $0x30] sm:$0xff]
    %v52 = vld [vmem:[%s1 + $0x38] sm:$0xff]
    %v53 = vld [vmem:[%s1 + $0x40] sm:$0xff]
    %v54 = vld [vmem:[%s1 + $0x48] sm:$0xff]
    %v55 = vld [vmem:[%s1 + $0x50] sm:$0xff]
    %v56 = vld [vmem:[%s1 + $0x58] sm:$0xff]
    %v57 = vld [vmem:[%s1 + $0x60] sm:$0xff]
    %v58 = vld [vmem:[%s1 + $0x68] sm:$0x33]
    %s59 = scalar_lea.vmem %s1, 112
    %v60 = vld [vmem:[%s59] sm:$0xff]
    %v61 = vld [vmem:[%s59 + $0x8] sm:$0xff]
    %v62 = vld [vmem:[%s59 + $0x10] sm:$0xff]
    %v63 = vld [vmem:[%s59 + $0x18] sm:$0xff]
    %v64 = vld [vmem:[%s59 + $0x20] sm:$0xff]
    %v65 = vld [vmem:[%s59 + $0x28] sm:$0xff]
    %v66 = vld [vmem:[%s59 + $0x30] sm:$0xff]
    %v67 = vld [vmem:[%s59 + $0x38] sm:$0xff]
    %v68 = vld [vmem:[%s59 + $0x40] sm:$0xff]
    %v69 = vld [vmem:[%s59 + $0x48] sm:$0xff]
    %v70 = vld [vmem:[%s59 + $0x50] sm:$0xff]
    %v71 = vld [vmem:[%s59 + $0x58] sm:$0xff]
    %v72 = vld [vmem:[%s59 + $0x60] sm:$0xff]
    %v73 = vld [vmem:[%s59 + $0x68] sm:$0x33]
    %v79 = vunpack.c.l.b16 %v40
    %v80 = vunpack.c.l.b16 %v41
    %v81 = vunpack.c.l.b16 %v42
    %v82 = vunpack.c.l.b16 %v43
    %v83 = vunpack.c.l.b16 %v44
    %v84 = vpack.c.b16 %v80, %v79
    %v85 = vpack.c.b16 %v82, %v81
    %v86 = vpack.c.b16 %v83, %v83
    %vm87 = vsmask.f32 7424
    %v89 = vshrl.u32 %v84, 16
    %v91 = vshll.u32 %v84, 16
    %v93 = vrot.slane %v91, 1
    %v94 = vor.u32 %v89, %v93
    %v96 = vshll.u32 %v85, 16
    %v98 = vrot.slane %v96, 1
    %v99 = vsel %vm87, %v94, %v98
    %v100 = vshrl.u32 %v85, 16
    %v102 = vor.u32 %v100, %v98
    %v104 = vshll.u32 %v86, 16
    %v106 = vrot.slane %v104, 1
    %v107 = vsel %vm87, %v102, %v106
    %v122 = vunpack.c.l.b16 %v60
    %v123 = vunpack.c.h.b16 %v60
    %v124 = vunpack.c.l.b16 %v61
    %v125 = vunpack.c.h.b16 %v61
    %v126 = vunpack.c.l.b16 %v62
    %v127 = vunpack.c.h.b16 %v62
    %v128 = vunpack.c.l.b16 %v63
    %v129 = vunpack.c.h.b16 %v63
    %v130 = vunpack.c.l.b16 %v64
    %v131 = vunpack.c.h.b16 %v64
    %v132 = vunpack.c.l.b16 %v65
    %v133 = vunpack.c.h.b16 %v65
    %v134 = vunpack.c.l.b16 %v66
    %v135 = vunpack.c.h.b16 %v66
    %v136 = vunpack.c.l.b16 %v67
    %v137 = vunpack.c.h.b16 %v67
    %v138 = vunpack.c.l.b16 %v68
    %v139 = vunpack.c.h.b16 %v68
    %v140 = vunpack.c.l.b16 %v69
    %v141 = vunpack.c.h.b16 %v69
    %v142 = vunpack.c.l.b16 %v70
    %v143 = vunpack.c.h.b16 %v70
    %v144 = vunpack.c.l.b16 %v71
    %v145 = vunpack.c.h.b16 %v71
    %v146 = vunpack.c.l.b16 %v72
    %v147 = vunpack.c.h.b16 %v72
    %v148 = vunpack.c.l.b16 %v73
    %v149 = vunpack.c.h.b16 %v73
    %v150 = vpack.c.b16 %v124, %v122
    %v151 = vpack.c.b16 %v125, %v123
    %v152 = vpack.c.b16 %v128, %v126
    %v153 = vpack.c.b16 %v129, %v127
    %v154 = vpack.c.b16 %v132, %v130
    %v155 = vpack.c.b16 %v133, %v131
    %v156 = vpack.c.b16 %v136, %v134
    %v157 = vpack.c.b16 %v137, %v135
    %v158 = vpack.c.b16 %v140, %v138
    %v159 = vpack.c.b16 %v141, %v139
    %v160 = vpack.c.b16 %v144, %v142
    %v161 = vpack.c.b16 %v145, %v143
    %v162 = vpack.c.b16 %v148, %v146
    %v163 = vpack.c.b16 %v149, %v147
    %vm176 = vcmask 883712
    %v178 = vsel %vm176, %v99, 0
    %v181 = vsel %vm176, %v107, 0
    %vm183 = vcmask 1045504
    %v185 = vsel %vm183, %v162, 0
    %v188 = vsel %vm183, %v163, 0
    %190 = vmatprep.subr.bf16.mxu0 0
    %191 = vmatpush1.bf16.msra.mxu0 0
    %192 = vmatprep.subr.bf16.mxu0 %v188
    %193 = vmatpush1.bf16.msra.mxu0 %v185
    %194 = vmatprep.subr.bf16.mxu0 %v161
    %195 = vmatpush1.bf16.msra.mxu0 %v160
    %196 = vmatprep.subr.bf16.mxu0 %v159
    %197 = vmatpush1.bf16.msra.mxu0 %v158
    %198 = vmatprep.subr.bf16.mxu0 %v157
    %199 = vmatpush1.bf16.msra.mxu0 %v156
    %200 = vmatprep.subr.bf16.mxu0 %v155
    %201 = vmatpush1.bf16.msra.mxu0 %v154
    %202 = vmatprep.subr.bf16.mxu0 %v153
    %203 = vmatpush1.bf16.msra.mxu0 %v152
    %204 = vmatprep.subr.bf16.mxu0 %v151
    %205 = vmatpush1.bf16.msra.mxu0 %v150
    %206 = vmatprep.subr.bf16.mxu0 0
    %207 = vmatpush2.bf16.msra.mxu0 0
    %208 = vmatprep.subr.bf16.mxu0 0
    %209 = vmatpush2.bf16.msra.mxu0 0
    %210 = vmatprep.subr.bf16.mxu0 0
    %211 = vmatpush2.bf16.msra.mxu0 0
    %212 = vmatprep.subr.bf16.mxu0 0
    %213 = vmatpush2.bf16.msra.mxu0 0
    %214 = vmatprep.subr.bf16.mxu0 0
    %215 = vmatpush2.bf16.msra.mxu0 0
    %216 = vmatprep.subr.bf16.mxu0 0
    %217 = vmatpush2.bf16.msra.mxu0 0
    %218 = vmatprep.subr.bf16.mxu0 0
    %219 = vmatpush2.bf16.msra.mxu0 0
    %220 = vmatprep.subr.bf16.mxu0 0
    %221 = vmatpush2.bf16.msra.mxu0 0
    %222 = vmatprep.mubr.bf16.mxu0 0
    %223 = vmatmul.mubr.bf16.gmra.mxu0 %v178
    %v224 = vpop.f32.mrf.mxu0
    %v225 = vadd.f32 0.0, %v224
    %v226 = vpop.f32.mrf.mxu0
    %v227 = vadd.f32 0.0, %v226
    %v228 = vpop.f32.mrf.mxu0
    %v229 = vadd.f32 0.0, %v228
    %v230 = vpop.f32.mrf.mxu0
    %v231 = vadd.f32 0.0, %v230
    %232 = vmatprep.mubr.bf16.mxu0 0
    %233 = vmatmul.mubr.bf16.gmra.mxu0 %v181
    %v234 = vpop.f32.mrf.mxu0
    %v235 = vadd.f32 0.0, %v234
    %v236 = vpop.f32.mrf.mxu0
    %v237 = vadd.f32 0.0, %v236
    %v238 = vpop.f32.mrf.mxu0
    %v239 = vadd.f32 0.0, %v238
    %v240 = vpop.f32.mrf.mxu0
    %v241 = vadd.f32 0.0, %v240
    %242 = vdwg.mxu0
    %v257 = vunpack.c.l.b16 %v45
    %v258 = vunpack.c.h.b16 %v45
    %v259 = vunpack.c.l.b16 %v46
    %v260 = vunpack.c.h.b16 %v46
    %v261 = vunpack.c.l.b16 %v47
    %v262 = vunpack.c.h.b16 %v47
    %v263 = vunpack.c.l.b16 %v48
    %v264 = vunpack.c.h.b16 %v48
    %v265 = vunpack.c.l.b16 %v49
    %v266 = vunpack.c.h.b16 %v49
    %v267 = vunpack.c.l.b16 %v50
    %v268 = vunpack.c.h.b16 %v50
    %v269 = vunpack.c.l.b16 %v51
    %v270 = vunpack.c.h.b16 %v51
    %v271 = vunpack.c.l.b16 %v52
    %v272 = vunpack.c.h.b16 %v52
    %v273 = vunpack.c.l.b16 %v53
    %v274 = vunpack.c.h.b16 %v53
    %v275 = vunpack.c.l.b16 %v54
    %v276 = vunpack.c.h.b16 %v54
    %v277 = vunpack.c.l.b16 %v55
    %v278 = vunpack.c.h.b16 %v55
    %v279 = vunpack.c.l.b16 %v56
    %v280 = vunpack.c.h.b16 %v56
    %v281 = vunpack.c.l.b16 %v57
    %v282 = vunpack.c.h.b16 %v57
    %v283 = vunpack.c.l.b16 %v58
    %v284 = vunpack.c.h.b16 %v58
    %v285 = vpack.c.b16 %v259, %v257
    %v286 = vpack.c.b16 %v260, %v258
    %v287 = vpack.c.b16 %v263, %v261
    %v288 = vpack.c.b16 %v264, %v262
    %v289 = vpack.c.b16 %v267, %v265
    %v290 = vpack.c.b16 %v268, %v266
    %v291 = vpack.c.b16 %v271, %v269
    %v292 = vpack.c.b16 %v272, %v270
    %v293 = vpack.c.b16 %v275, %v273
    %v294 = vpack.c.b16 %v276, %v274
    %v295 = vpack.c.b16 %v279, %v277
    %v296 = vpack.c.b16 %v280, %v278
    %v297 = vpack.c.b16 %v283, %v281
    %v298 = vpack.c.b16 %v284, %v282
    %v311 = vsel %vm176, %v84, 0
    %v313 = vsel %vm176, %v85, 0
    %v316 = vsel %vm183, %v297, 0
    %v319 = vsel %vm183, %v298, 0
    %321 = vmatprep.subr.bf16.mxu0 0
    %322 = vmatpush1.bf16.msra.mxu0 0
    %323 = vmatprep.subr.bf16.mxu0 %v319
    %324 = vmatpush1.bf16.msra.mxu0 %v316
    %325 = vmatprep.subr.bf16.mxu0 %v296
    %326 = vmatpush1.bf16.msra.mxu0 %v295
    %327 = vmatprep.subr.bf16.mxu0 %v294
    %328 = vmatpush1.bf16.msra.mxu0 %v293
    %329 = vmatprep.subr.bf16.mxu0 %v292
    %330 = vmatpush1.bf16.msra.mxu0 %v291
    %331 = vmatprep.subr.bf16.mxu0 %v290
    %332 = vmatpush1.bf16.msra.mxu0 %v289
    %333 = vmatprep.subr.bf16.mxu0 %v288
    %334 = vmatpush1.bf16.msra.mxu0 %v287
    %335 = vmatprep.subr.bf16.mxu0 %v286
    %336 = vmatpush1.bf16.msra.mxu0 %v285
    %337 = vmatprep.subr.bf16.mxu0 0
    %338 = vmatpush2.bf16.msra.mxu0 0
    %339 = vmatprep.subr.bf16.mxu0 0
    %340 = vmatpush2.bf16.msra.mxu0 0
    %341 = vmatprep.subr.bf16.mxu0 0
    %342 = vmatpush2.bf16.msra.mxu0 0
    %343 = vmatprep.subr.bf16.mxu0 0
    %344 = vmatpush2.bf16.msra.mxu0 0
    %345 = vmatprep.subr.bf16.mxu0 0
    %346 = vmatpush2.bf16.msra.mxu0 0
    %347 = vmatprep.subr.bf16.mxu0 0
    %348 = vmatpush2.bf16.msra.mxu0 0
    %349 = vmatprep.subr.bf16.mxu0 0
    %350 = vmatpush2.bf16.msra.mxu0 0
    %351 = vmatprep.subr.bf16.mxu0 0
    %352 = vmatpush2.bf16.msra.mxu0 0
    %353 = vmatprep.mubr.bf16.mxu0 0
    %354 = vmatmul.mubr.bf16.gmra.mxu0 %v311
    %v355 = vpop.f32.mrf.mxu0
    %v356 = vadd.f32 %v225, %v355
    %v357 = vpop.f32.mrf.mxu0
    %v358 = vadd.f32 %v227, %v357
    %v359 = vpop.f32.mrf.mxu0
    %v360 = vadd.f32 %v229, %v359
    %v361 = vpop.f32.mrf.mxu0
    %v362 = vadd.f32 %v231, %v361
    %363 = vmatprep.mubr.bf16.mxu0 0
    %364 = vmatmul.mubr.bf16.gmra.mxu0 %v313
    %v365 = vpop.f32.mrf.mxu0
    %v366 = vadd.f32 %v235, %v365
    %v367 = vpop.f32.mrf.mxu0
    %v368 = vadd.f32 %v237, %v367
    %v369 = vpop.f32.mrf.mxu0
    %v370 = vadd.f32 %v239, %v369
    %v371 = vpop.f32.mrf.mxu0
    %v372 = vadd.f32 %v241, %v371
    %373 = vdwg.mxu0
    %s374 = scalar_lea.vmem %s1, 224
    %v375 = vld [vmem:[%s374] sm:$0xff]
    %v376 = vld [vmem:[%s374 + $0x8] sm:$0xff]
    %v377 = vld [vmem:[%s374 + $0x10] sm:$0xff]
    %v378 = vld [vmem:[%s374 + $0x18] sm:$0xff]
    %v379 = vld [vmem:[%s374 + $0x20] sm:$0xff]
    %v380 = vld [vmem:[%s374 + $0x28] sm:$0xff]
    %v381 = vld [vmem:[%s374 + $0x30] sm:$0xff]
    %v382 = vld [vmem:[%s374 + $0x38] sm:$0xff]
    %v383 = vld [vmem:[%s374 + $0x40] sm:$0xff]
    %v384 = vld [vmem:[%s374 + $0x48] sm:$0xff]
    %v385 = vld [vmem:[%s374 + $0x50] sm:$0xff]
    %v386 = vld [vmem:[%s374 + $0x58] sm:$0xff]
    %v387 = vld [vmem:[%s374 + $0x60] sm:$0xff]
    %v388 = vld [vmem:[%s374 + $0x68] sm:$0x33]
    %vm389 = vcmask 1046528
    %v390 = vrot.slane %v84, 1
    %v391 = vrot.slane %v85, 1
    %v392 = vsel %vm389, %v390, %v391
    %v393 = vrot.slane %v86, 1
    %v394 = vsel %vm389, %v391, %v393
    %v409 = vunpack.c.l.b16 %v375
    %v410 = vunpack.c.h.b16 %v375
    %v411 = vunpack.c.l.b16 %v376
    %v412 = vunpack.c.h.b16 %v376
    %v413 = vunpack.c.l.b16 %v377
    %v414 = vunpack.c.h.b16 %v377
    %v415 = vunpack.c.l.b16 %v378
    %v416 = vunpack.c.h.b16 %v378
    %v417 = vunpack.c.l.b16 %v379
    %v418 = vunpack.c.h.b16 %v379
    %v419 = vunpack.c.l.b16 %v380
    %v420 = vunpack.c.h.b16 %v380
    %v421 = vunpack.c.l.b16 %v381
    %v422 = vunpack.c.h.b16 %v381
    %v423 = vunpack.c.l.b16 %v382
    %v424 = vunpack.c.h.b16 %v382
    %v425 = vunpack.c.l.b16 %v383
    %v426 = vunpack.c.h.b16 %v383
    %v427 = vunpack.c.l.b16 %v384
    %v428 = vunpack.c.h.b16 %v384
    %v429 = vunpack.c.l.b16 %v385
    %v430 = vunpack.c.h.b16 %v385
    %v431 = vunpack.c.l.b16 %v386
    %v432 = vunpack.c.h.b16 %v386
    %v433 = vunpack.c.l.b16 %v387
    %v434 = vunpack.c.h.b16 %v387
    %v435 = vunpack.c.l.b16 %v388
    %v436 = vunpack.c.h.b16 %v388
    %v437 = vpack.c.b16 %v411, %v409
    %v438 = vpack.c.b16 %v412, %v410
    %v439 = vpack.c.b16 %v415, %v413
    %v440 = vpack.c.b16 %v416, %v414
    %v441 = vpack.c.b16 %v419, %v417
    %v442 = vpack.c.b16 %v420, %v418
    %v443 = vpack.c.b16 %v423, %v421
    %v444 = vpack.c.b16 %v424, %v422
    %v445 = vpack.c.b16 %v427, %v425
    %v446 = vpack.c.b16 %v428, %v426
    %v447 = vpack.c.b16 %v431, %v429
    %v448 = vpack.c.b16 %v432, %v430
    %v449 = vpack.c.b16 %v435, %v433
    %v450 = vpack.c.b16 %v436, %v434
    %v464 = vsel %vm176, %v392, 0
    %v467 = vsel %vm176, %v394, 0
    %v470 = vsel %vm183, %v449, 0
    %v473 = vsel %vm183, %v450, 0
    %475 = vmatprep.subr.bf16.mxu0 0
    %476 = vmatpush1.bf16.msra.mxu0 0
    %477 = vmatprep.subr.bf16.mxu0 %v473
    %478 = vmatpush1.bf16.msra.mxu0 %v470
    %479 = vmatprep.subr.bf16.mxu0 %v448
    %480 = vmatpush1.bf16.msra.mxu0 %v447
    %481 = vmatprep.subr.bf16.mxu0 %v446
    %482 = vmatpush1.bf16.msra.mxu0 %v445
    %483 = vmatprep.subr.bf16.mxu0 %v444
    %484 = vmatpush1.bf16.msra.mxu0 %v443
    %485 = vmatprep.subr.bf16.mxu0 %v442
    %486 = vmatpush1.bf16.msra.mxu0 %v441
    %487 = vmatprep.subr.bf16.mxu0 %v440
    %488 = vmatpush1.bf16.msra.mxu0 %v439
    %489 = vmatprep.subr.bf16.mxu0 %v438
    %490 = vmatpush1.bf16.msra.mxu0 %v437
    %491 = vmatprep.subr.bf16.mxu0 0
    %492 = vmatpush2.bf16.msra.mxu0 0
    %493 = vmatprep.subr.bf16.mxu0 0
    %494 = vmatpush2.bf16.msra.mxu0 0
    %495 = vmatprep.subr.bf16.mxu0 0
    %496 = vmatpush2.bf16.msra.mxu0 0
    %497 = vmatprep.subr.bf16.mxu0 0
    %498 = vmatpush2.bf16.msra.mxu0 0
    %499 = vmatprep.subr.bf16.mxu0 0
    %500 = vmatpush2.bf16.msra.mxu0 0
    %501 = vmatprep.subr.bf16.mxu0 0
    %502 = vmatpush2.bf16.msra.mxu0 0
    %503 = vmatprep.subr.bf16.mxu0 0
    %504 = vmatpush2.bf16.msra.mxu0 0
    %505 = vmatprep.subr.bf16.mxu0 0
    %506 = vmatpush2.bf16.msra.mxu0 0
    %507 = vmatprep.mubr.bf16.mxu0 0
    %508 = vmatmul.mubr.bf16.gmra.mxu0 %v464
    %v509 = vpop.f32.mrf.mxu0
    %v510 = vadd.f32 0.0, %v509
    %v511 = vpop.f32.mrf.mxu0
    %v512 = vadd.f32 0.0, %v511
    %v513 = vpop.f32.mrf.mxu0
    %v514 = vadd.f32 0.0, %v513
    %v515 = vpop.f32.mrf.mxu0
    %v516 = vadd.f32 0.0, %v515
    %517 = vmatprep.mubr.bf16.mxu0 0
    %518 = vmatmul.mubr.bf16.gmra.mxu0 %v467
    %v519 = vpop.f32.mrf.mxu0
    %v520 = vadd.f32 0.0, %v519
    %v521 = vpop.f32.mrf.mxu0
    %v522 = vadd.f32 0.0, %v521
    %v523 = vpop.f32.mrf.mxu0
    %v524 = vadd.f32 0.0, %v523
    %v525 = vpop.f32.mrf.mxu0
    %v526 = vadd.f32 0.0, %v525
    %527 = vdwg.mxu0
    %v528 = vadd.f32 %v356, %v510
    %v529 = vadd.f32 %v358, %v512
    %v530 = vadd.f32 %v360, %v514
    %v531 = vadd.f32 %v362, %v516
    %v532 = vadd.f32 %v366, %v520
    %v533 = vadd.f32 %v368, %v522
    %v534 = vadd.f32 %v370, %v524
    %v535 = vadd.f32 %v372, %v526
    %s536 = scalar_lea.vmem %s1, 336
    %v537 = vld [vmem:[%s536] sm:$0xff]
    %v538 = vld [vmem:[%s536 + $0x8] sm:$0xff]
    %v539 = vld [vmem:[%s536 + $0x10] sm:$0xff]
    %v540 = vld [vmem:[%s536 + $0x18] sm:$0xff]
    %v541 = vld [vmem:[%s536 + $0x20] sm:$0xff]
    %v542 = vld [vmem:[%s536 + $0x28] sm:$0xff]
    %v543 = vld [vmem:[%s536 + $0x30] sm:$0xff]
    %v544 = vld [vmem:[%s536 + $0x38] sm:$0xff]
    %v545 = vld [vmem:[%s536 + $0x40] sm:$0xff]
    %v546 = vld [vmem:[%s536 + $0x48] sm:$0xff]
    %v547 = vld [vmem:[%s536 + $0x50] sm:$0xff]
    %v548 = vld [vmem:[%s536 + $0x58] sm:$0xff]
    %v549 = vld [vmem:[%s536 + $0x60] sm:$0xff]
    %v550 = vld [vmem:[%s536 + $0x68] sm:$0x33]
    %vm551 = vsmask.f32 6400
    %v552 = vrot.slane %v89, 1
    %v553 = vrot.slane %v91, 2
    %v554 = vor.u32 %v552, %v553
    %v555 = vrot.slane %v100, 1
    %v556 = vrot.slane %v96, 2
    %v557 = vor.u32 %v555, %v556
    %v558 = vsel %vm551, %v554, %v557
    %v559 = vshrl.u32 %v86, 16
    %v561 = vrot.slane %v559, 1
    %v562 = vrot.slane %v104, 2
    %v563 = vor.u32 %v561, %v562
    %v564 = vsel %vm551, %v557, %v563
    %v579 = vunpack.c.l.b16 %v537
    %v580 = vunpack.c.h.b16 %v537
    %v581 = vunpack.c.l.b16 %v538
    %v582 = vunpack.c.h.b16 %v538
    %v583 = vunpack.c.l.b16 %v539
    %v584 = vunpack.c.h.b16 %v539
    %v585 = vunpack.c.l.b16 %v540
    %v586 = vunpack.c.h.b16 %v540
    %v587 = vunpack.c.l.b16 %v541
    %v588 = vunpack.c.h.b16 %v541
    %v589 = vunpack.c.l.b16 %v542
    %v590 = vunpack.c.h.b16 %v542
    %v591 = vunpack.c.l.b16 %v543
    %v592 = vunpack.c.h.b16 %v543
    %v593 = vunpack.c.l.b16 %v544
    %v594 = vunpack.c.h.b16 %v544
    %v595 = vunpack.c.l.b16 %v545
    %v596 = vunpack.c.h.b16 %v545
    %v597 = vunpack.c.l.b16 %v546
    %v598 = vunpack.c.h.b16 %v546
    %v599 = vunpack.c.l.b16 %v547
    %v600 = vunpack.c.h.b16 %v547
    %v601 = vunpack.c.l.b16 %v548
    %v602 = vunpack.c.h.b16 %v548
    %v603 = vunpack.c.l.b16 %v549
    %v604 = vunpack.c.h.b16 %v549
    %v605 = vunpack.c.l.b16 %v550
    %v606 = vunpack.c.h.b16 %v550
    %v607 = vpack.c.b16 %v581, %v579
    %v608 = vpack.c.b16 %v582, %v580
    %v609 = vpack.c.b16 %v585, %v583
    %v610 = vpack.c.b16 %v586, %v584
    %v611 = vpack.c.b16 %v589, %v587
    %v612 = vpack.c.b16 %v590, %v588
    %v613 = vpack.c.b16 %v593, %v591
    %v614 = vpack.c.b16 %v594, %v592
    %v615 = vpack.c.b16 %v597, %v595
    %v616 = vpack.c.b16 %v598, %v596
    %v617 = vpack.c.b16 %v601, %v599
    %v618 = vpack.c.b16 %v602, %v600
    %v619 = vpack.c.b16 %v605, %v603
    %v620 = vpack.c.b16 %v606, %v604
    %v634 = vsel %vm176, %v558, 0
    %v637 = vsel %vm176, %v564, 0
    %v640 = vsel %vm183, %v619, 0
    %v643 = vsel %vm183, %v620, 0
    %645 = vmatprep.subr.bf16.mxu0 0
    %646 = vmatpush1.bf16.msra.mxu0 0
    %647 = vmatprep.subr.bf16.mxu0 %v643
    %648 = vmatpush1.bf16.msra.mxu0 %v640
    %649 = vmatprep.subr.bf16.mxu0 %v618
    %650 = vmatpush1.bf16.msra.mxu0 %v617
    %651 = vmatprep.subr.bf16.mxu0 %v616
    %652 = vmatpush1.bf16.msra.mxu0 %v615
    %653 = vmatprep.subr.bf16.mxu0 %v614
    %654 = vmatpush1.bf16.msra.mxu0 %v613
    %655 = vmatprep.subr.bf16.mxu0 %v612
    %656 = vmatpush1.bf16.msra.mxu0 %v611
    %657 = vmatprep.subr.bf16.mxu0 %v610
    %658 = vmatpush1.bf16.msra.mxu0 %v609
    %659 = vmatprep.subr.bf16.mxu0 %v608
    %660 = vmatpush1.bf16.msra.mxu0 %v607
    %661 = vmatprep.subr.bf16.mxu0 0
    %662 = vmatpush2.bf16.msra.mxu0 0
    %663 = vmatprep.subr.bf16.mxu0 0
    %664 = vmatpush2.bf16.msra.mxu0 0
    %665 = vmatprep.subr.bf16.mxu0 0
    %666 = vmatpush2.bf16.msra.mxu0 0
    %667 = vmatprep.subr.bf16.mxu0 0
    %668 = vmatpush2.bf16.msra.mxu0 0
    %669 = vmatprep.subr.bf16.mxu0 0
    %670 = vmatpush2.bf16.msra.mxu0 0
    %671 = vmatprep.subr.bf16.mxu0 0
    %672 = vmatpush2.bf16.msra.mxu0 0
    %673 = vmatprep.subr.bf16.mxu0 0
    %674 = vmatpush2.bf16.msra.mxu0 0
    %675 = vmatprep.subr.bf16.mxu0 0
    %676 = vmatpush2.bf16.msra.mxu0 0
    %677 = vmatprep.mubr.bf16.mxu0 0
    %678 = vmatmul.mubr.bf16.gmra.mxu0 %v634
    %v679 = vpop.f32.mrf.mxu0
    %v680 = vadd.f32 0.0, %v679
    %v681 = vpop.f32.mrf.mxu0
    %v682 = vadd.f32 0.0, %v681
    %v683 = vpop.f32.mrf.mxu0
    %v684 = vadd.f32 0.0, %v683
    %v685 = vpop.f32.mrf.mxu0
    %v686 = vadd.f32 0.0, %v685
    %687 = vmatprep.mubr.bf16.mxu0 0
    %688 = vmatmul.mubr.bf16.gmra.mxu0 %v637
    %v689 = vpop.f32.mrf.mxu0
    %v690 = vadd.f32 0.0, %v689
    %v691 = vpop.f32.mrf.mxu0
    %v692 = vadd.f32 0.0, %v691
    %v693 = vpop.f32.mrf.mxu0
    %v694 = vadd.f32 0.0, %v693
    %v695 = vpop.f32.mrf.mxu0
    %v696 = vadd.f32 0.0, %v695
    %697 = vdwg.mxu0
    %v698 = vadd.f32 %v528, %v680
    %v699 = vadd.f32 %v529, %v682
    %v700 = vadd.f32 %v530, %v684
    %v701 = vadd.f32 %v531, %v686
    %v702 = vadd.f32 %v532, %v690
    %v703 = vadd.f32 %v533, %v692
    %v704 = vadd.f32 %v534, %v694
    %v705 = vadd.f32 %v535, %v696
    %s706 = scalar_lea.vmem %s1, 448
    %v707 = vld [vmem:[%s706] sm:$0xff]
    %v708 = vld [vmem:[%s706 + $0x8] sm:$0xff]
    %v709 = vld [vmem:[%s706 + $0x10] sm:$0xff]
    %v710 = vld [vmem:[%s706 + $0x18] sm:$0xff]
    %v711 = vld [vmem:[%s706 + $0x20] sm:$0xff]
    %v712 = vld [vmem:[%s706 + $0x28] sm:$0xff]
    %v713 = vld [vmem:[%s706 + $0x30] sm:$0xff]
    %v714 = vld [vmem:[%s706 + $0x38] sm:$0xff]
    %v715 = vld [vmem:[%s706 + $0x40] sm:$0xff]
    %v716 = vld [vmem:[%s706 + $0x48] sm:$0xff]
    %v717 = vld [vmem:[%s706 + $0x50] sm:$0xff]
    %v718 = vld [vmem:[%s706 + $0x58] sm:$0xff]
    %v719 = vld [vmem:[%s706 + $0x60] sm:$0xff]
    %v720 = vld [vmem:[%s706 + $0x68] sm:$0x33]
    %vm721 = vcmask 1045504
    %v722 = vrot.slane %v84, 2
    %v723 = vrot.slane %v85, 2
    %v724 = vsel %vm721, %v722, %v723
    %v725 = vrot.slane %v86, 2
    %v726 = vsel %vm721, %v723, %v725
    %v741 = vunpack.c.l.b16 %v707
    %v742 = vunpack.c.h.b16 %v707
    %v743 = vunpack.c.l.b16 %v708
    %v744 = vunpack.c.h.b16 %v708
    %v745 = vunpack.c.l.b16 %v709
    %v746 = vunpack.c.h.b16 %v709
    %v747 = vunpack.c.l.b16 %v710
    %v748 = vunpack.c.h.b16 %v710
    %v749 = vunpack.c.l.b16 %v711
    %v750 = vunpack.c.h.b16 %v711
    %v751 = vunpack.c.l.b16 %v712
    %v752 = vunpack.c.h.b16 %v712
    %v753 = vunpack.c.l.b16 %v713
    %v754 = vunpack.c.h.b16 %v713
    %v755 = vunpack.c.l.b16 %v714
    %v756 = vunpack.c.h.b16 %v714
    %v757 = vunpack.c.l.b16 %v715
    %v758 = vunpack.c.h.b16 %v715
    %v759 = vunpack.c.l.b16 %v716
    %v760 = vunpack.c.h.b16 %v716
    %v761 = vunpack.c.l.b16 %v717
    %v762 = vunpack.c.h.b16 %v717
    %v763 = vunpack.c.l.b16 %v718
    %v764 = vunpack.c.h.b16 %v718
    %v765 = vunpack.c.l.b16 %v719
    %v766 = vunpack.c.h.b16 %v719
    %v767 = vunpack.c.l.b16 %v720
    %v768 = vunpack.c.h.b16 %v720
    %v769 = vpack.c.b16 %v743, %v741
    %v770 = vpack.c.b16 %v744, %v742
    %v771 = vpack.c.b16 %v747, %v745
    %v772 = vpack.c.b16 %v748, %v746
    %v773 = vpack.c.b16 %v751, %v749
    %v774 = vpack.c.b16 %v752, %v750
    %v775 = vpack.c.b16 %v755, %v753
    %v776 = vpack.c.b16 %v756, %v754
    %v777 = vpack.c.b16 %v759, %v757
    %v778 = vpack.c.b16 %v760, %v758
    %v779 = vpack.c.b16 %v763, %v761
    %v780 = vpack.c.b16 %v764, %v762
    %v781 = vpack.c.b16 %v767, %v765
    %v782 = vpack.c.b16 %v768, %v766
    %v796 = vsel %vm176, %v724, 0
    %v799 = vsel %vm176, %v726, 0
    %v802 = vsel %vm183, %v781, 0
    %v805 = vsel %vm183, %v782, 0
    %807 = vmatprep.subr.bf16.mxu0 0
    %808 = vmatpush1.bf16.msra.mxu0 0
    %809 = vmatprep.subr.bf16.mxu0 %v805
    %810 = vmatpush1.bf16.msra.mxu0 %v802
    %811 = vmatprep.subr.bf16.mxu0 %v780
    %812 = vmatpush1.bf16.msra.mxu0 %v779
    %813 = vmatprep.subr.bf16.mxu0 %v778
    %814 = vmatpush1.bf16.msra.mxu0 %v777
    %815 = vmatprep.subr.bf16.mxu0 %v776
    %816 = vmatpush1.bf16.msra.mxu0 %v775
    %817 = vmatprep.subr.bf16.mxu0 %v774
    %818 = vmatpush1.bf16.msra.mxu0 %v773
    %819 = vmatprep.subr.bf16.mxu0 %v772
    %820 = vmatpush1.bf16.msra.mxu0 %v771
    %821 = vmatprep.subr.bf16.mxu0 %v770
    %822 = vmatpush1.bf16.msra.mxu0 %v769
    %823 = vmatprep.subr.bf16.mxu0 0
    %824 = vmatpush2.bf16.msra.mxu0 0
    %825 = vmatprep.subr.bf16.mxu0 0
    %826 = vmatpush2.bf16.msra.mxu0 0
    %827 = vmatprep.subr.bf16.mxu0 0
    %828 = vmatpush2.bf16.msra.mxu0 0
    %829 = vmatprep.subr.bf16.mxu0 0
    %830 = vmatpush2.bf16.msra.mxu0 0
    %831 = vmatprep.subr.bf16.mxu0 0
    %832 = vmatpush2.bf16.msra.mxu0 0
    %833 = vmatprep.subr.bf16.mxu0 0
    %834 = vmatpush2.bf16.msra.mxu0 0
    %835 = vmatprep.subr.bf16.mxu0 0
    %836 = vmatpush2.bf16.msra.mxu0 0
    %837 = vmatprep.subr.bf16.mxu0 0
    %838 = vmatpush2.bf16.msra.mxu0 0
    %839 = vmatprep.mubr.bf16.mxu0 0
    %840 = vmatmul.mubr.bf16.gmra.mxu0 %v796
    %v841 = vpop.f32.mrf.mxu0
    %v842 = vadd.f32 0.0, %v841
    %v843 = vpop.f32.mrf.mxu0
    %v844 = vadd.f32 0.0, %v843
    %v845 = vpop.f32.mrf.mxu0
    %v846 = vadd.f32 0.0, %v845
    %v847 = vpop.f32.mrf.mxu0
    %v848 = vadd.f32 0.0, %v847
    %849 = vmatprep.mubr.bf16.mxu0 0
    %850 = vmatmul.mubr.bf16.gmra.mxu0 %v799
    %v851 = vpop.f32.mrf.mxu0
    %v852 = vadd.f32 0.0, %v851
    %v853 = vpop.f32.mrf.mxu0
    %v854 = vadd.f32 0.0, %v853
    %v855 = vpop.f32.mrf.mxu0
    %v856 = vadd.f32 0.0, %v855
    %v857 = vpop.f32.mrf.mxu0
    %v858 = vadd.f32 0.0, %v857
    %859 = vdwg.mxu0
    %v860 = vadd.f32 %v698, %v842
    %v861 = vadd.f32 %v699, %v844
    %v862 = vadd.f32 %v700, %v846
    %v863 = vadd.f32 %v701, %v848
    %v864 = vadd.f32 %v702, %v852
    %v865 = vadd.f32 %v703, %v854
    %v866 = vadd.f32 %v704, %v856
    %v867 = vadd.f32 %v705, %v858
    %v868 = vld [vmem:[%s2] sm:$0x3]
    %v870 = vlaneseq
    %v871 = vshrl.u32 %v870, 7
    %v872 = vsub.s32 0, %v871
    %v873 = vrot.slane %v868, %v872
    %v874 = vlaneseq
    %v875 = vshrl.u32 %v874, 7
    %v876 = vsub.s32 1, %v875
    %v877 = vrot.slane %v868, %v876
    %v880 = vadd.f32 %v860, %v873
    %v881 = vadd.f32 %v861, %v877
    %v882 = vadd.f32 %v862, %v873
    %v883 = vadd.f32 %v863, %v877
    %v884 = vadd.f32 %v864, %v873
    %v885 = vadd.f32 %v865, %v877
    %v886 = vadd.f32 %v866, %v873
    %v887 = vadd.f32 %v867, %v877
    %v888 = vmax.f32 %v880, 0.0
    %v889 = vmax.f32 %v881, 0.0
    %v890 = vmax.f32 %v882, 0.0
    %v891 = vmax.f32 %v883, 0.0
    %v892 = vmax.f32 %v884, 0.0
    %v893 = vmax.f32 %v885, 0.0
    %v894 = vmax.f32 %v886, 0.0
    %v895 = vmax.f32 %v887, 0.0
    %vm904 = vcmask 1046528
    %v905 = vrot.slane %v888, 1
    %v906 = vrot.slane %v890, 1
    %v907 = vsel %vm904, %v905, %v906
    %v908 = vrot.slane %v889, 1
    %v909 = vrot.slane %v891, 1
    %v910 = vsel %vm904, %v908, %v909
    %v911 = vrot.slane %v892, 1
    %v912 = vsel %vm904, %v906, %v911
    %v913 = vrot.slane %v893, 1
    %v914 = vsel %vm904, %v909, %v913
    %v915 = vrot.slane %v894, 1
    %v916 = vsel %vm904, %v911, %v915
    %v917 = vrot.slane %v895, 1
    %v918 = vsel %vm904, %v913, %v917
    %v927 = vmax.f32 %v888, %v907
    %v928 = vmax.f32 %v889, %v910
    %v929 = vmax.f32 %v890, %v912
    %v930 = vmax.f32 %v891, %v914
    %v931 = vmax.f32 %v892, %v916
    %v932 = vmax.f32 %v893, %v918
    %v933 = vmax.f32 %v894, %v915
    %v934 = vmax.f32 %v895, %v917
    %943 = vrot.lane.b32.xlu0 %v927, 122
    %v944 = vpop.permute.xlu0 %943
    %945 = vrot.lane.b32.xlu0 %v928, 122
    %v946 = vpop.permute.xlu0 %945
    %947 = vrot.lane.b32.xlu0 %v929, 122
    %v948 = vpop.permute.xlu0 %947
    %949 = vrot.lane.b32.xlu0 %v930, 122
    %v950 = vpop.permute.xlu0 %949
    %951 = vrot.lane.b32.xlu0 %v931, 122
    %v952 = vpop.permute.xlu0 %951
    %953 = vrot.lane.b32.xlu0 %v932, 122
    %v954 = vpop.permute.xlu0 %953
    %955 = vrot.lane.b32.xlu0 %v933, 122
    %v956 = vpop.permute.xlu0 %955
    %957 = vrot.lane.b32.xlu0 %v934, 122
    %v958 = vpop.permute.xlu0 %957
    %vm959 = vcmask 998400
    %v960 = vsel %vm959, %v944, %v946
    %v961 = vsel %vm959, %v948, %v950
    %v962 = vsel %vm959, %v952, %v954
    %v963 = vsel %vm959, %v956, %v958
    %v972 = vmax.f32 %v927, %v960
    %v973 = vmax.f32 %v928, %v946
    %v974 = vmax.f32 %v929, %v961
    %v975 = vmax.f32 %v930, %v950
    %v976 = vmax.f32 %v931, %v962
    %v977 = vmax.f32 %v932, %v954
    %v978 = vmax.f32 %v933, %v963
    %v979 = vmax.f32 %v934, %v958
    %v980 = vpack.c.bf16 %v974, %v972
    %v981 = vpack.c.bf16 %v975, %v973
    %v982 = vpack.c.bf16 %v978, %v976
    %v983 = vpack.c.bf16 %v979, %v977
    %v984 = vld [vmem:[%s3] sm:$0xff]
    %v985 = vld [vmem:[%s3 + $0x8] sm:$0xff]
    %v986 = vld [vmem:[%s3 + $0x10] sm:$0xff]
    %v987 = vld [vmem:[%s3 + $0x18] sm:$0xff]
    %v988 = vld [vmem:[%s3 + $0x20] sm:$0xff]
    %v989 = vld [vmem:[%s3 + $0x28] sm:$0xff]
    %v990 = vld [vmem:[%s3 + $0x30] sm:$0xff]
    %v991 = vld [vmem:[%s3 + $0x38] sm:$0xff]
    %v992 = vld [vmem:[%s3 + $0x40] sm:$0xff]
    %v993 = vld [vmem:[%s3 + $0x48] sm:$0xff]
    %v994 = vld [vmem:[%s3 + $0x50] sm:$0xff]
    %v995 = vld [vmem:[%s3 + $0x58] sm:$0xff]
    %v996 = vld [vmem:[%s3 + $0x60] sm:$0xff]
    %v997 = vld [vmem:[%s3 + $0x68] sm:$0xff]
    %v998 = vld [vmem:[%s3 + $0x70] sm:$0xff]
    %v999 = vld [vmem:[%s3 + $0x78] sm:$0xff]
    %v1000 = vld [vmem:[%s3 + $0x80] sm:$0xff]
    %v1001 = vld [vmem:[%s3 + $0x88] sm:$0xff]
    %v1002 = vld [vmem:[%s3 + $0x90] sm:$0xff]
    %v1003 = vld [vmem:[%s3 + $0x98] sm:$0xff]
    %v1004 = vld [vmem:[%s3 + $0xa0] sm:$0xff]
    %v1005 = vld [vmem:[%s3 + $0xa8] sm:$0xff]
    %v1006 = vld [vmem:[%s3 + $0xb0] sm:$0xff]
    %v1007 = vld [vmem:[%s3 + $0xb8] sm:$0x11]
    %s1008 = scalar_lea.vmem %s3, 192
    %v1009 = vld [vmem:[%s1008] sm:$0xff]
    %v1010 = vld [vmem:[%s1008 + $0x8] sm:$0xff]
    %v1011 = vld [vmem:[%s1008 + $0x10] sm:$0xff]
    %v1012 = vld [vmem:[%s1008 + $0x18] sm:$0xff]
    %v1013 = vld [vmem:[%s1008 + $0x20] sm:$0xff]
    %v1014 = vld [vmem:[%s1008 + $0x28] sm:$0xff]
    %v1015 = vld [vmem:[%s1008 + $0x30] sm:$0xff]
    %v1016 = vld [vmem:[%s1008 + $0x38] sm:$0xff]
    %v1017 = vld [vmem:[%s1008 + $0x40] sm:$0xff]
    %v1018 = vld [vmem:[%s1008 + $0x48] sm:$0xff]
    %v1019 = vld [vmem:[%s1008 + $0x50] sm:$0xff]
    %v1020 = vld [vmem:[%s1008 + $0x58] sm:$0xff]
    %v1021 = vld [vmem:[%s1008 + $0x60] sm:$0xff]
    %v1022 = vld [vmem:[%s1008 + $0x68] sm:$0xff]
    %v1023 = vld [vmem:[%s1008 + $0x70] sm:$0xff]
    %v1024 = vld [vmem:[%s1008 + $0x78] sm:$0xff]
    %v1025 = vld [vmem:[%s1008 + $0x80] sm:$0xff]
    %v1026 = vld [vmem:[%s1008 + $0x88] sm:$0xff]
    %v1027 = vld [vmem:[%s1008 + $0x90] sm:$0xff]
    %v1028 = vld [vmem:[%s1008 + $0x98] sm:$0xff]
    %v1029 = vld [vmem:[%s1008 + $0xa0] sm:$0xff]
    %v1030 = vld [vmem:[%s1008 + $0xa8] sm:$0xff]
    %v1031 = vld [vmem:[%s1008 + $0xb0] sm:$0xff]
    %v1032 = vld [vmem:[%s1008 + $0xb8] sm:$0x11]
    %v1037 = vrot.slane %v980, 1
    %v1038 = vrot.slane %v982, 1
    %v1039 = vsel %vm389, %v1037, %v1038
    %v1040 = vrot.slane %v981, 1
    %v1041 = vrot.slane %v983, 1
    %v1042 = vsel %vm389, %v1040, %v1041
    %v1069 = vunpack.c.l.b16 %v1009
    %v1070 = vunpack.c.h.b16 %v1009
    %v1071 = vunpack.c.l.b16 %v1010
    %v1072 = vunpack.c.h.b16 %v1010
    %v1073 = vunpack.c.l.b16 %v1011
    %v1074 = vunpack.c.h.b16 %v1011
    %v1075 = vunpack.c.l.b16 %v1012
    %v1076 = vunpack.c.h.b16 %v1012
    %v1077 = vunpack.c.l.b16 %v1013
    %v1078 = vunpack.c.h.b16 %v1013
    %v1079 = vunpack.c.l.b16 %v1014
    %v1080 = vunpack.c.h.b16 %v1014
    %v1081 = vunpack.c.l.b16 %v1015
    %v1082 = vunpack.c.h.b16 %v1015
    %v1083 = vunpack.c.l.b16 %v1016
    %v1084 = vunpack.c.h.b16 %v1016
    %v1085 = vunpack.c.l.b16 %v1017
    %v1086 = vunpack.c.h.b16 %v1017
    %v1087 = vunpack.c.l.b16 %v1018
    %v1088 = vunpack.c.h.b16 %v1018
    %v1089 = vunpack.c.l.b16 %v1019
    %v1090 = vunpack.c.h.b16 %v1019
    %v1091 = vunpack.c.l.b16 %v1020
    %v1092 = vunpack.c.h.b16 %v1020
    %v1093 = vunpack.c.l.b16 %v1021
    %v1094 = vunpack.c.h.b16 %v1021
    %v1095 = vunpack.c.l.b16 %v1022
    %v1096 = vunpack.c.h.b16 %v1022
    %v1097 = vunpack.c.l.b16 %v1023
    %v1098 = vunpack.c.h.b16 %v1023
    %v1099 = vunpack.c.l.b16 %v1024
    %v1100 = vunpack.c.h.b16 %v1024
    %v1101 = vunpack.c.l.b16 %v1025
    %v1102 = vunpack.c.h.b16 %v1025
    %v1103 = vunpack.c.l.b16 %v1026
    %v1104 = vunpack.c.h.b16 %v1026
    %v1105 = vunpack.c.l.b16 %v1027
    %v1106 = vunpack.c.h.b16 %v1027
    %v1107 = vunpack.c.l.b16 %v1028
    %v1108 = vunpack.c.h.b16 %v1028
    %v1109 = vunpack.c.l.b16 %v1029
    %v1110 = vunpack.c.h.b16 %v1029
    %v1111 = vunpack.c.l.b16 %v1030
    %v1112 = vunpack.c.h.b16 %v1030
    %v1113 = vunpack.c.l.b16 %v1031
    %v1114 = vunpack.c.h.b16 %v1031
    %v1115 = vunpack.c.l.b16 %v1032
    %v1116 = vunpack.c.h.b16 %v1032
    %v1117 = vpack.c.b16 %v1071, %v1069
    %v1118 = vpack.c.b16 %v1072, %v1070
    %v1119 = vpack.c.b16 %v1075, %v1073
    %v1120 = vpack.c.b16 %v1076, %v1074
    %v1121 = vpack.c.b16 %v1079, %v1077
    %v1122 = vpack.c.b16 %v1080, %v1078
    %v1123 = vpack.c.b16 %v1083, %v1081
    %v1124 = vpack.c.b16 %v1084, %v1082
    %v1125 = vpack.c.b16 %v1087, %v1085
    %v1126 = vpack.c.b16 %v1088, %v1086
    %v1127 = vpack.c.b16 %v1091, %v1089
    %v1128 = vpack.c.b16 %v1092, %v1090
    %v1129 = vpack.c.b16 %v1095, %v1093
    %v1130 = vpack.c.b16 %v1096, %v1094
    %v1131 = vpack.c.b16 %v1099, %v1097
    %v1132 = vpack.c.b16 %v1100, %v1098
    %v1133 = vpack.c.b16 %v1103, %v1101
    %v1134 = vpack.c.b16 %v1104, %v1102
    %v1135 = vpack.c.b16 %v1107, %v1105
    %v1136 = vpack.c.b16 %v1108, %v1106
    %v1137 = vpack.c.b16 %v1111, %v1109
    %v1138 = vpack.c.b16 %v1112, %v1110
    %v1139 = vpack.c.b16 %v1115, %v1113
    %v1140 = vpack.c.b16 %v1116, %v1114
    %vm1163 = vcmask 474112
    %v1165 = vsel %vm1163, %v1042, 0
    %v1168 = vsel %vm1163, %v1041, 0
    %vm1170 = vcmask 1044480
    %v1172 = vsel %vm1170, %v1139, 0
    %v1175 = vsel %vm1170, %v1140, 0
    %1177 = vmatprep.subr.bf16.mxu0 %v1132
    %1178 = vmatpush1.bf16.msra.mxu0 %v1131
    %1179 = vmatprep.subr.bf16.mxu0 %v1130
    %1180 = vmatpush1.bf16.msra.mxu0 %v1129
    %1181 = vmatprep.subr.bf16.mxu0 %v1128
    %1182 = vmatpush1.bf16.msra.mxu0 %v1127
    %1183 = vmatprep.subr.bf16.mxu0 %v1126
    %1184 = vmatpush1.bf16.msra.mxu0 %v1125
    %1185 = vmatprep.subr.bf16.mxu0 %v1124
    %1186 = vmatpush1.bf16.msra.mxu0 %v1123
    %1187 = vmatprep.subr.bf16.mxu0 %v1122
    %1188 = vmatpush1.bf16.msra.mxu0 %v1121
    %1189 = vmatprep.subr.bf16.mxu0 %v1120
    %1190 = vmatpush1.bf16.msra.mxu0 %v1119
    %1191 = vmatprep.subr.bf16.mxu0 %v1118
    %1192 = vmatpush1.bf16.msra.mxu0 %v1117
    %1193 = vmatprep.subr.bf16.mxu0 0
    %1194 = vmatpush2.bf16.msra.mxu0 0
    %1195 = vmatprep.subr.bf16.mxu0 0
    %1196 = vmatpush2.bf16.msra.mxu0 0
    %1197 = vmatprep.subr.bf16.mxu0 0
    %1198 = vmatpush2.bf16.msra.mxu0 0
    %1199 = vmatprep.subr.bf16.mxu0 0
    %1200 = vmatpush2.bf16.msra.mxu0 0
    %1201 = vmatprep.subr.bf16.mxu0 %v1175
    %1202 = vmatpush2.bf16.msra.mxu0 %v1172
    %1203 = vmatprep.subr.bf16.mxu0 %v1138
    %1204 = vmatpush2.bf16.msra.mxu0 %v1137
    %1205 = vmatprep.subr.bf16.mxu0 %v1136
    %1206 = vmatpush2.bf16.msra.mxu0 %v1135
    %1207 = vmatprep.subr.bf16.mxu0 %v1134
    %1208 = vmatpush2.bf16.msra.mxu0 %v1133
    %1209 = vmatprep.mubr.bf16.mxu0 %v1165
    %1210 = vmatmul.mubr.bf16.gmra.mxu0 %v1039
    %v1211 = vpop.f32.mrf.mxu0
    %v1212 = vadd.f32 0.0, %v1211
    %v1213 = vpop.f32.mrf.mxu0
    %v1214 = vadd.f32 0.0, %v1213
    %v1215 = vpop.f32.mrf.mxu0
    %v1216 = vadd.f32 0.0, %v1215
    %v1217 = vpop.f32.mrf.mxu0
    %v1218 = vadd.f32 0.0, %v1217
    %1219 = vmatprep.mubr.bf16.mxu0 %v1168
    %1220 = vmatmul.mubr.bf16.gmra.mxu0 %v1038
    %v1221 = vpop.f32.mrf.mxu0
    %v1222 = vadd.f32 0.0, %v1221
    %v1223 = vpop.f32.mrf.mxu0
    %v1224 = vadd.f32 0.0, %v1223
    %v1225 = vpop.f32.mrf.mxu0
    %v1226 = vpop.f32.mrf.mxu0
    %1227 = vdwg.mxu0
    %v1252 = vunpack.c.l.b16 %v984
    %v1253 = vunpack.c.h.b16 %v984
    %v1254 = vunpack.c.l.b16 %v985
    %v1255 = vunpack.c.h.b16 %v985
    %v1256 = vunpack.c.l.b16 %v986
    %v1257 = vunpack.c.h.b16 %v986
    %v1258 = vunpack.c.l.b16 %v987
    %v1259 = vunpack.c.h.b16 %v987
    %v1260 = vunpack.c.l.b16 %v988
    %v1261 = vunpack.c.h.b16 %v988
    %v1262 = vunpack.c.l.b16 %v989
    %v1263 = vunpack.c.h.b16 %v989
    %v1264 = vunpack.c.l.b16 %v990
    %v1265 = vunpack.c.h.b16 %v990
    %v1266 = vunpack.c.l.b16 %v991
    %v1267 = vunpack.c.h.b16 %v991
    %v1268 = vunpack.c.l.b16 %v992
    %v1269 = vunpack.c.h.b16 %v992
    %v1270 = vunpack.c.l.b16 %v993
    %v1271 = vunpack.c.h.b16 %v993
    %v1272 = vunpack.c.l.b16 %v994
    %v1273 = vunpack.c.h.b16 %v994
    %v1274 = vunpack.c.l.b16 %v995
    %v1275 = vunpack.c.h.b16 %v995
    %v1276 = vunpack.c.l.b16 %v996
    %v1277 = vunpack.c.h.b16 %v996
    %v1278 = vunpack.c.l.b16 %v997
    %v1279 = vunpack.c.h.b16 %v997
    %v1280 = vunpack.c.l.b16 %v998
    %v1281 = vunpack.c.h.b16 %v998
    %v1282 = vunpack.c.l.b16 %v999
    %v1283 = vunpack.c.h.b16 %v999
    %v1284 = vunpack.c.l.b16 %v1000
    %v1285 = vunpack.c.h.b16 %v1000
    %v1286 = vunpack.c.l.b16 %v1001
    %v1287 = vunpack.c.h.b16 %v1001
    %v1288 = vunpack.c.l.b16 %v1002
    %v1289 = vunpack.c.h.b16 %v1002
    %v1290 = vunpack.c.l.b16 %v1003
    %v1291 = vunpack.c.h.b16 %v1003
    %v1292 = vunpack.c.l.b16 %v1004
    %v1293 = vunpack.c.h.b16 %v1004
    %v1294 = vunpack.c.l.b16 %v1005
    %v1295 = vunpack.c.h.b16 %v1005
    %v1296 = vunpack.c.l.b16 %v1006
    %v1297 = vunpack.c.h.b16 %v1006
    %v1298 = vunpack.c.l.b16 %v1007
    %v1299 = vunpack.c.h.b16 %v1007
    %v1300 = vpack.c.b16 %v1254, %v1252
    %v1301 = vpack.c.b16 %v1255, %v1253
    %v1302 = vpack.c.b16 %v1258, %v1256
    %v1303 = vpack.c.b16 %v1259, %v1257
    %v1304 = vpack.c.b16 %v1262, %v1260
    %v1305 = vpack.c.b16 %v1263, %v1261
    %v1306 = vpack.c.b16 %v1266, %v1264
    %v1307 = vpack.c.b16 %v1267, %v1265
    %v1308 = vpack.c.b16 %v1270, %v1268
    %v1309 = vpack.c.b16 %v1271, %v1269
    %v1310 = vpack.c.b16 %v1274, %v1272
    %v1311 = vpack.c.b16 %v1275, %v1273
    %v1312 = vpack.c.b16 %v1278, %v1276
    %v1313 = vpack.c.b16 %v1279, %v1277
    %v1314 = vpack.c.b16 %v1282, %v1280
    %v1315 = vpack.c.b16 %v1283, %v1281
    %v1316 = vpack.c.b16 %v1286, %v1284
    %v1317 = vpack.c.b16 %v1287, %v1285
    %v1318 = vpack.c.b16 %v1290, %v1288
    %v1319 = vpack.c.b16 %v1291, %v1289
    %v1320 = vpack.c.b16 %v1294, %v1292
    %v1321 = vpack.c.b16 %v1295, %v1293
    %v1322 = vpack.c.b16 %v1298, %v1296
    %v1323 = vpack.c.b16 %v1299, %v1297
    %v1347 = vsel %vm1163, %v981, 0
    %v1350 = vsel %vm1163, %v983, 0
    %v1353 = vsel %vm1170, %v1322, 0
    %v1356 = vsel %vm1170, %v1323, 0
    %1358 = vmatprep.subr.bf16.mxu0 %v1315
    %1359 = vmatpush1.bf16.msra.mxu0 %v1314
    %1360 = vmatprep.subr.bf16.mxu0 %v1313
    %1361 = vmatpush1.bf16.msra.mxu0 %v1312
    %1362 = vmatprep.subr.bf16.mxu0 %v1311
    %1363 = vmatpush1.bf16.msra.mxu0 %v1310
    %1364 = vmatprep.subr.bf16.mxu0 %v1309
    %1365 = vmatpush1.bf16.msra.mxu0 %v1308
    %1366 = vmatprep.subr.bf16.mxu0 %v1307
    %1367 = vmatpush1.bf16.msra.mxu0 %v1306
    %1368 = vmatprep.subr.bf16.mxu0 %v1305
    %1369 = vmatpush1.bf16.msra.mxu0 %v1304
    %1370 = vmatprep.subr.bf16.mxu0 %v1303
    %1371 = vmatpush1.bf16.msra.mxu0 %v1302
    %1372 = vmatprep.subr.bf16.mxu0 %v1301
    %1373 = vmatpush1.bf16.msra.mxu0 %v1300
    %1374 = vmatprep.subr.bf16.mxu0 0
    %1375 = vmatpush2.bf16.msra.mxu0 0
    %1376 = vmatprep.subr.bf16.mxu0 0
    %1377 = vmatpush2.bf16.msra.mxu0 0
    %1378 = vmatprep.subr.bf16.mxu0 0
    %1379 = vmatpush2.bf16.msra.mxu0 0
    %1380 = vmatprep.subr.bf16.mxu0 0
    %1381 = vmatpush2.bf16.msra.mxu0 0
    %1382 = vmatprep.subr.bf16.mxu0 %v1356
    %1383 = vmatpush2.bf16.msra.mxu0 %v1353
    %1384 = vmatprep.subr.bf16.mxu0 %v1321
    %1385 = vmatpush2.bf16.msra.mxu0 %v1320
    %1386 = vmatprep.subr.bf16.mxu0 %v1319
    %1387 = vmatpush2.bf16.msra.mxu0 %v1318
    %1388 = vmatprep.subr.bf16.mxu0 %v1317
    %1389 = vmatpush2.bf16.msra.mxu0 %v1316
    %1390 = vmatprep.mubr.bf16.mxu0 %v1347
    %1391 = vmatmul.mubr.bf16.gmra.mxu0 %v980
    %v1392 = vpop.f32.mrf.mxu0
    %v1393 = vadd.f32 %v1212, %v1392
    %v1394 = vpop.f32.mrf.mxu0
    %v1395 = vadd.f32 %v1214, %v1394
    %v1396 = vpop.f32.mrf.mxu0
    %v1397 = vadd.f32 %v1216, %v1396
    %v1398 = vpop.f32.mrf.mxu0
    %v1399 = vadd.f32 %v1218, %v1398
    %1400 = vmatprep.mubr.bf16.mxu0 %v1350
    %1401 = vmatmul.mubr.bf16.gmra.mxu0 %v982
    %v1402 = vpop.f32.mrf.mxu0
    %v1403 = vadd.f32 %v1222, %v1402
    %v1404 = vpop.f32.mrf.mxu0
    %v1405 = vadd.f32 %v1224, %v1404
    %v1406 = vpop.f32.mrf.mxu0
    %v1407 = vpop.f32.mrf.mxu0
    %1408 = vdwg.mxu0
    %s1409 = scalar_lea.vmem %s3, 384
    %v1410 = vld [vmem:[%s1409] sm:$0xff]
    %v1411 = vld [vmem:[%s1409 + $0x8] sm:$0xff]
    %v1412 = vld [vmem:[%s1409 + $0x10] sm:$0xff]
    %v1413 = vld [vmem:[%s1409 + $0x18] sm:$0xff]
    %v1414 = vld [vmem:[%s1409 + $0x20] sm:$0xff]
    %v1415 = vld [vmem:[%s1409 + $0x28] sm:$0xff]
    %v1416 = vld [vmem:[%s1409 + $0x30] sm:$0xff]
    %v1417 = vld [vmem:[%s1409 + $0x38] sm:$0xff]
    %v1418 = vld [vmem:[%s1409 + $0x40] sm:$0xff]
    %v1419 = vld [vmem:[%s1409 + $0x48] sm:$0xff]
    %v1420 = vld [vmem:[%s1409 + $0x50] sm:$0xff]
    %v1421 = vld [vmem:[%s1409 + $0x58] sm:$0xff]
    %v1422 = vld [vmem:[%s1409 + $0x60] sm:$0xff]
    %v1423 = vld [vmem:[%s1409 + $0x68] sm:$0xff]
    %v1424 = vld [vmem:[%s1409 + $0x70] sm:$0xff]
    %v1425 = vld [vmem:[%s1409 + $0x78] sm:$0xff]
    %v1426 = vld [vmem:[%s1409 + $0x80] sm:$0xff]
    %v1427 = vld [vmem:[%s1409 + $0x88] sm:$0xff]
    %v1428 = vld [vmem:[%s1409 + $0x90] sm:$0xff]
    %v1429 = vld [vmem:[%s1409 + $0x98] sm:$0xff]
    %v1430 = vld [vmem:[%s1409 + $0xa0] sm:$0xff]
    %v1431 = vld [vmem:[%s1409 + $0xa8] sm:$0xff]
    %v1432 = vld [vmem:[%s1409 + $0xb0] sm:$0xff]
    %v1433 = vld [vmem:[%s1409 + $0xb8] sm:$0x11]
    %v1434 = vrot.slane %v980, 2
    %v1435 = vrot.slane %v982, 2
    %v1436 = vsel %vm721, %v1434, %v1435
    %v1437 = vrot.slane %v981, 2
    %v1438 = vrot.slane %v983, 2
    %v1439 = vsel %vm721, %v1437, %v1438
    %v1466 = vunpack.c.l.b16 %v1410
    %v1467 = vunpack.c.h.b16 %v1410
    %v1468 = vunpack.c.l.b16 %v1411
    %v1469 = vunpack.c.h.b16 %v1411
    %v1470 = vunpack.c.l.b16 %v1412
    %v1471 = vunpack.c.h.b16 %v1412
    %v1472 = vunpack.c.l.b16 %v1413
    %v1473 = vunpack.c.h.b16 %v1413
    %v1474 = vunpack.c.l.b16 %v1414
    %v1475 = vunpack.c.h.b16 %v1414
    %v1476 = vunpack.c.l.b16 %v1415
    %v1477 = vunpack.c.h.b16 %v1415
    %v1478 = vunpack.c.l.b16 %v1416
    %v1479 = vunpack.c.h.b16 %v1416
    %v1480 = vunpack.c.l.b16 %v1417
    %v1481 = vunpack.c.h.b16 %v1417
    %v1482 = vunpack.c.l.b16 %v1418
    %v1483 = vunpack.c.h.b16 %v1418
    %v1484 = vunpack.c.l.b16 %v1419
    %v1485 = vunpack.c.h.b16 %v1419
    %v1486 = vunpack.c.l.b16 %v1420
    %v1487 = vunpack.c.h.b16 %v1420
    %v1488 = vunpack.c.l.b16 %v1421
    %v1489 = vunpack.c.h.b16 %v1421
    %v1490 = vunpack.c.l.b16 %v1422
    %v1491 = vunpack.c.h.b16 %v1422
    %v1492 = vunpack.c.l.b16 %v1423
    %v1493 = vunpack.c.h.b16 %v1423
    %v1494 = vunpack.c.l.b16 %v1424
    %v1495 = vunpack.c.h.b16 %v1424
    %v1496 = vunpack.c.l.b16 %v1425
    %v1497 = vunpack.c.h.b16 %v1425
    %v1498 = vunpack.c.l.b16 %v1426
    %v1499 = vunpack.c.h.b16 %v1426
    %v1500 = vunpack.c.l.b16 %v1427
    %v1501 = vunpack.c.h.b16 %v1427
    %v1502 = vunpack.c.l.b16 %v1428
    %v1503 = vunpack.c.h.b16 %v1428
    %v1504 = vunpack.c.l.b16 %v1429
    %v1505 = vunpack.c.h.b16 %v1429
    %v1506 = vunpack.c.l.b16 %v1430
    %v1507 = vunpack.c.h.b16 %v1430
    %v1508 = vunpack.c.l.b16 %v1431
    %v1509 = vunpack.c.h.b16 %v1431
    %v1510 = vunpack.c.l.b16 %v1432
    %v1511 = vunpack.c.h.b16 %v1432
    %v1512 = vunpack.c.l.b16 %v1433
    %v1513 = vunpack.c.h.b16 %v1433
    %v1514 = vpack.c.b16 %v1468, %v1466
    %v1515 = vpack.c.b16 %v1469, %v1467
    %v1516 = vpack.c.b16 %v1472, %v1470
    %v1517 = vpack.c.b16 %v1473, %v1471
    %v1518 = vpack.c.b16 %v1476, %v1474
    %v1519 = vpack.c.b16 %v1477, %v1475
    %v1520 = vpack.c.b16 %v1480, %v1478
    %v1521 = vpack.c.b16 %v1481, %v1479
    %v1522 = vpack.c.b16 %v1484, %v1482
    %v1523 = vpack.c.b16 %v1485, %v1483
    %v1524 = vpack.c.b16 %v1488, %v1486
    %v1525 = vpack.c.b16 %v1489, %v1487
    %v1526 = vpack.c.b16 %v1492, %v1490
    %v1527 = vpack.c.b16 %v1493, %v1491
    %v1528 = vpack.c.b16 %v1496, %v1494
    %v1529 = vpack.c.b16 %v1497, %v1495
    %v1530 = vpack.c.b16 %v1500, %v1498
    %v1531 = vpack.c.b16 %v1501, %v1499
    %v1532 = vpack.c.b16 %v1504, %v1502
    %v1533 = vpack.c.b16 %v1505, %v1503
    %v1534 = vpack.c.b16 %v1508, %v1506
    %v1535 = vpack.c.b16 %v1509, %v1507
    %v1536 = vpack.c.b16 %v1512, %v1510
    %v1537 = vpack.c.b16 %v1513, %v1511
    %v1561 = vsel %vm1163, %v1439, 0
    %v1564 = vsel %vm1163, %v1438, 0
    %v1567 = vsel %vm1170, %v1536, 0
    %v1570 = vsel %vm1170, %v1537, 0
    %1572 = vmatprep.subr.bf16.mxu0 %v1529
    %1573 = vmatpush1.bf16.msra.mxu0 %v1528
    %1574 = vmatprep.subr.bf16.mxu0 %v1527
    %1575 = vmatpush1.bf16.msra.mxu0 %v1526
    %1576 = vmatprep.subr.bf16.mxu0 %v1525
    %1577 = vmatpush1.bf16.msra.mxu0 %v1524
    %1578 = vmatprep.subr.bf16.mxu0 %v1523
    %1579 = vmatpush1.bf16.msra.mxu0 %v1522
    %1580 = vmatprep.subr.bf16.mxu0 %v1521
    %1581 = vmatpush1.bf16.msra.mxu0 %v1520
    %1582 = vmatprep.subr.bf16.mxu0 %v1519
    %1583 = vmatpush1.bf16.msra.mxu0 %v1518
    %1584 = vmatprep.subr.bf16.mxu0 %v1517
    %1585 = vmatpush1.bf16.msra.mxu0 %v1516
    %1586 = vmatprep.subr.bf16.mxu0 %v1515
    %1587 = vmatpush1.bf16.msra.mxu0 %v1514
    %1588 = vmatprep.subr.bf16.mxu0 0
    %1589 = vmatpush2.bf16.msra.mxu0 0
    %1590 = vmatprep.subr.bf16.mxu0 0
    %1591 = vmatpush2.bf16.msra.mxu0 0
    %1592 = vmatprep.subr.bf16.mxu0 0
    %1593 = vmatpush2.bf16.msra.mxu0 0
    %1594 = vmatprep.subr.bf16.mxu0 0
    %1595 = vmatpush2.bf16.msra.mxu0 0
    %1596 = vmatprep.subr.bf16.mxu0 %v1570
    %1597 = vmatpush2.bf16.msra.mxu0 %v1567
    %1598 = vmatprep.subr.bf16.mxu0 %v1535
    %1599 = vmatpush2.bf16.msra.mxu0 %v1534
    %1600 = vmatprep.subr.bf16.mxu0 %v1533
    %1601 = vmatpush2.bf16.msra.mxu0 %v1532
    %1602 = vmatprep.subr.bf16.mxu0 %v1531
    %1603 = vmatpush2.bf16.msra.mxu0 %v1530
    %1604 = vmatprep.mubr.bf16.mxu0 %v1561
    %1605 = vmatmul.mubr.bf16.gmra.mxu0 %v1436
    %v1606 = vpop.f32.mrf.mxu0
    %v1607 = vadd.f32 0.0, %v1606
    %v1608 = vpop.f32.mrf.mxu0
    %v1609 = vadd.f32 0.0, %v1608
    %v1610 = vpop.f32.mrf.mxu0
    %v1611 = vadd.f32 0.0, %v1610
    %v1612 = vpop.f32.mrf.mxu0
    %v1613 = vadd.f32 0.0, %v1612
    %1614 = vmatprep.mubr.bf16.mxu0 %v1564
    %1615 = vmatmul.mubr.bf16.gmra.mxu0 %v1435
    %v1616 = vpop.f32.mrf.mxu0
    %v1617 = vadd.f32 0.0, %v1616
    %v1618 = vpop.f32.mrf.mxu0
    %v1619 = vadd.f32 0.0, %v1618
    %v1620 = vpop.f32.mrf.mxu0
    %v1621 = vpop.f32.mrf.mxu0
    %1622 = vdwg.mxu0
    %v1623 = vadd.f32 %v1393, %v1607
    %v1624 = vadd.f32 %v1395, %v1609
    %v1625 = vadd.f32 %v1397, %v1611
    %v1626 = vadd.f32 %v1399, %v1613
    %v1627 = vadd.f32 %v1403, %v1617
    %v1628 = vadd.f32 %v1405, %v1619
    %s1629 = scalar_lea.vmem %s3, 576
    %v1630 = vld [vmem:[%s1629] sm:$0xff]
    %v1631 = vld [vmem:[%s1629 + $0x8] sm:$0xff]
    %v1632 = vld [vmem:[%s1629 + $0x10] sm:$0xff]
    %v1633 = vld [vmem:[%s1629 + $0x18] sm:$0xff]
    %v1634 = vld [vmem:[%s1629 + $0x20] sm:$0xff]
    %v1635 = vld [vmem:[%s1629 + $0x28] sm:$0xff]
    %v1636 = vld [vmem:[%s1629 + $0x30] sm:$0xff]
    %v1637 = vld [vmem:[%s1629 + $0x38] sm:$0xff]
    %v1638 = vld [vmem:[%s1629 + $0x40] sm:$0xff]
    %v1639 = vld [vmem:[%s1629 + $0x48] sm:$0xff]
    %v1640 = vld [vmem:[%s1629 + $0x50] sm:$0xff]
    %v1641 = vld [vmem:[%s1629 + $0x58] sm:$0xff]
    %v1642 = vld [vmem:[%s1629 + $0x60] sm:$0xff]
    %v1643 = vld [vmem:[%s1629 + $0x68] sm:$0xff]
    %v1644 = vld [vmem:[%s1629 + $0x70] sm:$0xff]
    %v1645 = vld [vmem:[%s1629 + $0x78] sm:$0xff]
    %v1646 = vld [vmem:[%s1629 + $0x80] sm:$0xff]
    %v1647 = vld [vmem:[%s1629 + $0x88] sm:$0xff]
    %v1648 = vld [vmem:[%s1629 + $0x90] sm:$0xff]
    %v1649 = vld [vmem:[%s1629 + $0x98] sm:$0xff]
    %v1650 = vld [vmem:[%s1629 + $0xa0] sm:$0xff]
    %v1651 = vld [vmem:[%s1629 + $0xa8] sm:$0xff]
    %v1652 = vld [vmem:[%s1629 + $0xb0] sm:$0xff]
    %v1653 = vld [vmem:[%s1629 + $0xb8] sm:$0x11]
    %vm1654 = vcmask 1044480
    %v1655 = vrot.slane %v980, 3
    %v1656 = vrot.slane %v982, 3
    %v1657 = vsel %vm1654, %v1655, %v1656
    %v1658 = vrot.slane %v981, 3
    %v1659 = vrot.slane %v983, 3
    %v1660 = vsel %vm1654, %v1658, %v1659
    %v1687 = vunpack.c.l.b16 %v1630
    %v1688 = vunpack.c.h.b16 %v1630
    %v1689 = vunpack.c.l.b16 %v1631
    %v1690 = vunpack.c.h.b16 %v1631
    %v1691 = vunpack.c.l.b16 %v1632
    %v1692 = vunpack.c.h.b16 %v1632
    %v1693 = vunpack.c.l.b16 %v1633
    %v1694 = vunpack.c.h.b16 %v1633
    %v1695 = vunpack.c.l.b16 %v1634
    %v1696 = vunpack.c.h.b16 %v1634
    %v1697 = vunpack.c.l.b16 %v1635
    %v1698 = vunpack.c.h.b16 %v1635
    %v1699 = vunpack.c.l.b16 %v1636
    %v1700 = vunpack.c.h.b16 %v1636
    %v1701 = vunpack.c.l.b16 %v1637
    %v1702 = vunpack.c.h.b16 %v1637
    %v1703 = vunpack.c.l.b16 %v1638
    %v1704 = vunpack.c.h.b16 %v1638
    %v1705 = vunpack.c.l.b16 %v1639
    %v1706 = vunpack.c.h.b16 %v1639
    %v1707 = vunpack.c.l.b16 %v1640
    %v1708 = vunpack.c.h.b16 %v1640
    %v1709 = vunpack.c.l.b16 %v1641
    %v1710 = vunpack.c.h.b16 %v1641
    %v1711 = vunpack.c.l.b16 %v1642
    %v1712 = vunpack.c.h.b16 %v1642
    %v1713 = vunpack.c.l.b16 %v1643
    %v1714 = vunpack.c.h.b16 %v1643
    %v1715 = vunpack.c.l.b16 %v1644
    %v1716 = vunpack.c.h.b16 %v1644
    %v1717 = vunpack.c.l.b16 %v1645
    %v1718 = vunpack.c.h.b16 %v1645
    %v1719 = vunpack.c.l.b16 %v1646
    %v1720 = vunpack.c.h.b16 %v1646
    %v1721 = vunpack.c.l.b16 %v1647
    %v1722 = vunpack.c.h.b16 %v1647
    %v1723 = vunpack.c.l.b16 %v1648
    %v1724 = vunpack.c.h.b16 %v1648
    %v1725 = vunpack.c.l.b16 %v1649
    %v1726 = vunpack.c.h.b16 %v1649
    %v1727 = vunpack.c.l.b16 %v1650
    %v1728 = vunpack.c.h.b16 %v1650
    %v1729 = vunpack.c.l.b16 %v1651
    %v1730 = vunpack.c.h.b16 %v1651
    %v1731 = vunpack.c.l.b16 %v1652
    %v1732 = vunpack.c.h.b16 %v1652
    %v1733 = vunpack.c.l.b16 %v1653
    %v1734 = vunpack.c.h.b16 %v1653
    %v1735 = vpack.c.b16 %v1689, %v1687
    %v1736 = vpack.c.b16 %v1690, %v1688
    %v1737 = vpack.c.b16 %v1693, %v1691
    %v1738 = vpack.c.b16 %v1694, %v1692
    %v1739 = vpack.c.b16 %v1697, %v1695
    %v1740 = vpack.c.b16 %v1698, %v1696
    %v1741 = vpack.c.b16 %v1701, %v1699
    %v1742 = vpack.c.b16 %v1702, %v1700
    %v1743 = vpack.c.b16 %v1705, %v1703
    %v1744 = vpack.c.b16 %v1706, %v1704
    %v1745 = vpack.c.b16 %v1709, %v1707
    %v1746 = vpack.c.b16 %v1710, %v1708
    %v1747 = vpack.c.b16 %v1713, %v1711
    %v1748 = vpack.c.b16 %v1714, %v1712
    %v1749 = vpack.c.b16 %v1717, %v1715
    %v1750 = vpack.c.b16 %v1718, %v1716
    %v1751 = vpack.c.b16 %v1721, %v1719
    %v1752 = vpack.c.b16 %v1722, %v1720
    %v1753 = vpack.c.b16 %v1725, %v1723
    %v1754 = vpack.c.b16 %v1726, %v1724
    %v1755 = vpack.c.b16 %v1729, %v1727
    %v1756 = vpack.c.b16 %v1730, %v1728
    %v1757 = vpack.c.b16 %v1733, %v1731
    %v1758 = vpack.c.b16 %v1734, %v1732
    %v1782 = vsel %vm1163, %v1660, 0
    %v1785 = vsel %vm1163, %v1659, 0
    %v1788 = vsel %vm1170, %v1757, 0
    %v1791 = vsel %vm1170, %v1758, 0
    %1793 = vmatprep.subr.bf16.mxu0 %v1750
    %1794 = vmatpush1.bf16.msra.mxu0 %v1749
    %1795 = vmatprep.subr.bf16.mxu0 %v1748
    %1796 = vmatpush1.bf16.msra.mxu0 %v1747
    %1797 = vmatprep.subr.bf16.mxu0 %v1746
    %1798 = vmatpush1.bf16.msra.mxu0 %v1745
    %1799 = vmatprep.subr.bf16.mxu0 %v1744
    %1800 = vmatpush1.bf16.msra.mxu0 %v1743
    %1801 = vmatprep.subr.bf16.mxu0 %v1742
    %1802 = vmatpush1.bf16.msra.mxu0 %v1741
    %1803 = vmatprep.subr.bf16.mxu0 %v1740
    %1804 = vmatpush1.bf16.msra.mxu0 %v1739
    %1805 = vmatprep.subr.bf16.mxu0 %v1738
    %1806 = vmatpush1.bf16.msra.mxu0 %v1737
    %1807 = vmatprep.subr.bf16.mxu0 %v1736
    %1808 = vmatpush1.bf16.msra.mxu0 %v1735
    %1809 = vmatprep.subr.bf16.mxu0 0
    %1810 = vmatpush2.bf16.msra.mxu0 0
    %1811 = vmatprep.subr.bf16.mxu0 0
    %1812 = vmatpush2.bf16.msra.mxu0 0
    %1813 = vmatprep.subr.bf16.mxu0 0
    %1814 = vmatpush2.bf16.msra.mxu0 0
    %1815 = vmatprep.subr.bf16.mxu0 0
    %1816 = vmatpush2.bf16.msra.mxu0 0
    %1817 = vmatprep.subr.bf16.mxu0 %v1791
    %1818 = vmatpush2.bf16.msra.mxu0 %v1788
    %1819 = vmatprep.subr.bf16.mxu0 %v1756
    %1820 = vmatpush2.bf16.msra.mxu0 %v1755
    %1821 = vmatprep.subr.bf16.mxu0 %v1754
    %1822 = vmatpush2.bf16.msra.mxu0 %v1753
    %1823 = vmatprep.subr.bf16.mxu0 %v1752
    %1824 = vmatpush2.bf16.msra.mxu0 %v1751
    %1825 = vmatprep.mubr.bf16.mxu0 %v1782
    %1826 = vmatmul.mubr.bf16.gmra.mxu0 %v1657
    %v1827 = vpop.f32.mrf.mxu0
    %v1828 = vadd.f32 0.0, %v1827
    %v1829 = vpop.f32.mrf.mxu0
    %v1830 = vadd.f32 0.0, %v1829
    %v1831 = vpop.f32.mrf.mxu0
    %v1832 = vadd.f32 0.0, %v1831
    %v1833 = vpop.f32.mrf.mxu0
    %v1834 = vadd.f32 0.0, %v1833
    %1835 = vmatprep.mubr.bf16.mxu0 %v1785
    %1836 = vmatmul.mubr.bf16.gmra.mxu0 %v1656
    %v1837 = vpop.f32.mrf.mxu0
    %v1838 = vadd.f32 0.0, %v1837
    %v1839 = vpop.f32.mrf.mxu0
    %v1840 = vadd.f32 0.0, %v1839
    %v1841 = vpop.f32.mrf.mxu0
    %v1842 = vpop.f32.mrf.mxu0
    %1843 = vdwg.mxu0
    %v1844 = vadd.f32 %v1623, %v1828
    %v1845 = vadd.f32 %v1624, %v1830
    %v1846 = vadd.f32 %v1625, %v1832
    %v1847 = vadd.f32 %v1626, %v1834
    %v1848 = vadd.f32 %v1627, %v1838
    %v1849 = vadd.f32 %v1628, %v1840
    %s1850 = scalar_lea.vmem %s3, 768
    %v1851 = vld [vmem:[%s1850] sm:$0xff]
    %v1852 = vld [vmem:[%s1850 + $0x8] sm:$0xff]
    %v1853 = vld [vmem:[%s1850 + $0x10] sm:$0xff]
    %v1854 = vld [vmem:[%s1850 + $0x18] sm:$0xff]
    %v1855 = vld [vmem:[%s1850 + $0x20] sm:$0xff]
    %v1856 = vld [vmem:[%s1850 + $0x28] sm:$0xff]
    %v1857 = vld [vmem:[%s1850 + $0x30] sm:$0xff]
    %v1858 = vld [vmem:[%s1850 + $0x38] sm:$0xff]
    %v1859 = vld [vmem:[%s1850 + $0x40] sm:$0xff]
    %v1860 = vld [vmem:[%s1850 + $0x48] sm:$0xff]
    %v1861 = vld [vmem:[%s1850 + $0x50] sm:$0xff]
    %v1862 = vld [vmem:[%s1850 + $0x58] sm:$0xff]
    %v1863 = vld [vmem:[%s1850 + $0x60] sm:$0xff]
    %v1864 = vld [vmem:[%s1850 + $0x68] sm:$0xff]
    %v1865 = vld [vmem:[%s1850 + $0x70] sm:$0xff]
    %v1866 = vld [vmem:[%s1850 + $0x78] sm:$0xff]
    %v1867 = vld [vmem:[%s1850 + $0x80] sm:$0xff]
    %v1868 = vld [vmem:[%s1850 + $0x88] sm:$0xff]
    %v1869 = vld [vmem:[%s1850 + $0x90] sm:$0xff]
    %v1870 = vld [vmem:[%s1850 + $0x98] sm:$0xff]
    %v1871 = vld [vmem:[%s1850 + $0xa0] sm:$0xff]
    %v1872 = vld [vmem:[%s1850 + $0xa8] sm:$0xff]
    %v1873 = vld [vmem:[%s1850 + $0xb0] sm:$0xff]
    %v1874 = vld [vmem:[%s1850 + $0xb8] sm:$0x11]
    %vm1875 = vcmask 1043456
    %v1876 = vrot.slane %v980, 4
    %v1877 = vrot.slane %v982, 4
    %v1878 = vsel %vm1875, %v1876, %v1877
    %v1879 = vrot.slane %v981, 4
    %v1880 = vrot.slane %v983, 4
    %v1881 = vsel %vm1875, %v1879, %v1880
    %v1908 = vunpack.c.l.b16 %v1851
    %v1909 = vunpack.c.h.b16 %v1851
    %v1910 = vunpack.c.l.b16 %v1852
    %v1911 = vunpack.c.h.b16 %v1852
    %v1912 = vunpack.c.l.b16 %v1853
    %v1913 = vunpack.c.h.b16 %v1853
    %v1914 = vunpack.c.l.b16 %v1854
    %v1915 = vunpack.c.h.b16 %v1854
    %v1916 = vunpack.c.l.b16 %v1855
    %v1917 = vunpack.c.h.b16 %v1855
    %v1918 = vunpack.c.l.b16 %v1856
    %v1919 = vunpack.c.h.b16 %v1856
    %v1920 = vunpack.c.l.b16 %v1857
    %v1921 = vunpack.c.h.b16 %v1857
    %v1922 = vunpack.c.l.b16 %v1858
    %v1923 = vunpack.c.h.b16 %v1858
    %v1924 = vunpack.c.l.b16 %v1859
    %v1925 = vunpack.c.h.b16 %v1859
    %v1926 = vunpack.c.l.b16 %v1860
    %v1927 = vunpack.c.h.b16 %v1860
    %v1928 = vunpack.c.l.b16 %v1861
    %v1929 = vunpack.c.h.b16 %v1861
    %v1930 = vunpack.c.l.b16 %v1862
    %v1931 = vunpack.c.h.b16 %v1862
    %v1932 = vunpack.c.l.b16 %v1863
    %v1933 = vunpack.c.h.b16 %v1863
    %v1934 = vunpack.c.l.b16 %v1864
    %v1935 = vunpack.c.h.b16 %v1864
    %v1936 = vunpack.c.l.b16 %v1865
    %v1937 = vunpack.c.h.b16 %v1865
    %v1938 = vunpack.c.l.b16 %v1866
    %v1939 = vunpack.c.h.b16 %v1866
    %v1940 = vunpack.c.l.b16 %v1867
    %v1941 = vunpack.c.h.b16 %v1867
    %v1942 = vunpack.c.l.b16 %v1868
    %v1943 = vunpack.c.h.b16 %v1868
    %v1944 = vunpack.c.l.b16 %v1869
    %v1945 = vunpack.c.h.b16 %v1869
    %v1946 = vunpack.c.l.b16 %v1870
    %v1947 = vunpack.c.h.b16 %v1870
    %v1948 = vunpack.c.l.b16 %v1871
    %v1949 = vunpack.c.h.b16 %v1871
    %v1950 = vunpack.c.l.b16 %v1872
    %v1951 = vunpack.c.h.b16 %v1872
    %v1952 = vunpack.c.l.b16 %v1873
    %v1953 = vunpack.c.h.b16 %v1873
    %v1954 = vunpack.c.l.b16 %v1874
    %v1955 = vunpack.c.h.b16 %v1874
    %v1956 = vpack.c.b16 %v1910, %v1908
    %v1957 = vpack.c.b16 %v1911, %v1909
    %v1958 = vpack.c.b16 %v1914, %v1912
    %v1959 = vpack.c.b16 %v1915, %v1913
    %v1960 = vpack.c.b16 %v1918, %v1916
    %v1961 = vpack.c.b16 %v1919, %v1917
    %v1962 = vpack.c.b16 %v1922, %v1920
    %v1963 = vpack.c.b16 %v1923, %v1921
    %v1964 = vpack.c.b16 %v1926, %v1924
    %v1965 = vpack.c.b16 %v1927, %v1925
    %v1966 = vpack.c.b16 %v1930, %v1928
    %v1967 = vpack.c.b16 %v1931, %v1929
    %v1968 = vpack.c.b16 %v1934, %v1932
    %v1969 = vpack.c.b16 %v1935, %v1933
    %v1970 = vpack.c.b16 %v1938, %v1936
    %v1971 = vpack.c.b16 %v1939, %v1937
    %v1972 = vpack.c.b16 %v1942, %v1940
    %v1973 = vpack.c.b16 %v1943, %v1941
    %v1974 = vpack.c.b16 %v1946, %v1944
    %v1975 = vpack.c.b16 %v1947, %v1945
    %v1976 = vpack.c.b16 %v1950, %v1948
    %v1977 = vpack.c.b16 %v1951, %v1949
    %v1978 = vpack.c.b16 %v1954, %v1952
    %v1979 = vpack.c.b16 %v1955, %v1953
    %v2003 = vsel %vm1163, %v1881, 0
    %v2006 = vsel %vm1163, %v1880, 0
    %v2009 = vsel %vm1170, %v1978, 0
    %v2012 = vsel %vm1170, %v1979, 0
    %2014 = vmatprep.subr.bf16.mxu0 %v1971
    %2015 = vmatpush1.bf16.msra.mxu0 %v1970
    %2016 = vmatprep.subr.bf16.mxu0 %v1969
    %2017 = vmatpush1.bf16.msra.mxu0 %v1968
    %2018 = vmatprep.subr.bf16.mxu0 %v1967
    %2019 = vmatpush1.bf16.msra.mxu0 %v1966
    %2020 = vmatprep.subr.bf16.mxu0 %v1965
    %2021 = vmatpush1.bf16.msra.mxu0 %v1964
    %2022 = vmatprep.subr.bf16.mxu0 %v1963
    %2023 = vmatpush1.bf16.msra.mxu0 %v1962
    %2024 = vmatprep.subr.bf16.mxu0 %v1961
    %2025 = vmatpush1.bf16.msra.mxu0 %v1960
    %2026 = vmatprep.subr.bf16.mxu0 %v1959
    %2027 = vmatpush1.bf16.msra.mxu0 %v1958
    %2028 = vmatprep.subr.bf16.mxu0 %v1957
    %2029 = vmatpush1.bf16.msra.mxu0 %v1956
    %2030 = vmatprep.subr.bf16.mxu0 0
    %2031 = vmatpush2.bf16.msra.mxu0 0
    %2032 = vmatprep.subr.bf16.mxu0 0
    %2033 = vmatpush2.bf16.msra.mxu0 0
    %2034 = vmatprep.subr.bf16.mxu0 0
    %2035 = vmatpush2.bf16.msra.mxu0 0
    %2036 = vmatprep.subr.bf16.mxu0 0
    %2037 = vmatpush2.bf16.msra.mxu0 0
    %2038 = vmatprep.subr.bf16.mxu0 %v2012
    %2039 = vmatpush2.bf16.msra.mxu0 %v2009
    %2040 = vmatprep.subr.bf16.mxu0 %v1977
    %2041 = vmatpush2.bf16.msra.mxu0 %v1976
    %2042 = vmatprep.subr.bf16.mxu0 %v1975
    %2043 = vmatpush2.bf16.msra.mxu0 %v1974
    %2044 = vmatprep.subr.bf16.mxu0 %v1973
    %2045 = vmatpush2.bf16.msra.mxu0 %v1972
    %2046 = vmatprep.mubr.bf16.mxu0 %v2003
    %2047 = vmatmul.mubr.bf16.gmra.mxu0 %v1878
    %v2048 = vpop.f32.mrf.mxu0
    %v2049 = vadd.f32 0.0, %v2048
    %v2050 = vpop.f32.mrf.mxu0
    %v2051 = vadd.f32 0.0, %v2050
    %v2052 = vpop.f32.mrf.mxu0
    %v2053 = vadd.f32 0.0, %v2052
    %v2054 = vpop.f32.mrf.mxu0
    %v2055 = vadd.f32 0.0, %v2054
    %2056 = vmatprep.mubr.bf16.mxu0 %v2006
    %2057 = vmatmul.mubr.bf16.gmra.mxu0 %v1877
    %v2058 = vpop.f32.mrf.mxu0
    %v2059 = vadd.f32 0.0, %v2058
    %v2060 = vpop.f32.mrf.mxu0
    %v2061 = vadd.f32 0.0, %v2060
    %v2062 = vpop.f32.mrf.mxu0
    %v2063 = vpop.f32.mrf.mxu0
    %2064 = vdwg.mxu0
    %v2065 = vadd.f32 %v1844, %v2049
    %v2066 = vadd.f32 %v1845, %v2051
    %v2067 = vadd.f32 %v1846, %v2053
    %v2068 = vadd.f32 %v1847, %v2055
    %v2069 = vadd.f32 %v1848, %v2059
    %v2070 = vadd.f32 %v1849, %v2061
    %v2071 = vld [vmem:[%s4] sm:$0x3]
    %v2073 = vlaneseq
    %v2074 = vshrl.u32 %v2073, 7
    %v2075 = vsub.s32 0, %v2074
    %v2076 = vrot.slane %v2071, %v2075
    %v2077 = vlaneseq
    %v2078 = vshrl.u32 %v2077, 7
    %v2079 = vsub.s32 1, %v2078
    %v2080 = vrot.slane %v2071, %v2079
    %v2083 = vadd.f32 %v2065, %v2076
    %v2084 = vadd.f32 %v2066, %v2080
    %v2085 = vadd.f32 %v2067, %v2076
    %v2086 = vadd.f32 %v2068, %v2080
    %v2087 = vadd.f32 %v2069, %v2076
    %v2088 = vadd.f32 %v2070, %v2080
    %v2089 = vmax.f32 %v2083, 0.0
    %v2090 = vmax.f32 %v2084, 0.0
    %v2091 = vmax.f32 %v2085, 0.0
    %v2092 = vmax.f32 %v2086, 0.0
    %v2093 = vmax.f32 %v2087, 0.0
    %v2094 = vmax.f32 %v2088, 0.0
    %v2101 = vrot.slane %v2089, 2
    %v2102 = vrot.slane %v2091, 2
    %v2103 = vsel %vm183, %v2101, %v2102
    %v2104 = vrot.slane %v2090, 2
    %v2105 = vrot.slane %v2092, 2
    %v2106 = vsel %vm183, %v2104, %v2105
    %v2107 = vrot.slane %v2093, 2
    %v2108 = vsel %vm183, %v2102, %v2107
    %v2109 = vrot.slane %v2094, 2
    %v2110 = vsel %vm183, %v2105, %v2109
    %v2117 = vmax.f32 %v2089, %v2103
    %v2118 = vmax.f32 %v2090, %v2106
    %v2119 = vmax.f32 %v2091, %v2108
    %v2120 = vmax.f32 %v2092, %v2110
    %v2121 = vmax.f32 %v2093, %v2107
    %v2122 = vmax.f32 %v2094, %v2109
    %2129 = vrot.lane.b32.xlu0 %v2117, 112
    %v2130 = vpop.permute.xlu0 %2129
    %2131 = vrot.lane.b32.xlu0 %v2118, 112
    %v2132 = vpop.permute.xlu0 %2131
    %2133 = vrot.lane.b32.xlu0 %v2119, 112
    %v2134 = vpop.permute.xlu0 %2133
    %2135 = vrot.lane.b32.xlu0 %v2120, 112
    %v2136 = vpop.permute.xlu0 %2135
    %2137 = vrot.lane.b32.xlu0 %v2121, 112
    %v2138 = vpop.permute.xlu0 %2137
    %2139 = vrot.lane.b32.xlu0 %v2122, 112
    %v2140 = vpop.permute.xlu0 %2139
    %vm2141 = vcmask 916480
    %v2142 = vsel %vm2141, %v2130, %v2132
    %v2143 = vsel %vm2141, %v2134, %v2136
    %v2144 = vsel %vm2141, %v2138, %v2140
    %v2151 = vmax.f32 %v2117, %v2142
    %v2152 = vmax.f32 %v2118, %v2132
    %v2153 = vmax.f32 %v2119, %v2143
    %v2154 = vmax.f32 %v2120, %v2136
    %v2155 = vmax.f32 %v2121, %v2144
    %v2156 = vmax.f32 %v2122, %v2140
    %v2157 = vpack.c.bf16 %v2153, %v2151
    %v2158 = vpack.c.bf16 %v2154, %v2152
    %v2159 = vpack.c.bf16 %v2155, %v2155
    %v2160 = vpack.c.bf16 %v2156, %v2156
    %v2161 = vld [vmem:[%s5] sm:$0xf]
    %v2162 = vld [vmem:[%s5 + $0x4] sm:$0xf]
    %v2163 = vld [vmem:[%s5 + $0x8] sm:$0xf]
    %v2164 = vld [vmem:[%s5 + $0xc] sm:$0xf]
    %v2165 = vld [vmem:[%s5 + $0x10] sm:$0xf]
    %v2166 = vld [vmem:[%s5 + $0x14] sm:$0xf]
    %v2167 = vld [vmem:[%s5 + $0x18] sm:$0xf]
    %v2168 = vld [vmem:[%s5 + $0x1c] sm:$0xf]
    %v2169 = vld [vmem:[%s5 + $0x20] sm:$0xf]
    %v2170 = vld [vmem:[%s5 + $0x24] sm:$0xf]
    %v2171 = vld [vmem:[%s5 + $0x28] sm:$0xf]
    %v2172 = vld [vmem:[%s5 + $0x2c] sm:$0xf]
    %v2173 = vld [vmem:[%s5 + $0x30] sm:$0xf]
    %v2174 = vld [vmem:[%s5 + $0x34] sm:$0xf]
    %v2175 = vld [vmem:[%s5 + $0x38] sm:$0xf]
    %v2176 = vld [vmem:[%s5 + $0x3c] sm:$0xf]
    %v2177 = vld [vmem:[%s5 + $0x40] sm:$0xf]
    %v2178 = vld [vmem:[%s5 + $0x44] sm:$0xf]
    %v2179 = vld [vmem:[%s5 + $0x48] sm:$0xf]
    %v2180 = vld [vmem:[%s5 + $0x4c] sm:$0xf]
    %v2181 = vld [vmem:[%s5 + $0x50] sm:$0xf]
    %v2182 = vld [vmem:[%s5 + $0x54] sm:$0xf]
    %v2183 = vld [vmem:[%s5 + $0x58] sm:$0xf]
    %v2184 = vld [vmem:[%s5 + $0x5c] sm:$0xf]
    %v2185 = vld [vmem:[%s5 + $0x60] sm:$0xf]
    %v2186 = vld [vmem:[%s5 + $0x64] sm:$0xf]
    %v2187 = vld [vmem:[%s5 + $0x68] sm:$0xf]
    %v2188 = vld [vmem:[%s5 + $0x6c] sm:$0xf]
    %v2189 = vld [vmem:[%s5 + $0x70] sm:$0xf]
    %v2190 = vld [vmem:[%s5 + $0x74] sm:$0xf]
    %s2191 = scalar_lea.vmem %s5, 120
    %v2192 = vld [vmem:[%s2191] sm:$0xf]
    %v2193 = vld [vmem:[%s2191 + $0x4] sm:$0xf]
    %v2194 = vld [vmem:[%s2191 + $0x8] sm:$0xf]
    %v2195 = vld [vmem:[%s2191 + $0xc] sm:$0xf]
    %v2196 = vld [vmem:[%s2191 + $0x10] sm:$0xf]
    %v2197 = vld [vmem:[%s2191 + $0x14] sm:$0xf]
    %v2198 = vld [vmem:[%s2191 + $0x18] sm:$0xf]
    %v2199 = vld [vmem:[%s2191 + $0x1c] sm:$0xf]
    %v2200 = vld [vmem:[%s2191 + $0x20] sm:$0xf]
    %v2201 = vld [vmem:[%s2191 + $0x24] sm:$0xf]
    %v2202 = vld [vmem:[%s2191 + $0x28] sm:$0xf]
    %v2203 = vld [vmem:[%s2191 + $0x2c] sm:$0xf]
    %v2204 = vld [vmem:[%s2191 + $0x30] sm:$0xf]
    %v2205 = vld [vmem:[%s2191 + $0x34] sm:$0xf]
    %v2206 = vld [vmem:[%s2191 + $0x38] sm:$0xf]
    %v2207 = vld [vmem:[%s2191 + $0x3c] sm:$0xf]
    %v2208 = vld [vmem:[%s2191 + $0x40] sm:$0xf]
    %v2209 = vld [vmem:[%s2191 + $0x44] sm:$0xf]
    %v2210 = vld [vmem:[%s2191 + $0x48] sm:$0xf]
    %v2211 = vld [vmem:[%s2191 + $0x4c] sm:$0xf]
    %v2212 = vld [vmem:[%s2191 + $0x50] sm:$0xf]
    %v2213 = vld [vmem:[%s2191 + $0x54] sm:$0xf]
    %v2214 = vld [vmem:[%s2191 + $0x58] sm:$0xf]
    %v2215 = vld [vmem:[%s2191 + $0x5c] sm:$0xf]
    %v2216 = vld [vmem:[%s2191 + $0x60] sm:$0xf]
    %v2217 = vld [vmem:[%s2191 + $0x64] sm:$0xf]
    %v2218 = vld [vmem:[%s2191 + $0x68] sm:$0xf]
    %v2219 = vld [vmem:[%s2191 + $0x6c] sm:$0xf]
    %v2220 = vld [vmem:[%s2191 + $0x70] sm:$0xf]
    %v2221 = vld [vmem:[%s2191 + $0x74] sm:$0xf]
    %v2224 = vrot.slane %v2157, 2
    %v2225 = vrot.slane %v2158, 2
    %v2257 = vunpack.c.l.b16 %v2192
    %v2258 = vunpack.c.l.b16 %v2193
    %v2259 = vunpack.c.l.b16 %v2194
    %v2260 = vunpack.c.l.b16 %v2195
    %v2261 = vunpack.c.l.b16 %v2196
    %v2262 = vunpack.c.l.b16 %v2197
    %v2263 = vunpack.c.l.b16 %v2198
    %v2264 = vunpack.c.l.b16 %v2199
    %v2265 = vunpack.c.l.b16 %v2200
    %v2266 = vunpack.c.l.b16 %v2201
    %v2267 = vunpack.c.l.b16 %v2202
    %v2268 = vunpack.c.l.b16 %v2203
    %v2269 = vunpack.c.l.b16 %v2204
    %v2270 = vunpack.c.l.b16 %v2205
    %v2271 = vunpack.c.l.b16 %v2206
    %v2272 = vunpack.c.l.b16 %v2207
    %v2273 = vunpack.c.l.b16 %v2208
    %v2274 = vunpack.c.l.b16 %v2209
    %v2275 = vunpack.c.l.b16 %v2210
    %v2276 = vunpack.c.l.b16 %v2211
    %v2277 = vunpack.c.l.b16 %v2212
    %v2278 = vunpack.c.l.b16 %v2213
    %v2279 = vunpack.c.l.b16 %v2214
    %v2280 = vunpack.c.l.b16 %v2215
    %v2281 = vunpack.c.l.b16 %v2216
    %v2282 = vunpack.c.l.b16 %v2217
    %v2283 = vunpack.c.l.b16 %v2218
    %v2284 = vunpack.c.l.b16 %v2219
    %v2285 = vunpack.c.l.b16 %v2220
    %v2286 = vunpack.c.l.b16 %v2221
    %v2287 = vpack.c.b16 %v2258, %v2257
    %v2288 = vpack.c.b16 %v2260, %v2259
    %v2289 = vpack.c.b16 %v2262, %v2261
    %v2290 = vpack.c.b16 %v2264, %v2263
    %v2291 = vpack.c.b16 %v2266, %v2265
    %v2292 = vpack.c.b16 %v2268, %v2267
    %v2293 = vpack.c.b16 %v2270, %v2269
    %v2294 = vpack.c.b16 %v2272, %v2271
    %v2295 = vpack.c.b16 %v2274, %v2273
    %v2296 = vpack.c.b16 %v2276, %v2275
    %v2297 = vpack.c.b16 %v2278, %v2277
    %v2298 = vpack.c.b16 %v2280, %v2279
    %v2299 = vpack.c.b16 %v2282, %v2281
    %v2300 = vpack.c.b16 %v2284, %v2283
    %v2301 = vpack.c.b16 %v2286, %v2285
    %v2318 = vsel %vm2141, %v2225, 0
    %2320 = vmatprep.subr.bf16.mxu0 0
    %2321 = vmatpush1.bf16.msra.mxu0 %v2294
    %2322 = vmatprep.subr.bf16.mxu0 0
    %2323 = vmatpush1.bf16.msra.mxu0 %v2293
    %2324 = vmatprep.subr.bf16.mxu0 0
    %2325 = vmatpush1.bf16.msra.mxu0 %v2292
    %2326 = vmatprep.subr.bf16.mxu0 0
    %2327 = vmatpush1.bf16.msra.mxu0 %v2291
    %2328 = vmatprep.subr.bf16.mxu0 0
    %2329 = vmatpush1.bf16.msra.mxu0 %v2290
    %2330 = vmatprep.subr.bf16.mxu0 0
    %2331 = vmatpush1.bf16.msra.mxu0 %v2289
    %2332 = vmatprep.subr.bf16.mxu0 0
    %2333 = vmatpush1.bf16.msra.mxu0 %v2288
    %2334 = vmatprep.subr.bf16.mxu0 0
    %2335 = vmatpush1.bf16.msra.mxu0 %v2287
    %2336 = vmatprep.subr.bf16.mxu0 0
    %2337 = vmatpush2.bf16.msra.mxu0 0
    %2338 = vmatprep.subr.bf16.mxu0 0
    %2339 = vmatpush2.bf16.msra.mxu0 %v2301
    %2340 = vmatprep.subr.bf16.mxu0 0
    %2341 = vmatpush2.bf16.msra.mxu0 %v2300
    %2342 = vmatprep.subr.bf16.mxu0 0
    %2343 = vmatpush2.bf16.msra.mxu0 %v2299
    %2344 = vmatprep.subr.bf16.mxu0 0
    %2345 = vmatpush2.bf16.msra.mxu0 %v2298
    %2346 = vmatprep.subr.bf16.mxu0 0
    %2347 = vmatpush2.bf16.msra.mxu0 %v2297
    %2348 = vmatprep.subr.bf16.mxu0 0
    %2349 = vmatpush2.bf16.msra.mxu0 %v2296
    %2350 = vmatprep.subr.bf16.mxu0 0
    %2351 = vmatpush2.bf16.msra.mxu0 %v2295
    %2352 = vmatprep.mubr.bf16.mxu0 %v2318
    %2353 = vmatmul.mubr.bf16.gmra.mxu0 %v2224
    %v2354 = vpop.f32.mrf.mxu0
    %v2355 = vadd.f32 0.0, %v2354
    %v2356 = vpop.f32.mrf.mxu0
    %v2357 = vpop.f32.mrf.mxu0
    %v2358 = vpop.f32.mrf.mxu0
    %2359 = vdwg.mxu0
    %v2390 = vunpack.c.l.b16 %v2161
    %v2391 = vunpack.c.l.b16 %v2162
    %v2392 = vunpack.c.l.b16 %v2163
    %v2393 = vunpack.c.l.b16 %v2164
    %v2394 = vunpack.c.l.b16 %v2165
    %v2395 = vunpack.c.l.b16 %v2166
    %v2396 = vunpack.c.l.b16 %v2167
    %v2397 = vunpack.c.l.b16 %v2168
    %v2398 = vunpack.c.l.b16 %v2169
    %v2399 = vunpack.c.l.b16 %v2170
    %v2400 = vunpack.c.l.b16 %v2171
    %v2401 = vunpack.c.l.b16 %v2172
    %v2402 = vunpack.c.l.b16 %v2173
    %v2403 = vunpack.c.l.b16 %v2174
    %v2404 = vunpack.c.l.b16 %v2175
    %v2405 = vunpack.c.l.b16 %v2176
    %v2406 = vunpack.c.l.b16 %v2177
    %v2407 = vunpack.c.l.b16 %v2178
    %v2408 = vunpack.c.l.b16 %v2179
    %v2409 = vunpack.c.l.b16 %v2180
    %v2410 = vunpack.c.l.b16 %v2181
    %v2411 = vunpack.c.l.b16 %v2182
    %v2412 = vunpack.c.l.b16 %v2183
    %v2413 = vunpack.c.l.b16 %v2184
    %v2414 = vunpack.c.l.b16 %v2185
    %v2415 = vunpack.c.l.b16 %v2186
    %v2416 = vunpack.c.l.b16 %v2187
    %v2417 = vunpack.c.l.b16 %v2188
    %v2418 = vunpack.c.l.b16 %v2189
    %v2419 = vunpack.c.l.b16 %v2190
    %v2420 = vpack.c.b16 %v2391, %v2390
    %v2421 = vpack.c.b16 %v2393, %v2392
    %v2422 = vpack.c.b16 %v2395, %v2394
    %v2423 = vpack.c.b16 %v2397, %v2396
    %v2424 = vpack.c.b16 %v2399, %v2398
    %v2425 = vpack.c.b16 %v2401, %v2400
    %v2426 = vpack.c.b16 %v2403, %v2402
    %v2427 = vpack.c.b16 %v2405, %v2404
    %v2428 = vpack.c.b16 %v2407, %v2406
    %v2429 = vpack.c.b16 %v2409, %v2408
    %v2430 = vpack.c.b16 %v2411, %v2410
    %v2431 = vpack.c.b16 %v2413, %v2412
    %v2432 = vpack.c.b16 %v2415, %v2414
    %v2433 = vpack.c.b16 %v2417, %v2416
    %v2434 = vpack.c.b16 %v2419, %v2418
    %v2451 = vsel %vm2141, %v2158, 0
    %2453 = vmatprep.subr.bf16.mxu0 0
    %2454 = vmatpush1.bf16.msra.mxu0 %v2427
    %2455 = vmatprep.subr.bf16.mxu0 0
    %2456 = vmatpush1.bf16.msra.mxu0 %v2426
    %2457 = vmatprep.subr.bf16.mxu0 0
    %2458 = vmatpush1.bf16.msra.mxu0 %v2425
    %2459 = vmatprep.subr.bf16.mxu0 0
    %2460 = vmatpush1.bf16.msra.mxu0 %v2424
    %2461 = vmatprep.subr.bf16.mxu0 0
    %2462 = vmatpush1.bf16.msra.mxu0 %v2423
    %2463 = vmatprep.subr.bf16.mxu0 0
    %2464 = vmatpush1.bf16.msra.mxu0 %v2422
    %2465 = vmatprep.subr.bf16.mxu0 0
    %2466 = vmatpush1.bf16.msra.mxu0 %v2421
    %2467 = vmatprep.subr.bf16.mxu0 0
    %2468 = vmatpush1.bf16.msra.mxu0 %v2420
    %2469 = vmatprep.subr.bf16.mxu0 0
    %2470 = vmatpush2.bf16.msra.mxu0 0
    %2471 = vmatprep.subr.bf16.mxu0 0
    %2472 = vmatpush2.bf16.msra.mxu0 %v2434
    %2473 = vmatprep.subr.bf16.mxu0 0
    %2474 = vmatpush2.bf16.msra.mxu0 %v2433
    %2475 = vmatprep.subr.bf16.mxu0 0
    %2476 = vmatpush2.bf16.msra.mxu0 %v2432
    %2477 = vmatprep.subr.bf16.mxu0 0
    %2478 = vmatpush2.bf16.msra.mxu0 %v2431
    %2479 = vmatprep.subr.bf16.mxu0 0
    %2480 = vmatpush2.bf16.msra.mxu0 %v2430
    %2481 = vmatprep.subr.bf16.mxu0 0
    %2482 = vmatpush2.bf16.msra.mxu0 %v2429
    %2483 = vmatprep.subr.bf16.mxu0 0
    %2484 = vmatpush2.bf16.msra.mxu0 %v2428
    %2485 = vmatprep.mubr.bf16.mxu0 %v2451
    %2486 = vmatmul.mubr.bf16.gmra.mxu0 %v2157
    %v2487 = vpop.f32.mrf.mxu0
    %v2488 = vadd.f32 %v2355, %v2487
    %v2489 = vpop.f32.mrf.mxu0
    %v2490 = vpop.f32.mrf.mxu0
    %v2491 = vpop.f32.mrf.mxu0
    %2492 = vdwg.mxu0
    %s2493 = scalar_lea.vmem %s5, 240
    %v2494 = vld [vmem:[%s2493] sm:$0xf]
    %v2495 = vld [vmem:[%s2493 + $0x4] sm:$0xf]
    %v2496 = vld [vmem:[%s2493 + $0x8] sm:$0xf]
    %v2497 = vld [vmem:[%s2493 + $0xc] sm:$0xf]
    %v2498 = vld [vmem:[%s2493 + $0x10] sm:$0xf]
    %v2499 = vld [vmem:[%s2493 + $0x14] sm:$0xf]
    %v2500 = vld [vmem:[%s2493 + $0x18] sm:$0xf]
    %v2501 = vld [vmem:[%s2493 + $0x1c] sm:$0xf]
    %v2502 = vld [vmem:[%s2493 + $0x20] sm:$0xf]
    %v2503 = vld [vmem:[%s2493 + $0x24] sm:$0xf]
    %v2504 = vld [vmem:[%s2493 + $0x28] sm:$0xf]
    %v2505 = vld [vmem:[%s2493 + $0x2c] sm:$0xf]
    %v2506 = vld [vmem:[%s2493 + $0x30] sm:$0xf]
    %v2507 = vld [vmem:[%s2493 + $0x34] sm:$0xf]
    %v2508 = vld [vmem:[%s2493 + $0x38] sm:$0xf]
    %v2509 = vld [vmem:[%s2493 + $0x3c] sm:$0xf]
    %v2510 = vld [vmem:[%s2493 + $0x40] sm:$0xf]
    %v2511 = vld [vmem:[%s2493 + $0x44] sm:$0xf]
    %v2512 = vld [vmem:[%s2493 + $0x48] sm:$0xf]
    %v2513 = vld [vmem:[%s2493 + $0x4c] sm:$0xf]
    %v2514 = vld [vmem:[%s2493 + $0x50] sm:$0xf]
    %v2515 = vld [vmem:[%s2493 + $0x54] sm:$0xf]
    %v2516 = vld [vmem:[%s2493 + $0x58] sm:$0xf]
    %v2517 = vld [vmem:[%s2493 + $0x5c] sm:$0xf]
    %v2518 = vld [vmem:[%s2493 + $0x60] sm:$0xf]
    %v2519 = vld [vmem:[%s2493 + $0x64] sm:$0xf]
    %v2520 = vld [vmem:[%s2493 + $0x68] sm:$0xf]
    %v2521 = vld [vmem:[%s2493 + $0x6c] sm:$0xf]
    %v2522 = vld [vmem:[%s2493 + $0x70] sm:$0xf]
    %v2523 = vld [vmem:[%s2493 + $0x74] sm:$0xf]
    %v2524 = vrot.slane %v2157, 4
    %v2525 = vrot.slane %v2158, 4
    %v2557 = vunpack.c.l.b16 %v2494
    %v2558 = vunpack.c.l.b16 %v2495
    %v2559 = vunpack.c.l.b16 %v2496
    %v2560 = vunpack.c.l.b16 %v2497
    %v2561 = vunpack.c.l.b16 %v2498
    %v2562 = vunpack.c.l.b16 %v2499
    %v2563 = vunpack.c.l.b16 %v2500
    %v2564 = vunpack.c.l.b16 %v2501
    %v2565 = vunpack.c.l.b16 %v2502
    %v2566 = vunpack.c.l.b16 %v2503
    %v2567 = vunpack.c.l.b16 %v2504
    %v2568 = vunpack.c.l.b16 %v2505
    %v2569 = vunpack.c.l.b16 %v2506
    %v2570 = vunpack.c.l.b16 %v2507
    %v2571 = vunpack.c.l.b16 %v2508
    %v2572 = vunpack.c.l.b16 %v2509
    %v2573 = vunpack.c.l.b16 %v2510
    %v2574 = vunpack.c.l.b16 %v2511
    %v2575 = vunpack.c.l.b16 %v2512
    %v2576 = vunpack.c.l.b16 %v2513
    %v2577 = vunpack.c.l.b16 %v2514
    %v2578 = vunpack.c.l.b16 %v2515
    %v2579 = vunpack.c.l.b16 %v2516
    %v2580 = vunpack.c.l.b16 %v2517
    %v2581 = vunpack.c.l.b16 %v2518
    %v2582 = vunpack.c.l.b16 %v2519
    %v2583 = vunpack.c.l.b16 %v2520
    %v2584 = vunpack.c.l.b16 %v2521
    %v2585 = vunpack.c.l.b16 %v2522
    %v2586 = vunpack.c.l.b16 %v2523
    %v2587 = vpack.c.b16 %v2558, %v2557
    %v2588 = vpack.c.b16 %v2560, %v2559
    %v2589 = vpack.c.b16 %v2562, %v2561
    %v2590 = vpack.c.b16 %v2564, %v2563
    %v2591 = vpack.c.b16 %v2566, %v2565
    %v2592 = vpack.c.b16 %v2568, %v2567
    %v2593 = vpack.c.b16 %v2570, %v2569
    %v2594 = vpack.c.b16 %v2572, %v2571
    %v2595 = vpack.c.b16 %v2574, %v2573
    %v2596 = vpack.c.b16 %v2576, %v2575
    %v2597 = vpack.c.b16 %v2578, %v2577
    %v2598 = vpack.c.b16 %v2580, %v2579
    %v2599 = vpack.c.b16 %v2582, %v2581
    %v2600 = vpack.c.b16 %v2584, %v2583
    %v2601 = vpack.c.b16 %v2586, %v2585
    %v2618 = vsel %vm2141, %v2525, 0
    %2620 = vmatprep.subr.bf16.mxu0 0
    %2621 = vmatpush1.bf16.msra.mxu0 %v2594
    %2622 = vmatprep.subr.bf16.mxu0 0
    %2623 = vmatpush1.bf16.msra.mxu0 %v2593
    %2624 = vmatprep.subr.bf16.mxu0 0
    %2625 = vmatpush1.bf16.msra.mxu0 %v2592
    %2626 = vmatprep.subr.bf16.mxu0 0
    %2627 = vmatpush1.bf16.msra.mxu0 %v2591
    %2628 = vmatprep.subr.bf16.mxu0 0
    %2629 = vmatpush1.bf16.msra.mxu0 %v2590
    %2630 = vmatprep.subr.bf16.mxu0 0
    %2631 = vmatpush1.bf16.msra.mxu0 %v2589
    %2632 = vmatprep.subr.bf16.mxu0 0
    %2633 = vmatpush1.bf16.msra.mxu0 %v2588
    %2634 = vmatprep.subr.bf16.mxu0 0
    %2635 = vmatpush1.bf16.msra.mxu0 %v2587
    %2636 = vmatprep.subr.bf16.mxu0 0
    %2637 = vmatpush2.bf16.msra.mxu0 0
    %2638 = vmatprep.subr.bf16.mxu0 0
    %2639 = vmatpush2.bf16.msra.mxu0 %v2601
    %2640 = vmatprep.subr.bf16.mxu0 0
    %2641 = vmatpush2.bf16.msra.mxu0 %v2600
    %2642 = vmatprep.subr.bf16.mxu0 0
    %2643 = vmatpush2.bf16.msra.mxu0 %v2599
    %2644 = vmatprep.subr.bf16.mxu0 0
    %2645 = vmatpush2.bf16.msra.mxu0 %v2598
    %2646 = vmatprep.subr.bf16.mxu0 0
    %2647 = vmatpush2.bf16.msra.mxu0 %v2597
    %2648 = vmatprep.subr.bf16.mxu0 0
    %2649 = vmatpush2.bf16.msra.mxu0 %v2596
    %2650 = vmatprep.subr.bf16.mxu0 0
    %2651 = vmatpush2.bf16.msra.mxu0 %v2595
    %2652 = vmatprep.mubr.bf16.mxu0 %v2618
    %2653 = vmatmul.mubr.bf16.gmra.mxu0 %v2524
    %v2654 = vpop.f32.mrf.mxu0
    %v2655 = vadd.f32 0.0, %v2654
    %v2656 = vpop.f32.mrf.mxu0
    %v2657 = vpop.f32.mrf.mxu0
    %v2658 = vpop.f32.mrf.mxu0
    %2659 = vdwg.mxu0
    %v2660 = vadd.f32 %v2488, %v2655
    %s2661 = scalar_lea.vmem %s5, 360
    %v2662 = vld [vmem:[%s2661] sm:$0xf]
    %v2663 = vld [vmem:[%s2661 + $0x4] sm:$0xf]
    %v2664 = vld [vmem:[%s2661 + $0x8] sm:$0xf]
    %v2665 = vld [vmem:[%s2661 + $0xc] sm:$0xf]
    %v2666 = vld [vmem:[%s2661 + $0x10] sm:$0xf]
    %v2667 = vld [vmem:[%s2661 + $0x14] sm:$0xf]
    %v2668 = vld [vmem:[%s2661 + $0x18] sm:$0xf]
    %v2669 = vld [vmem:[%s2661 + $0x1c] sm:$0xf]
    %v2670 = vld [vmem:[%s2661 + $0x20] sm:$0xf]
    %v2671 = vld [vmem:[%s2661 + $0x24] sm:$0xf]
    %v2672 = vld [vmem:[%s2661 + $0x28] sm:$0xf]
    %v2673 = vld [vmem:[%s2661 + $0x2c] sm:$0xf]
    %v2674 = vld [vmem:[%s2661 + $0x30] sm:$0xf]
    %v2675 = vld [vmem:[%s2661 + $0x34] sm:$0xf]
    %v2676 = vld [vmem:[%s2661 + $0x38] sm:$0xf]
    %v2677 = vld [vmem:[%s2661 + $0x3c] sm:$0xf]
    %v2678 = vld [vmem:[%s2661 + $0x40] sm:$0xf]
    %v2679 = vld [vmem:[%s2661 + $0x44] sm:$0xf]
    %v2680 = vld [vmem:[%s2661 + $0x48] sm:$0xf]
    %v2681 = vld [vmem:[%s2661 + $0x4c] sm:$0xf]
    %v2682 = vld [vmem:[%s2661 + $0x50] sm:$0xf]
    %v2683 = vld [vmem:[%s2661 + $0x54] sm:$0xf]
    %v2684 = vld [vmem:[%s2661 + $0x58] sm:$0xf]
    %v2685 = vld [vmem:[%s2661 + $0x5c] sm:$0xf]
    %v2686 = vld [vmem:[%s2661 + $0x60] sm:$0xf]
    %v2687 = vld [vmem:[%s2661 + $0x64] sm:$0xf]
    %v2688 = vld [vmem:[%s2661 + $0x68] sm:$0xf]
    %v2689 = vld [vmem:[%s2661 + $0x6c] sm:$0xf]
    %v2690 = vld [vmem:[%s2661 + $0x70] sm:$0xf]
    %v2691 = vld [vmem:[%s2661 + $0x74] sm:$0xf]
    %v2692 = vrot.slane %v2157, 6
    %v2693 = vrot.slane %v2158, 6
    %v2725 = vunpack.c.l.b16 %v2662
    %v2726 = vunpack.c.l.b16 %v2663
    %v2727 = vunpack.c.l.b16 %v2664
    %v2728 = vunpack.c.l.b16 %v2665
    %v2729 = vunpack.c.l.b16 %v2666
    %v2730 = vunpack.c.l.b16 %v2667
    %v2731 = vunpack.c.l.b16 %v2668
    %v2732 = vunpack.c.l.b16 %v2669
    %v2733 = vunpack.c.l.b16 %v2670
    %v2734 = vunpack.c.l.b16 %v2671
    %v2735 = vunpack.c.l.b16 %v2672
    %v2736 = vunpack.c.l.b16 %v2673
    %v2737 = vunpack.c.l.b16 %v2674
    %v2738 = vunpack.c.l.b16 %v2675
    %v2739 = vunpack.c.l.b16 %v2676
    %v2740 = vunpack.c.l.b16 %v2677
    %v2741 = vunpack.c.l.b16 %v2678
    %v2742 = vunpack.c.l.b16 %v2679
    %v2743 = vunpack.c.l.b16 %v2680
    %v2744 = vunpack.c.l.b16 %v2681
    %v2745 = vunpack.c.l.b16 %v2682
    %v2746 = vunpack.c.l.b16 %v2683
    %v2747 = vunpack.c.l.b16 %v2684
    %v2748 = vunpack.c.l.b16 %v2685
    %v2749 = vunpack.c.l.b16 %v2686
    %v2750 = vunpack.c.l.b16 %v2687
    %v2751 = vunpack.c.l.b16 %v2688
    %v2752 = vunpack.c.l.b16 %v2689
    %v2753 = vunpack.c.l.b16 %v2690
    %v2754 = vunpack.c.l.b16 %v2691
    %v2755 = vpack.c.b16 %v2726, %v2725
    %v2756 = vpack.c.b16 %v2728, %v2727
    %v2757 = vpack.c.b16 %v2730, %v2729
    %v2758 = vpack.c.b16 %v2732, %v2731
    %v2759 = vpack.c.b16 %v2734, %v2733
    %v2760 = vpack.c.b16 %v2736, %v2735
    %v2761 = vpack.c.b16 %v2738, %v2737
    %v2762 = vpack.c.b16 %v2740, %v2739
    %v2763 = vpack.c.b16 %v2742, %v2741
    %v2764 = vpack.c.b16 %v2744, %v2743
    %v2765 = vpack.c.b16 %v2746, %v2745
    %v2766 = vpack.c.b16 %v2748, %v2747
    %v2767 = vpack.c.b16 %v2750, %v2749
    %v2768 = vpack.c.b16 %v2752, %v2751
    %v2769 = vpack.c.b16 %v2754, %v2753
    %v2786 = vsel %vm2141, %v2693, 0
    %2788 = vmatprep.subr.bf16.mxu0 0
    %2789 = vmatpush1.bf16.msra.mxu0 %v2762
    %2790 = vmatprep.subr.bf16.mxu0 0
    %2791 = vmatpush1.bf16.msra.mxu0 %v2761
    %2792 = vmatprep.subr.bf16.mxu0 0
    %2793 = vmatpush1.bf16.msra.mxu0 %v2760
    %2794 = vmatprep.subr.bf16.mxu0 0
    %2795 = vmatpush1.bf16.msra.mxu0 %v2759
    %2796 = vmatprep.subr.bf16.mxu0 0
    %2797 = vmatpush1.bf16.msra.mxu0 %v2758
    %2798 = vmatprep.subr.bf16.mxu0 0
    %2799 = vmatpush1.bf16.msra.mxu0 %v2757
    %2800 = vmatprep.subr.bf16.mxu0 0
    %2801 = vmatpush1.bf16.msra.mxu0 %v2756
    %2802 = vmatprep.subr.bf16.mxu0 0
    %2803 = vmatpush1.bf16.msra.mxu0 %v2755
    %2804 = vmatprep.subr.bf16.mxu0 0
    %2805 = vmatpush2.bf16.msra.mxu0 0
    %2806 = vmatprep.subr.bf16.mxu0 0
    %2807 = vmatpush2.bf16.msra.mxu0 %v2769
    %2808 = vmatprep.subr.bf16.mxu0 0
    %2809 = vmatpush2.bf16.msra.mxu0 %v2768
    %2810 = vmatprep.subr.bf16.mxu0 0
    %2811 = vmatpush2.bf16.msra.mxu0 %v2767
    %2812 = vmatprep.subr.bf16.mxu0 0
    %2813 = vmatpush2.bf16.msra.mxu0 %v2766
    %2814 = vmatprep.subr.bf16.mxu0 0
    %2815 = vmatpush2.bf16.msra.mxu0 %v2765
    %2816 = vmatprep.subr.bf16.mxu0 0
    %2817 = vmatpush2.bf16.msra.mxu0 %v2764
    %2818 = vmatprep.subr.bf16.mxu0 0
    %2819 = vmatpush2.bf16.msra.mxu0 %v2763
    %2820 = vmatprep.mubr.bf16.mxu0 %v2786
    %2821 = vmatmul.mubr.bf16.gmra.mxu0 %v2692
    %v2822 = vpop.f32.mrf.mxu0
    %v2823 = vadd.f32 0.0, %v2822
    %v2824 = vpop.f32.mrf.mxu0
    %v2825 = vpop.f32.mrf.mxu0
    %v2826 = vpop.f32.mrf.mxu0
    %2827 = vdwg.mxu0
    %v2828 = vadd.f32 %v2660, %v2823
    %s2829 = scalar_lea.vmem %s5, 480
    %v2830 = vld [vmem:[%s2829] sm:$0xf]
    %v2831 = vld [vmem:[%s2829 + $0x4] sm:$0xf]
    %v2832 = vld [vmem:[%s2829 + $0x8] sm:$0xf]
    %v2833 = vld [vmem:[%s2829 + $0xc] sm:$0xf]
    %v2834 = vld [vmem:[%s2829 + $0x10] sm:$0xf]
    %v2835 = vld [vmem:[%s2829 + $0x14] sm:$0xf]
    %v2836 = vld [vmem:[%s2829 + $0x18] sm:$0xf]
    %v2837 = vld [vmem:[%s2829 + $0x1c] sm:$0xf]
    %v2838 = vld [vmem:[%s2829 + $0x20] sm:$0xf]
    %v2839 = vld [vmem:[%s2829 + $0x24] sm:$0xf]
    %v2840 = vld [vmem:[%s2829 + $0x28] sm:$0xf]
    %v2841 = vld [vmem:[%s2829 + $0x2c] sm:$0xf]
    %v2842 = vld [vmem:[%s2829 + $0x30] sm:$0xf]
    %v2843 = vld [vmem:[%s2829 + $0x34] sm:$0xf]
    %v2844 = vld [vmem:[%s2829 + $0x38] sm:$0xf]
    %v2845 = vld [vmem:[%s2829 + $0x3c] sm:$0xf]
    %v2846 = vld [vmem:[%s2829 + $0x40] sm:$0xf]
    %v2847 = vld [vmem:[%s2829 + $0x44] sm:$0xf]
    %v2848 = vld [vmem:[%s2829 + $0x48] sm:$0xf]
    %v2849 = vld [vmem:[%s2829 + $0x4c] sm:$0xf]
    %v2850 = vld [vmem:[%s2829 + $0x50] sm:$0xf]
    %v2851 = vld [vmem:[%s2829 + $0x54] sm:$0xf]
    %v2852 = vld [vmem:[%s2829 + $0x58] sm:$0xf]
    %v2853 = vld [vmem:[%s2829 + $0x5c] sm:$0xf]
    %v2854 = vld [vmem:[%s2829 + $0x60] sm:$0xf]
    %v2855 = vld [vmem:[%s2829 + $0x64] sm:$0xf]
    %v2856 = vld [vmem:[%s2829 + $0x68] sm:$0xf]
    %v2857 = vld [vmem:[%s2829 + $0x6c] sm:$0xf]
    %v2858 = vld [vmem:[%s2829 + $0x70] sm:$0xf]
    %v2859 = vld [vmem:[%s2829 + $0x74] sm:$0xf]
    %v2890 = vunpack.c.l.b16 %v2830
    %v2891 = vunpack.c.l.b16 %v2831
    %v2892 = vunpack.c.l.b16 %v2832
    %v2893 = vunpack.c.l.b16 %v2833
    %v2894 = vunpack.c.l.b16 %v2834
    %v2895 = vunpack.c.l.b16 %v2835
    %v2896 = vunpack.c.l.b16 %v2836
    %v2897 = vunpack.c.l.b16 %v2837
    %v2898 = vunpack.c.l.b16 %v2838
    %v2899 = vunpack.c.l.b16 %v2839
    %v2900 = vunpack.c.l.b16 %v2840
    %v2901 = vunpack.c.l.b16 %v2841
    %v2902 = vunpack.c.l.b16 %v2842
    %v2903 = vunpack.c.l.b16 %v2843
    %v2904 = vunpack.c.l.b16 %v2844
    %v2905 = vunpack.c.l.b16 %v2845
    %v2906 = vunpack.c.l.b16 %v2846
    %v2907 = vunpack.c.l.b16 %v2847
    %v2908 = vunpack.c.l.b16 %v2848
    %v2909 = vunpack.c.l.b16 %v2849
    %v2910 = vunpack.c.l.b16 %v2850
    %v2911 = vunpack.c.l.b16 %v2851
    %v2912 = vunpack.c.l.b16 %v2852
    %v2913 = vunpack.c.l.b16 %v2853
    %v2914 = vunpack.c.l.b16 %v2854
    %v2915 = vunpack.c.l.b16 %v2855
    %v2916 = vunpack.c.l.b16 %v2856
    %v2917 = vunpack.c.l.b16 %v2857
    %v2918 = vunpack.c.l.b16 %v2858
    %v2919 = vunpack.c.l.b16 %v2859
    %v2920 = vpack.c.b16 %v2891, %v2890
    %v2921 = vpack.c.b16 %v2893, %v2892
    %v2922 = vpack.c.b16 %v2895, %v2894
    %v2923 = vpack.c.b16 %v2897, %v2896
    %v2924 = vpack.c.b16 %v2899, %v2898
    %v2925 = vpack.c.b16 %v2901, %v2900
    %v2926 = vpack.c.b16 %v2903, %v2902
    %v2927 = vpack.c.b16 %v2905, %v2904
    %v2928 = vpack.c.b16 %v2907, %v2906
    %v2929 = vpack.c.b16 %v2909, %v2908
    %v2930 = vpack.c.b16 %v2911, %v2910
    %v2931 = vpack.c.b16 %v2913, %v2912
    %v2932 = vpack.c.b16 %v2915, %v2914
    %v2933 = vpack.c.b16 %v2917, %v2916
    %v2934 = vpack.c.b16 %v2919, %v2918
    %v2951 = vsel %vm2141, %v2160, 0
    %2953 = vmatprep.subr.bf16.mxu0 0
    %2954 = vmatpush1.bf16.msra.mxu0 %v2927
    %2955 = vmatprep.subr.bf16.mxu0 0
    %2956 = vmatpush1.bf16.msra.mxu0 %v2926
    %2957 = vmatprep.subr.bf16.mxu0 0
    %2958 = vmatpush1.bf16.msra.mxu0 %v2925
    %2959 = vmatprep.subr.bf16.mxu0 0
    %2960 = vmatpush1.bf16.msra.mxu0 %v2924
    %2961 = vmatprep.subr.bf16.mxu0 0
    %2962 = vmatpush1.bf16.msra.mxu0 %v2923
    %2963 = vmatprep.subr.bf16.mxu0 0
    %2964 = vmatpush1.bf16.msra.mxu0 %v2922
    %2965 = vmatprep.subr.bf16.mxu0 0
    %2966 = vmatpush1.bf16.msra.mxu0 %v2921
    %2967 = vmatprep.subr.bf16.mxu0 0
    %2968 = vmatpush1.bf16.msra.mxu0 %v2920
    %2969 = vmatprep.subr.bf16.mxu0 0
    %2970 = vmatpush2.bf16.msra.mxu0 0
    %2971 = vmatprep.subr.bf16.mxu0 0
    %2972 = vmatpush2.bf16.msra.mxu0 %v2934
    %2973 = vmatprep.subr.bf16.mxu0 0
    %2974 = vmatpush2.bf16.msra.mxu0 %v2933
    %2975 = vmatprep.subr.bf16.mxu0 0
    %2976 = vmatpush2.bf16.msra.mxu0 %v2932
    %2977 = vmatprep.subr.bf16.mxu0 0
    %2978 = vmatpush2.bf16.msra.mxu0 %v2931
    %2979 = vmatprep.subr.bf16.mxu0 0
    %2980 = vmatpush2.bf16.msra.mxu0 %v2930
    %2981 = vmatprep.subr.bf16.mxu0 0
    %2982 = vmatpush2.bf16.msra.mxu0 %v2929
    %2983 = vmatprep.subr.bf16.mxu0 0
    %2984 = vmatpush2.bf16.msra.mxu0 %v2928
    %2985 = vmatprep.mubr.bf16.mxu0 %v2951
    %2986 = vmatmul.mubr.bf16.gmra.mxu0 %v2159
    %v2987 = vpop.f32.mrf.mxu0
    %v2988 = vadd.f32 0.0, %v2987
    %v2989 = vpop.f32.mrf.mxu0
    %v2990 = vpop.f32.mrf.mxu0
    %v2991 = vpop.f32.mrf.mxu0
    %2992 = vdwg.mxu0
    %v2993 = vadd.f32 %v2828, %v2988
    %v2994 = vld [vmem:[%s6] sm:$0x1]
    %v2995 = vadd.f32 %v2993, %v2994
    %v2996 = vmax.f32 %v2995, 0.0
    %v2997 = vpack.c.bf16 %v2996, %v2996
    %v2998 = vld [vmem:[%s7] sm:$0xf]
    %v2999 = vld [vmem:[%s7 + $0x4] sm:$0xf]
    %v3000 = vld [vmem:[%s7 + $0x8] sm:$0xf]
    %v3001 = vld [vmem:[%s7 + $0xc] sm:$0xf]
    %v3002 = vld [vmem:[%s7 + $0x10] sm:$0xf]
    %v3003 = vld [vmem:[%s7 + $0x14] sm:$0xf]
    %v3004 = vld [vmem:[%s7 + $0x18] sm:$0xf]
    %v3005 = vld [vmem:[%s7 + $0x1c] sm:$0xf]
    %v3006 = vld [vmem:[%s7 + $0x20] sm:$0xf]
    %v3007 = vld [vmem:[%s7 + $0x24] sm:$0xf]
    %v3008 = vld [vmem:[%s7 + $0x28] sm:$0xf]
    %v3009 = vld [vmem:[%s7 + $0x2c] sm:$0xf]
    %v3010 = vld [vmem:[%s7 + $0x30] sm:$0xf]
    %v3011 = vld [vmem:[%s7 + $0x34] sm:$0xf]
    %v3012 = vld [vmem:[%s7 + $0x38] sm:$0xf]
    %v3013 = vld [vmem:[%s8] sm:$0x1]
    %v3029 = vunpack.c.l.b16 %v2998
    %v3030 = vunpack.c.l.b16 %v2999
    %v3031 = vunpack.c.l.b16 %v3000
    %v3032 = vunpack.c.l.b16 %v3001
    %v3033 = vunpack.c.l.b16 %v3002
    %v3034 = vunpack.c.l.b16 %v3003
    %v3035 = vunpack.c.l.b16 %v3004
    %v3036 = vunpack.c.l.b16 %v3005
    %v3037 = vunpack.c.l.b16 %v3006
    %v3038 = vunpack.c.l.b16 %v3007
    %v3039 = vunpack.c.l.b16 %v3008
    %v3040 = vunpack.c.l.b16 %v3009
    %v3041 = vunpack.c.l.b16 %v3010
    %v3042 = vunpack.c.l.b16 %v3011
    %v3043 = vunpack.c.l.b16 %v3012
    %v3044 = vpack.c.b16 %v3030, %v3029
    %v3045 = vpack.c.b16 %v3032, %v3031
    %v3046 = vpack.c.b16 %v3034, %v3033
    %v3047 = vpack.c.b16 %v3036, %v3035
    %v3048 = vpack.c.b16 %v3038, %v3037
    %v3049 = vpack.c.b16 %v3040, %v3039
    %v3050 = vpack.c.b16 %v3042, %v3041
    %v3051 = vpack.c.b16 %v3043, %v3043
    %vm3059 = vcmask 982016
    %v3061 = vsel %vm3059, %v2997, 0
    %vm3063 = vcmask 1043456
    %v3065 = vsel %vm3063, %v3051, 0
    %3067 = vmatprep.subr.bf16.mxu0 0
    %3068 = vmatpush1.bf16.msra.mxu0 %v3065
    %3069 = vmatprep.subr.bf16.mxu0 0
    %3070 = vmatpush1.bf16.msra.mxu0 %v3050
    %3071 = vmatprep.subr.bf16.mxu0 0
    %3072 = vmatpush1.bf16.msra.mxu0 %v3049
    %3073 = vmatprep.subr.bf16.mxu0 0
    %3074 = vmatpush1.bf16.msra.mxu0 %v3048
    %3075 = vmatprep.subr.bf16.mxu0 0
    %3076 = vmatpush1.bf16.msra.mxu0 %v3047
    %3077 = vmatprep.subr.bf16.mxu0 0
    %3078 = vmatpush1.bf16.msra.mxu0 %v3046
    %3079 = vmatprep.subr.bf16.mxu0 0
    %3080 = vmatpush1.bf16.msra.mxu0 %v3045
    %3081 = vmatprep.subr.bf16.mxu0 0
    %3082 = vmatpush1.bf16.msra.mxu0 %v3044
    %3083 = vmatprep.subr.bf16.mxu0 0
    %3084 = vmatpush2.bf16.msra.mxu0 0
    %3085 = vmatprep.subr.bf16.mxu0 0
    %3086 = vmatpush2.bf16.msra.mxu0 0
    %3087 = vmatprep.subr.bf16.mxu0 0
    %3088 = vmatpush2.bf16.msra.mxu0 0
    %3089 = vmatprep.subr.bf16.mxu0 0
    %3090 = vmatpush2.bf16.msra.mxu0 0
    %3091 = vmatprep.subr.bf16.mxu0 0
    %3092 = vmatpush2.bf16.msra.mxu0 0
    %3093 = vmatprep.subr.bf16.mxu0 0
    %3094 = vmatpush2.bf16.msra.mxu0 0
    %3095 = vmatprep.subr.bf16.mxu0 0
    %3096 = vmatpush2.bf16.msra.mxu0 0
    %3097 = vmatprep.subr.bf16.mxu0 0
    %3098 = vmatpush2.bf16.msra.mxu0 0
    %3099 = vmatprep.mubr.bf16.mxu0 0
    %3100 = vmatmul.mubr.bf16.gmra.mxu0 %v3061
    %v3101 = vpop.f32.mrf.mxu0
    %v3102 = vadd.f32 %v3013, %v3101
    %v3103 = vpop.f32.mrf.mxu0
    %v3104 = vpop.f32.mrf.mxu0
    %v3105 = vpop.f32.mrf.mxu0
    %3106 = vdwg.mxu0
    %v3107 = vmax.f32 %v3102, 0.0
    %v3108 = vpack.c.bf16 %v3107, %v3107
    %v3109 = vld [vmem:[%s9] sm:$0xf]
    %v3110 = vld [vmem:[%s9 + $0x4] sm:$0xf]
    %v3111 = vld [vmem:[%s9 + $0x8] sm:$0xf]
    %v3112 = vld [vmem:[%s9 + $0xc] sm:$0xf]
    %v3113 = vld [vmem:[%s9 + $0x10] sm:$0xf]
    %v3114 = vld [vmem:[%s9 + $0x14] sm:$0xf]
    %v3115 = vld [vmem:[%s9 + $0x18] sm:$0xf]
    %v3116 = vld [vmem:[%s9 + $0x1c] sm:$0xf]
    %v3117 = vld [vmem:[%s9 + $0x20] sm:$0xf]
    %v3118 = vld [vmem:[%s9 + $0x24] sm:$0xf]
    %v3119 = vld [vmem:[%s9 + $0x28] sm:$0x3]
    %v3120 = vld [vmem:[%s10] sm:$0x1]
    %v3132 = vunpack.c.l.b16 %v3109
    %v3133 = vunpack.c.l.b16 %v3110
    %v3134 = vunpack.c.l.b16 %v3111
    %v3135 = vunpack.c.l.b16 %v3112
    %v3136 = vunpack.c.l.b16 %v3113
    %v3137 = vunpack.c.l.b16 %v3114
    %v3138 = vunpack.c.l.b16 %v3115
    %v3139 = vunpack.c.l.b16 %v3116
    %v3140 = vunpack.c.l.b16 %v3117
    %v3141 = vunpack.c.l.b16 %v3118
    %v3142 = vunpack.c.l.b16 %v3119
    %v3143 = vpack.c.b16 %v3133, %v3132
    %v3144 = vpack.c.b16 %v3135, %v3134
    %v3145 = vpack.c.b16 %v3137, %v3136
    %v3146 = vpack.c.b16 %v3139, %v3138
    %v3147 = vpack.c.b16 %v3141, %v3140
    %v3148 = vpack.c.b16 %v3142, %v3142
    %vm3154 = vcmask 687104
    %v3156 = vsel %vm3154, %v3108, 0
    %vm3158 = vcmask 1041408
    %v3160 = vsel %vm3158, %v3148, 0
    %3162 = vmatprep.subr.bf16.mxu0 0
    %3163 = vmatpush1.bf16.msra.mxu0 0
    %3164 = vmatprep.subr.bf16.mxu0 0
    %3165 = vmatpush1.bf16.msra.mxu0 0
    %3166 = vmatprep.subr.bf16.mxu0 0
    %3167 = vmatpush1.bf16.msra.mxu0 %v3160
    %3168 = vmatprep.subr.bf16.mxu0 0
    %3169 = vmatpush1.bf16.msra.mxu0 %v3147
    %3170 = vmatprep.subr.bf16.mxu0 0
    %3171 = vmatpush1.bf16.msra.mxu0 %v3146
    %3172 = vmatprep.subr.bf16.mxu0 0
    %3173 = vmatpush1.bf16.msra.mxu0 %v3145
    %3174 = vmatprep.subr.bf16.mxu0 0
    %3175 = vmatpush1.bf16.msra.mxu0 %v3144
    %3176 = vmatprep.subr.bf16.mxu0 0
    %3177 = vmatpush1.bf16.msra.mxu0 %v3143
    %3178 = vmatprep.subr.bf16.mxu0 0
    %3179 = vmatpush2.bf16.msra.mxu0 0
    %3180 = vmatprep.subr.bf16.mxu0 0
    %3181 = vmatpush2.bf16.msra.mxu0 0
    %3182 = vmatprep.subr.bf16.mxu0 0
    %3183 = vmatpush2.bf16.msra.mxu0 0
    %3184 = vmatprep.subr.bf16.mxu0 0
    %3185 = vmatpush2.bf16.msra.mxu0 0
    %3186 = vmatprep.subr.bf16.mxu0 0
    %3187 = vmatpush2.bf16.msra.mxu0 0
    %3188 = vmatprep.subr.bf16.mxu0 0
    %3189 = vmatpush2.bf16.msra.mxu0 0
    %3190 = vmatprep.subr.bf16.mxu0 0
    %3191 = vmatpush2.bf16.msra.mxu0 0
    %3192 = vmatprep.subr.bf16.mxu0 0
    %3193 = vmatpush2.bf16.msra.mxu0 0
    %3194 = vmatprep.mubr.bf16.mxu0 0
    %3195 = vmatmul.mubr.bf16.gmra.mxu0 %v3156
    %v3196 = vpop.f32.mrf.mxu0
    %v3197 = vadd.f32 %v3120, %v3196
    %v3198 = vpop.f32.mrf.mxu0
    %v3199 = vpop.f32.mrf.mxu0
    %v3200 = vpop.f32.mrf.mxu0
    %3201 = vdwg.mxu0
    %vm3202 = vcmask 73728
    %3203 = vst.msk [vmem:[#allocation2] sm:$0x1] %vm3202, %v3197
    %s3204 = scalar_lea.vmem %s0, 20
    %v3205 = vld [vmem:[%s3204] sm:$0xf]
    %v3206 = vld [vmem:[%s3204 + $0x4] sm:$0xf]
    %v3207 = vld [vmem:[%s3204 + $0x8] sm:$0xf]
    %v3208 = vld [vmem:[%s3204 + $0xc] sm:$0xf]
    %v3209 = vld [vmem:[%s3204 + $0x10] sm:$0x3]
    %v3210 = vld [vmem:[%s1] sm:$0xff]
    %v3211 = vld [vmem:[%s1 + $0x8] sm:$0xff]
    %v3212 = vld [vmem:[%s1 + $0x10] sm:$0xff]
    %v3213 = vld [vmem:[%s1 + $0x18] sm:$0xff]
    %v3214 = vld [vmem:[%s1 + $0x20] sm:$0xff]
    %v3215 = vld [vmem:[%s1 + $0x28] sm:$0xff]
    %v3216 = vld [vmem:[%s1 + $0x30] sm:$0xff]
    %v3217 = vld [vmem:[%s1 + $0x38] sm:$0xff]
    %v3218 = vld [vmem:[%s1 + $0x40] sm:$0xff]
    %v3219 = vld [vmem:[%s1 + $0x48] sm:$0xff]
    %v3220 = vld [vmem:[%s1 + $0x50] sm:$0xff]
    %v3221 = vld [vmem:[%s1 + $0x58] sm:$0xff]
    %v3222 = vld [vmem:[%s1 + $0x60] sm:$0xff]
    %v3223 = vld [vmem:[%s1 + $0x68] sm:$0x33]
    %v3224 = vld [vmem:[%s59] sm:$0xff]
    %v3225 = vld [vmem:[%s59 + $0x8] sm:$0xff]
    %v3226 = vld [vmem:[%s59 + $0x10] sm:$0xff]
    %v3227 = vld [vmem:[%s59 + $0x18] sm:$0xff]
    %v3228 = vld [vmem:[%s59 + $0x20] sm:$0xff]
    %v3229 = vld [vmem:[%s59 + $0x28] sm:$0xff]
    %v3230 = vld [vmem:[%s59 + $0x30] sm:$0xff]
    %v3231 = vld [vmem:[%s59 + $0x38] sm:$0xff]
    %v3232 = vld [vmem:[%s59 + $0x40] sm:$0xff]
    %v3233 = vld [vmem:[%s59 + $0x48] sm:$0xff]
    %v3234 = vld [vmem:[%s59 + $0x50] sm:$0xff]
    %v3235 = vld [vmem:[%s59 + $0x58] sm:$0xff]
    %v3236 = vld [vmem:[%s59 + $0x60] sm:$0xff]
    %v3237 = vld [vmem:[%s59 + $0x68] sm:$0x33]
    %v3243 = vunpack.c.l.b16 %v3205
    %v3244 = vunpack.c.l.b16 %v3206
    %v3245 = vunpack.c.l.b16 %v3207
    %v3246 = vunpack.c.l.b16 %v3208
    %v3247 = vunpack.c.l.b16 %v3209
    %v3248 = vpack.c.b16 %v3244, %v3243
    %v3249 = vpack.c.b16 %v3246, %v3245
    %v3250 = vpack.c.b16 %v3247, %v3247
    %v3252 = vshrl.u32 %v3248, 16
    %v3254 = vshll.u32 %v3248, 16
    %v3256 = vrot.slane %v3254, 1
    %v3257 = vor.u32 %v3252, %v3256
    %v3259 = vshll.u32 %v3249, 16
    %v3261 = vrot.slane %v3259, 1
    %v3262 = vsel %vm87, %v3257, %v3261
    %v3263 = vshrl.u32 %v3249, 16
    %v3265 = vor.u32 %v3263, %v3261
    %v3267 = vshll.u32 %v3250, 16
    %v3269 = vrot.slane %v3267, 1
    %v3270 = vsel %vm87, %v3265, %v3269
    %v3285 = vunpack.c.l.b16 %v3224
    %v3286 = vunpack.c.h.b16 %v3224
    %v3287 = vunpack.c.l.b16 %v3225
    %v3288 = vunpack.c.h.b16 %v3225
    %v3289 = vunpack.c.l.b16 %v3226
    %v3290 = vunpack.c.h.b16 %v3226
    %v3291 = vunpack.c.l.b16 %v3227
    %v3292 = vunpack.c.h.b16 %v3227
    %v3293 = vunpack.c.l.b16 %v3228
    %v3294 = vunpack.c.h.b16 %v3228
    %v3295 = vunpack.c.l.b16 %v3229
    %v3296 = vunpack.c.h.b16 %v3229
    %v3297 = vunpack.c.l.b16 %v3230
    %v3298 = vunpack.c.h.b16 %v3230
    %v3299 = vunpack.c.l.b16 %v3231
    %v3300 = vunpack.c.h.b16 %v3231
    %v3301 = vunpack.c.l.b16 %v3232
    %v3302 = vunpack.c.h.b16 %v3232
    %v3303 = vunpack.c.l.b16 %v3233
    %v3304 = vunpack.c.h.b16 %v3233
    %v3305 = vunpack.c.l.b16 %v3234
    %v3306 = vunpack.c.h.b16 %v3234
    %v3307 = vunpack.c.l.b16 %v3235
    %v3308 = vunpack.c.h.b16 %v3235
    %v3309 = vunpack.c.l.b16 %v3236
    %v3310 = vunpack.c.h.b16 %v3236
    %v3311 = vunpack.c.l.b16 %v3237
    %v3312 = vunpack.c.h.b16 %v3237
    %v3313 = vpack.c.b16 %v3287, %v3285
    %v3314 = vpack.c.b16 %v3288, %v3286
    %v3315 = vpack.c.b16 %v3291, %v3289
    %v3316 = vpack.c.b16 %v3292, %v3290
    %v3317 = vpack.c.b16 %v3295, %v3293
    %v3318 = vpack.c.b16 %v3296, %v3294
    %v3319 = vpack.c.b16 %v3299, %v3297
    %v3320 = vpack.c.b16 %v3300, %v3298
    %v3321 = vpack.c.b16 %v3303, %v3301
    %v3322 = vpack.c.b16 %v3304, %v3302
    %v3323 = vpack.c.b16 %v3307, %v3305
    %v3324 = vpack.c.b16 %v3308, %v3306
    %v3325 = vpack.c.b16 %v3311, %v3309
    %v3326 = vpack.c.b16 %v3312, %v3310
    %v3340 = vsel %vm176, %v3262, 0
    %v3343 = vsel %vm176, %v3270, 0
    %v3346 = vsel %vm183, %v3325, 0
    %v3349 = vsel %vm183, %v3326, 0
    %3351 = vmatprep.subr.bf16.mxu0 0
    %3352 = vmatpush1.bf16.msra.mxu0 0
    %3353 = vmatprep.subr.bf16.mxu0 %v3349
    %3354 = vmatpush1.bf16.msra.mxu0 %v3346
    %3355 = vmatprep.subr.bf16.mxu0 %v3324
    %3356 = vmatpush1.bf16.msra.mxu0 %v3323
    %3357 = vmatprep.subr.bf16.mxu0 %v3322
    %3358 = vmatpush1.bf16.msra.mxu0 %v3321
    %3359 = vmatprep.subr.bf16.mxu0 %v3320
    %3360 = vmatpush1.bf16.msra.mxu0 %v3319
    %3361 = vmatprep.subr.bf16.mxu0 %v3318
    %3362 = vmatpush1.bf16.msra.mxu0 %v3317
    %3363 = vmatprep.subr.bf16.mxu0 %v3316
    %3364 = vmatpush1.bf16.msra.mxu0 %v3315
    %3365 = vmatprep.subr.bf16.mxu0 %v3314
    %3366 = vmatpush1.bf16.msra.mxu0 %v3313
    %3367 = vmatprep.subr.bf16.mxu0 0
    %3368 = vmatpush2.bf16.msra.mxu0 0
    %3369 = vmatprep.subr.bf16.mxu0 0
    %3370 = vmatpush2.bf16.msra.mxu0 0
    %3371 = vmatprep.subr.bf16.mxu0 0
    %3372 = vmatpush2.bf16.msra.mxu0 0
    %3373 = vmatprep.subr.bf16.mxu0 0
    %3374 = vmatpush2.bf16.msra.mxu0 0
    %3375 = vmatprep.subr.bf16.mxu0 0
    %3376 = vmatpush2.bf16.msra.mxu0 0
    %3377 = vmatprep.subr.bf16.mxu0 0
    %3378 = vmatpush2.bf16.msra.mxu0 0
    %3379 = vmatprep.subr.bf16.mxu0 0
    %3380 = vmatpush2.bf16.msra.mxu0 0
    %3381 = vmatprep.subr.bf16.mxu0 0
    %3382 = vmatpush2.bf16.msra.mxu0 0
    %3383 = vmatprep.mubr.bf16.mxu0 0
    %3384 = vmatmul.mubr.bf16.gmra.mxu0 %v3340
    %v3385 = vpop.f32.mrf.mxu0
    %v3386 = vadd.f32 0.0, %v3385
    %v3387 = vpop.f32.mrf.mxu0
    %v3388 = vadd.f32 0.0, %v3387
    %v3389 = vpop.f32.mrf.mxu0
    %v3390 = vadd.f32 0.0, %v3389
    %v3391 = vpop.f32.mrf.mxu0
    %v3392 = vadd.f32 0.0, %v3391
    %3393 = vmatprep.mubr.bf16.mxu0 0
    %3394 = vmatmul.mubr.bf16.gmra.mxu0 %v3343
    %v3395 = vpop.f32.mrf.mxu0
    %v3396 = vadd.f32 0.0, %v3395
    %v3397 = vpop.f32.mrf.mxu0
    %v3398 = vadd.f32 0.0, %v3397
    %v3399 = vpop.f32.mrf.mxu0
    %v3400 = vadd.f32 0.0, %v3399
    %v3401 = vpop.f32.mrf.mxu0
    %v3402 = vadd.f32 0.0, %v3401
    %3403 = vdwg.mxu0
    %v3418 = vunpack.c.l.b16 %v3210
    %v3419 = vunpack.c.h.b16 %v3210
    %v3420 = vunpack.c.l.b16 %v3211
    %v3421 = vunpack.c.h.b16 %v3211
    %v3422 = vunpack.c.l.b16 %v3212
    %v3423 = vunpack.c.h.b16 %v3212
    %v3424 = vunpack.c.l.b16 %v3213
    %v3425 = vunpack.c.h.b16 %v3213
    %v3426 = vunpack.c.l.b16 %v3214
    %v3427 = vunpack.c.h.b16 %v3214
    %v3428 = vunpack.c.l.b16 %v3215
    %v3429 = vunpack.c.h.b16 %v3215
    %v3430 = vunpack.c.l.b16 %v3216
    %v3431 = vunpack.c.h.b16 %v3216
    %v3432 = vunpack.c.l.b16 %v3217
    %v3433 = vunpack.c.h.b16 %v3217
    %v3434 = vunpack.c.l.b16 %v3218
    %v3435 = vunpack.c.h.b16 %v3218
    %v3436 = vunpack.c.l.b16 %v3219
    %v3437 = vunpack.c.h.b16 %v3219
    %v3438 = vunpack.c.l.b16 %v3220
    %v3439 = vunpack.c.h.b16 %v3220
    %v3440 = vunpack.c.l.b16 %v3221
    %v3441 = vunpack.c.h.b16 %v3221
    %v3442 = vunpack.c.l.b16 %v3222
    %v3443 = vunpack.c.h.b16 %v3222
    %v3444 = vunpack.c.l.b16 %v3223
    %v3445 = vunpack.c.h.b16 %v3223
    %v3446 = vpack.c.b16 %v3420, %v3418
    %v3447 = vpack.c.b16 %v3421, %v3419
    %v3448 = vpack.c.b16 %v3424, %v3422
    %v3449 = vpack.c.b16 %v3425, %v3423
    %v3450 = vpack.c.b16 %v3428, %v3426
    %v3451 = vpack.c.b16 %v3429, %v3427
    %v3452 = vpack.c.b16 %v3432, %v3430
    %v3453 = vpack.c.b16 %v3433, %v3431
    %v3454 = vpack.c.b16 %v3436, %v3434
    %v3455 = vpack.c.b16 %v3437, %v3435
    %v3456 = vpack.c.b16 %v3440, %v3438
    %v3457 = vpack.c.b16 %v3441, %v3439
    %v3458 = vpack.c.b16 %v3444, %v3442
    %v3459 = vpack.c.b16 %v3445, %v3443
    %v3472 = vsel %vm176, %v3248, 0
    %v3474 = vsel %vm176, %v3249, 0
    %v3477 = vsel %vm183, %v3458, 0
    %v3480 = vsel %vm183, %v3459, 0
    %3482 = vmatprep.subr.bf16.mxu0 0
    %3483 = vmatpush1.bf16.msra.mxu0 0
    %3484 = vmatprep.subr.bf16.mxu0 %v3480
    %3485 = vmatpush1.bf16.msra.mxu0 %v3477
    %3486 = vmatprep.subr.bf16.mxu0 %v3457
    %3487 = vmatpush1.bf16.msra.mxu0 %v3456
    %3488 = vmatprep.subr.bf16.mxu0 %v3455
    %3489 = vmatpush1.bf16.msra.mxu0 %v3454
    %3490 = vmatprep.subr.bf16.mxu0 %v3453
    %3491 = vmatpush1.bf16.msra.mxu0 %v3452
    %3492 = vmatprep.subr.bf16.mxu0 %v3451
    %3493 = vmatpush1.bf16.msra.mxu0 %v3450
    %3494 = vmatprep.subr.bf16.mxu0 %v3449
    %3495 = vmatpush1.bf16.msra.mxu0 %v3448
    %3496 = vmatprep.subr.bf16.mxu0 %v3447
    %3497 = vmatpush1.bf16.msra.mxu0 %v3446
    %3498 = vmatprep.subr.bf16.mxu0 0
    %3499 = vmatpush2.bf16.msra.mxu0 0
    %3500 = vmatprep.subr.bf16.mxu0 0
    %3501 = vmatpush2.bf16.msra.mxu0 0
    %3502 = vmatprep.subr.bf16.mxu0 0
    %3503 = vmatpush2.bf16.msra.mxu0 0
    %3504 = vmatprep.subr.bf16.mxu0 0
    %3505 = vmatpush2.bf16.msra.mxu0 0
    %3506 = vmatprep.subr.bf16.mxu0 0
    %3507 = vmatpush2.bf16.msra.mxu0 0
    %3508 = vmatprep.subr.bf16.mxu0 0
    %3509 = vmatpush2.bf16.msra.mxu0 0
    %3510 = vmatprep.subr.bf16.mxu0 0
    %3511 = vmatpush2.bf16.msra.mxu0 0
    %3512 = vmatprep.subr.bf16.mxu0 0
    %3513 = vmatpush2.bf16.msra.mxu0 0
    %3514 = vmatprep.mubr.bf16.mxu0 0
    %3515 = vmatmul.mubr.bf16.gmra.mxu0 %v3472
    %v3516 = vpop.f32.mrf.mxu0
    %v3517 = vadd.f32 %v3386, %v3516
    %v3518 = vpop.f32.mrf.mxu0
    %v3519 = vadd.f32 %v3388, %v3518
    %v3520 = vpop.f32.mrf.mxu0
    %v3521 = vadd.f32 %v3390, %v3520
    %v3522 = vpop.f32.mrf.mxu0
    %v3523 = vadd.f32 %v3392, %v3522
    %3524 = vmatprep.mubr.bf16.mxu0 0
    %3525 = vmatmul.mubr.bf16.gmra.mxu0 %v3474
    %v3526 = vpop.f32.mrf.mxu0
    %v3527 = vadd.f32 %v3396, %v3526
    %v3528 = vpop.f32.mrf.mxu0
    %v3529 = vadd.f32 %v3398, %v3528
    %v3530 = vpop.f32.mrf.mxu0
    %v3531 = vadd.f32 %v3400, %v3530
    %v3532 = vpop.f32.mrf.mxu0
    %v3533 = vadd.f32 %v3402, %v3532
    %3534 = vdwg.mxu0
    %v3535 = vld [vmem:[%s374] sm:$0xff]
    %v3536 = vld [vmem:[%s374 + $0x8] sm:$0xff]
    %v3537 = vld [vmem:[%s374 + $0x10] sm:$0xff]
    %v3538 = vld [vmem:[%s374 + $0x18] sm:$0xff]
    %v3539 = vld [vmem:[%s374 + $0x20] sm:$0xff]
    %v3540 = vld [vmem:[%s374 + $0x28] sm:$0xff]
    %v3541 = vld [vmem:[%s374 + $0x30] sm:$0xff]
    %v3542 = vld [vmem:[%s374 + $0x38] sm:$0xff]
    %v3543 = vld [vmem:[%s374 + $0x40] sm:$0xff]
    %v3544 = vld [vmem:[%s374 + $0x48] sm:$0xff]
    %v3545 = vld [vmem:[%s374 + $0x50] sm:$0xff]
    %v3546 = vld [vmem:[%s374 + $0x58] sm:$0xff]
    %v3547 = vld [vmem:[%s374 + $0x60] sm:$0xff]
    %v3548 = vld [vmem:[%s374 + $0x68] sm:$0x33]
    %v3549 = vrot.slane %v3248, 1
    %v3550 = vrot.slane %v3249, 1
    %v3551 = vsel %vm389, %v3549, %v3550
    %v3552 = vrot.slane %v3250, 1
    %v3553 = vsel %vm389, %v3550, %v3552
    %v3568 = vunpack.c.l.b16 %v3535
    %v3569 = vunpack.c.h.b16 %v3535
    %v3570 = vunpack.c.l.b16 %v3536
    %v3571 = vunpack.c.h.b16 %v3536
    %v3572 = vunpack.c.l.b16 %v3537
    %v3573 = vunpack.c.h.b16 %v3537
    %v3574 = vunpack.c.l.b16 %v3538
    %v3575 = vunpack.c.h.b16 %v3538
    %v3576 = vunpack.c.l.b16 %v3539
    %v3577 = vunpack.c.h.b16 %v3539
    %v3578 = vunpack.c.l.b16 %v3540
    %v3579 = vunpack.c.h.b16 %v3540
    %v3580 = vunpack.c.l.b16 %v3541
    %v3581 = vunpack.c.h.b16 %v3541
    %v3582 = vunpack.c.l.b16 %v3542
    %v3583 = vunpack.c.h.b16 %v3542
    %v3584 = vunpack.c.l.b16 %v3543
    %v3585 = vunpack.c.h.b16 %v3543
    %v3586 = vunpack.c.l.b16 %v3544
    %v3587 = vunpack.c.h.b16 %v3544
    %v3588 = vunpack.c.l.b16 %v3545
    %v3589 = vunpack.c.h.b16 %v3545
    %v3590 = vunpack.c.l.b16 %v3546
    %v3591 = vunpack.c.h.b16 %v3546
    %v3592 = vunpack.c.l.b16 %v3547
    %v3593 = vunpack.c.h.b16 %v3547
    %v3594 = vunpack.c.l.b16 %v3548
    %v3595 = vunpack.c.h.b16 %v3548
    %v3596 = vpack.c.b16 %v3570, %v3568
    %v3597 = vpack.c.b16 %v3571, %v3569
    %v3598 = vpack.c.b16 %v3574, %v3572
    %v3599 = vpack.c.b16 %v3575, %v3573
    %v3600 = vpack.c.b16 %v3578, %v3576
    %v3601 = vpack.c.b16 %v3579, %v3577
    %v3602 = vpack.c.b16 %v3582, %v3580
    %v3603 = vpack.c.b16 %v3583, %v3581
    %v3604 = vpack.c.b16 %v3586, %v3584
    %v3605 = vpack.c.b16 %v3587, %v3585
    %v3606 = vpack.c.b16 %v3590, %v3588
    %v3607 = vpack.c.b16 %v3591, %v3589
    %v3608 = vpack.c.b16 %v3594, %v3592
    %v3609 = vpack.c.b16 %v3595, %v3593
    %v3623 = vsel %vm176, %v3551, 0
    %v3626 = vsel %vm176, %v3553, 0
    %v3629 = vsel %vm183, %v3608, 0
    %v3632 = vsel %vm183, %v3609, 0
    %3634 = vmatprep.subr.bf16.mxu0 0
    %3635 = vmatpush1.bf16.msra.mxu0 0
    %3636 = vmatprep.subr.bf16.mxu0 %v3632
    %3637 = vmatpush1.bf16.msra.mxu0 %v3629
    %3638 = vmatprep.subr.bf16.mxu0 %v3607
    %3639 = vmatpush1.bf16.msra.mxu0 %v3606
    %3640 = vmatprep.subr.bf16.mxu0 %v3605
    %3641 = vmatpush1.bf16.msra.mxu0 %v3604
    %3642 = vmatprep.subr.bf16.mxu0 %v3603
    %3643 = vmatpush1.bf16.msra.mxu0 %v3602
    %3644 = vmatprep.subr.bf16.mxu0 %v3601
    %3645 = vmatpush1.bf16.msra.mxu0 %v3600
    %3646 = vmatprep.subr.bf16.mxu0 %v3599
    %3647 = vmatpush1.bf16.msra.mxu0 %v3598
    %3648 = vmatprep.subr.bf16.mxu0 %v3597
    %3649 = vmatpush1.bf16.msra.mxu0 %v3596
    %3650 = vmatprep.subr.bf16.mxu0 0
    %3651 = vmatpush2.bf16.msra.mxu0 0
    %3652 = vmatprep.subr.bf16.mxu0 0
    %3653 = vmatpush2.bf16.msra.mxu0 0
    %3654 = vmatprep.subr.bf16.mxu0 0
    %3655 = vmatpush2.bf16.msra.mxu0 0
    %3656 = vmatprep.subr.bf16.mxu0 0
    %3657 = vmatpush2.bf16.msra.mxu0 0
    %3658 = vmatprep.subr.bf16.mxu0 0
    %3659 = vmatpush2.bf16.msra.mxu0 0
    %3660 = vmatprep.subr.bf16.mxu0 0
    %3661 = vmatpush2.bf16.msra.mxu0 0
    %3662 = vmatprep.subr.bf16.mxu0 0
    %3663 = vmatpush2.bf16.msra.mxu0 0
    %3664 = vmatprep.subr.bf16.mxu0 0
    %3665 = vmatpush2.bf16.msra.mxu0 0
    %3666 = vmatprep.mubr.bf16.mxu0 0
    %3667 = vmatmul.mubr.bf16.gmra.mxu0 %v3623
    %v3668 = vpop.f32.mrf.mxu0
    %v3669 = vadd.f32 0.0, %v3668
    %v3670 = vpop.f32.mrf.mxu0
    %v3671 = vadd.f32 0.0, %v3670
    %v3672 = vpop.f32.mrf.mxu0
    %v3673 = vadd.f32 0.0, %v3672
    %v3674 = vpop.f32.mrf.mxu0
    %v3675 = vadd.f32 0.0, %v3674
    %3676 = vmatprep.mubr.bf16.mxu0 0
    %3677 = vmatmul.mubr.bf16.gmra.mxu0 %v3626
    %v3678 = vpop.f32.mrf.mxu0
    %v3679 = vadd.f32 0.0, %v3678
    %v3680 = vpop.f32.mrf.mxu0
    %v3681 = vadd.f32 0.0, %v3680
    %v3682 = vpop.f32.mrf.mxu0
    %v3683 = vadd.f32 0.0, %v3682
    %v3684 = vpop.f32.mrf.mxu0
    %v3685 = vadd.f32 0.0, %v3684
    %3686 = vdwg.mxu0
    %v3687 = vadd.f32 %v3517, %v3669
    %v3688 = vadd.f32 %v3519, %v3671
    %v3689 = vadd.f32 %v3521, %v3673
    %v3690 = vadd.f32 %v3523, %v3675
    %v3691 = vadd.f32 %v3527, %v3679
    %v3692 = vadd.f32 %v3529, %v3681
    %v3693 = vadd.f32 %v3531, %v3683
    %v3694 = vadd.f32 %v3533, %v3685
    %v3695 = vld [vmem:[%s536] sm:$0xff]
    %v3696 = vld [vmem:[%s536 + $0x8] sm:$0xff]
    %v3697 = vld [vmem:[%s536 + $0x10] sm:$0xff]
    %v3698 = vld [vmem:[%s536 + $0x18] sm:$0xff]
    %v3699 = vld [vmem:[%s536 + $0x20] sm:$0xff]
    %v3700 = vld [vmem:[%s536 + $0x28] sm:$0xff]
    %v3701 = vld [vmem:[%s536 + $0x30] sm:$0xff]
    %v3702 = vld [vmem:[%s536 + $0x38] sm:$0xff]
    %v3703 = vld [vmem:[%s536 + $0x40] sm:$0xff]
    %v3704 = vld [vmem:[%s536 + $0x48] sm:$0xff]
    %v3705 = vld [vmem:[%s536 + $0x50] sm:$0xff]
    %v3706 = vld [vmem:[%s536 + $0x58] sm:$0xff]
    %v3707 = vld [vmem:[%s536 + $0x60] sm:$0xff]
    %v3708 = vld [vmem:[%s536 + $0x68] sm:$0x33]
    %v3709 = vrot.slane %v3252, 1
    %v3710 = vrot.slane %v3254, 2
    %v3711 = vor.u32 %v3709, %v3710
    %v3712 = vrot.slane %v3263, 1
    %v3713 = vrot.slane %v3259, 2
    %v3714 = vor.u32 %v3712, %v3713
    %v3715 = vsel %vm551, %v3711, %v3714
    %v3716 = vshrl.u32 %v3250, 16
    %v3718 = vrot.slane %v3716, 1
    %v3719 = vrot.slane %v3267, 2
    %v3720 = vor.u32 %v3718, %v3719
    %v3721 = vsel %vm551, %v3714, %v3720
    %v3736 = vunpack.c.l.b16 %v3695
    %v3737 = vunpack.c.h.b16 %v3695
    %v3738 = vunpack.c.l.b16 %v3696
    %v3739 = vunpack.c.h.b16 %v3696
    %v3740 = vunpack.c.l.b16 %v3697
    %v3741 = vunpack.c.h.b16 %v3697
    %v3742 = vunpack.c.l.b16 %v3698
    %v3743 = vunpack.c.h.b16 %v3698
    %v3744 = vunpack.c.l.b16 %v3699
    %v3745 = vunpack.c.h.b16 %v3699
    %v3746 = vunpack.c.l.b16 %v3700
    %v3747 = vunpack.c.h.b16 %v3700
    %v3748 = vunpack.c.l.b16 %v3701
    %v3749 = vunpack.c.h.b16 %v3701
    %v3750 = vunpack.c.l.b16 %v3702
    %v3751 = vunpack.c.h.b16 %v3702
    %v3752 = vunpack.c.l.b16 %v3703
    %v3753 = vunpack.c.h.b16 %v3703
    %v3754 = vunpack.c.l.b16 %v3704
    %v3755 = vunpack.c.h.b16 %v3704
    %v3756 = vunpack.c.l.b16 %v3705
    %v3757 = vunpack.c.h.b16 %v3705
    %v3758 = vunpack.c.l.b16 %v3706
    %v3759 = vunpack.c.h.b16 %v3706
    %v3760 = vunpack.c.l.b16 %v3707
    %v3761 = vunpack.c.h.b16 %v3707
    %v3762 = vunpack.c.l.b16 %v3708
    %v3763 = vunpack.c.h.b16 %v3708
    %v3764 = vpack.c.b16 %v3738, %v3736
    %v3765 = vpack.c.b16 %v3739, %v3737
    %v3766 = vpack.c.b16 %v3742, %v3740
    %v3767 = vpack.c.b16 %v3743, %v3741
    %v3768 = vpack.c.b16 %v3746, %v3744
    %v3769 = vpack.c.b16 %v3747, %v3745
    %v3770 = vpack.c.b16 %v3750, %v3748
    %v3771 = vpack.c.b16 %v3751, %v3749
    %v3772 = vpack.c.b16 %v3754, %v3752
    %v3773 = vpack.c.b16 %v3755, %v3753
    %v3774 = vpack.c.b16 %v3758, %v3756
    %v3775 = vpack.c.b16 %v3759, %v3757
    %v3776 = vpack.c.b16 %v3762, %v3760
    %v3777 = vpack.c.b16 %v3763, %v3761
    %v3791 = vsel %vm176, %v3715, 0
    %v3794 = vsel %vm176, %v3721, 0
    %v3797 = vsel %vm183, %v3776, 0
    %v3800 = vsel %vm183, %v3777, 0
    %3802 = vmatprep.subr.bf16.mxu0 0
    %3803 = vmatpush1.bf16.msra.mxu0 0
    %3804 = vmatprep.subr.bf16.mxu0 %v3800
    %3805 = vmatpush1.bf16.msra.mxu0 %v3797
    %3806 = vmatprep.subr.bf16.mxu0 %v3775
    %3807 = vmatpush1.bf16.msra.mxu0 %v3774
    %3808 = vmatprep.subr.bf16.mxu0 %v3773
    %3809 = vmatpush1.bf16.msra.mxu0 %v3772
    %3810 = vmatprep.subr.bf16.mxu0 %v3771
    %3811 = vmatpush1.bf16.msra.mxu0 %v3770
    %3812 = vmatprep.subr.bf16.mxu0 %v3769
    %3813 = vmatpush1.bf16.msra.mxu0 %v3768
    %3814 = vmatprep.subr.bf16.mxu0 %v3767
    %3815 = vmatpush1.bf16.msra.mxu0 %v3766
    %3816 = vmatprep.subr.bf16.mxu0 %v3765
    %3817 = vmatpush1.bf16.msra.mxu0 %v3764
    %3818 = vmatprep.subr.bf16.mxu0 0
    %3819 = vmatpush2.bf16.msra.mxu0 0
    %3820 = vmatprep.subr.bf16.mxu0 0
    %3821 = vmatpush2.bf16.msra.mxu0 0
    %3822 = vmatprep.subr.bf16.mxu0 0
    %3823 = vmatpush2.bf16.msra.mxu0 0
    %3824 = vmatprep.subr.bf16.mxu0 0
    %3825 = vmatpush2.bf16.msra.mxu0 0
    %3826 = vmatprep.subr.bf16.mxu0 0
    %3827 = vmatpush2.bf16.msra.mxu0 0
    %3828 = vmatprep.subr.bf16.mxu0 0
    %3829 = vmatpush2.bf16.msra.mxu0 0
    %3830 = vmatprep.subr.bf16.mxu0 0
    %3831 = vmatpush2.bf16.msra.mxu0 0
    %3832 = vmatprep.subr.bf16.mxu0 0
    %3833 = vmatpush2.bf16.msra.mxu0 0
    %3834 = vmatprep.mubr.bf16.mxu0 0
    %3835 = vmatmul.mubr.bf16.gmra.mxu0 %v3791
    %v3836 = vpop.f32.mrf.mxu0
    %v3837 = vadd.f32 0.0, %v3836
    %v3838 = vpop.f32.mrf.mxu0
    %v3839 = vadd.f32 0.0, %v3838
    %v3840 = vpop.f32.mrf.mxu0
    %v3841 = vadd.f32 0.0, %v3840
    %v3842 = vpop.f32.mrf.mxu0
    %v3843 = vadd.f32 0.0, %v3842
    %3844 = vmatprep.mubr.bf16.mxu0 0
    %3845 = vmatmul.mubr.bf16.gmra.mxu0 %v3794
    %v3846 = vpop.f32.mrf.mxu0
    %v3847 = vadd.f32 0.0, %v3846
    %v3848 = vpop.f32.mrf.mxu0
    %v3849 = vadd.f32 0.0, %v3848
    %v3850 = vpop.f32.mrf.mxu0
    %v3851 = vadd.f32 0.0, %v3850
    %v3852 = vpop.f32.mrf.mxu0
    %v3853 = vadd.f32 0.0, %v3852
    %3854 = vdwg.mxu0
    %v3855 = vadd.f32 %v3687, %v3837
    %v3856 = vadd.f32 %v3688, %v3839
    %v3857 = vadd.f32 %v3689, %v3841
    %v3858 = vadd.f32 %v3690, %v3843
    %v3859 = vadd.f32 %v3691, %v3847
    %v3860 = vadd.f32 %v3692, %v3849
    %v3861 = vadd.f32 %v3693, %v3851
    %v3862 = vadd.f32 %v3694, %v3853
    %v3863 = vld [vmem:[%s706] sm:$0xff]
    %v3864 = vld [vmem:[%s706 + $0x8] sm:$0xff]
    %v3865 = vld [vmem:[%s706 + $0x10] sm:$0xff]
    %v3866 = vld [vmem:[%s706 + $0x18] sm:$0xff]
    %v3867 = vld [vmem:[%s706 + $0x20] sm:$0xff]
    %v3868 = vld [vmem:[%s706 + $0x28] sm:$0xff]
    %v3869 = vld [vmem:[%s706 + $0x30] sm:$0xff]
    %v3870 = vld [vmem:[%s706 + $0x38] sm:$0xff]
    %v3871 = vld [vmem:[%s706 + $0x40] sm:$0xff]
    %v3872 = vld [vmem:[%s706 + $0x48] sm:$0xff]
    %v3873 = vld [vmem:[%s706 + $0x50] sm:$0xff]
    %v3874 = vld [vmem:[%s706 + $0x58] sm:$0xff]
    %v3875 = vld [vmem:[%s706 + $0x60] sm:$0xff]
    %v3876 = vld [vmem:[%s706 + $0x68] sm:$0x33]
    %v3877 = vrot.slane %v3248, 2
    %v3878 = vrot.slane %v3249, 2
    %v3879 = vsel %vm721, %v3877, %v3878
    %v3880 = vrot.slane %v3250, 2
    %v3881 = vsel %vm721, %v3878, %v3880
    %v3896 = vunpack.c.l.b16 %v3863
    %v3897 = vunpack.c.h.b16 %v3863
    %v3898 = vunpack.c.l.b16 %v3864
    %v3899 = vunpack.c.h.b16 %v3864
    %v3900 = vunpack.c.l.b16 %v3865
    %v3901 = vunpack.c.h.b16 %v3865
    %v3902 = vunpack.c.l.b16 %v3866
    %v3903 = vunpack.c.h.b16 %v3866
    %v3904 = vunpack.c.l.b16 %v3867
    %v3905 = vunpack.c.h.b16 %v3867
    %v3906 = vunpack.c.l.b16 %v3868
    %v3907 = vunpack.c.h.b16 %v3868
    %v3908 = vunpack.c.l.b16 %v3869
    %v3909 = vunpack.c.h.b16 %v3869
    %v3910 = vunpack.c.l.b16 %v3870
    %v3911 = vunpack.c.h.b16 %v3870
    %v3912 = vunpack.c.l.b16 %v3871
    %v3913 = vunpack.c.h.b16 %v3871
    %v3914 = vunpack.c.l.b16 %v3872
    %v3915 = vunpack.c.h.b16 %v3872
    %v3916 = vunpack.c.l.b16 %v3873
    %v3917 = vunpack.c.h.b16 %v3873
    %v3918 = vunpack.c.l.b16 %v3874
    %v3919 = vunpack.c.h.b16 %v3874
    %v3920 = vunpack.c.l.b16 %v3875
    %v3921 = vunpack.c.h.b16 %v3875
    %v3922 = vunpack.c.l.b16 %v3876
    %v3923 = vunpack.c.h.b16 %v3876
    %v3924 = vpack.c.b16 %v3898, %v3896
    %v3925 = vpack.c.b16 %v3899, %v3897
    %v3926 = vpack.c.b16 %v3902, %v3900
    %v3927 = vpack.c.b16 %v3903, %v3901
    %v3928 = vpack.c.b16 %v3906, %v3904
    %v3929 = vpack.c.b16 %v3907, %v3905
    %v3930 = vpack.c.b16 %v3910, %v3908
    %v3931 = vpack.c.b16 %v3911, %v3909
    %v3932 = vpack.c.b16 %v3914, %v3912
    %v3933 = vpack.c.b16 %v3915, %v3913
    %v3934 = vpack.c.b16 %v3918, %v3916
    %v3935 = vpack.c.b16 %v3919, %v3917
    %v3936 = vpack.c.b16 %v3922, %v3920
    %v3937 = vpack.c.b16 %v3923, %v3921
    %v3951 = vsel %vm176, %v3879, 0
    %v3954 = vsel %vm176, %v3881, 0
    %v3957 = vsel %vm183, %v3936, 0
    %v3960 = vsel %vm183, %v3937, 0
    %3962 = vmatprep.subr.bf16.mxu0 0
    %3963 = vmatpush1.bf16.msra.mxu0 0
    %3964 = vmatprep.subr.bf16.mxu0 %v3960
    %3965 = vmatpush1.bf16.msra.mxu0 %v3957
    %3966 = vmatprep.subr.bf16.mxu0 %v3935
    %3967 = vmatpush1.bf16.msra.mxu0 %v3934
    %3968 = vmatprep.subr.bf16.mxu0 %v3933
    %3969 = vmatpush1.bf16.msra.mxu0 %v3932
    %3970 = vmatprep.subr.bf16.mxu0 %v3931
    %3971 = vmatpush1.bf16.msra.mxu0 %v3930
    %3972 = vmatprep.subr.bf16.mxu0 %v3929
    %3973 = vmatpush1.bf16.msra.mxu0 %v3928
    %3974 = vmatprep.subr.bf16.mxu0 %v3927
    %3975 = vmatpush1.bf16.msra.mxu0 %v3926
    %3976 = vmatprep.subr.bf16.mxu0 %v3925
    %3977 = vmatpush1.bf16.msra.mxu0 %v3924
    %3978 = vmatprep.subr.bf16.mxu0 0
    %3979 = vmatpush2.bf16.msra.mxu0 0
    %3980 = vmatprep.subr.bf16.mxu0 0
    %3981 = vmatpush2.bf16.msra.mxu0 0
    %3982 = vmatprep.subr.bf16.mxu0 0
    %3983 = vmatpush2.bf16.msra.mxu0 0
    %3984 = vmatprep.subr.bf16.mxu0 0
    %3985 = vmatpush2.bf16.msra.mxu0 0
    %3986 = vmatprep.subr.bf16.mxu0 0
    %3987 = vmatpush2.bf16.msra.mxu0 0
    %3988 = vmatprep.subr.bf16.mxu0 0
    %3989 = vmatpush2.bf16.msra.mxu0 0
    %3990 = vmatprep.subr.bf16.mxu0 0
    %3991 = vmatpush2.bf16.msra.mxu0 0
    %3992 = vmatprep.subr.bf16.mxu0 0
    %3993 = vmatpush2.bf16.msra.mxu0 0
    %3994 = vmatprep.mubr.bf16.mxu0 0
    %3995 = vmatmul.mubr.bf16.gmra.mxu0 %v3951
    %v3996 = vpop.f32.mrf.mxu0
    %v3997 = vadd.f32 0.0, %v3996
    %v3998 = vpop.f32.mrf.mxu0
    %v3999 = vadd.f32 0.0, %v3998
    %v4000 = vpop.f32.mrf.mxu0
    %v4001 = vadd.f32 0.0, %v4000
    %v4002 = vpop.f32.mrf.mxu0
    %v4003 = vadd.f32 0.0, %v4002
    %4004 = vmatprep.mubr.bf16.mxu0 0
    %4005 = vmatmul.mubr.bf16.gmra.mxu0 %v3954
    %v4006 = vpop.f32.mrf.mxu0
    %v4007 = vadd.f32 0.0, %v4006
    %v4008 = vpop.f32.mrf.mxu0
    %v4009 = vadd.f32 0.0, %v4008
    %v4010 = vpop.f32.mrf.mxu0
    %v4011 = vadd.f32 0.0, %v4010
    %v4012 = vpop.f32.mrf.mxu0
    %v4013 = vadd.f32 0.0, %v4012
    %4014 = vdwg.mxu0
    %v4015 = vadd.f32 %v3855, %v3997
    %v4016 = vadd.f32 %v3856, %v3999
    %v4017 = vadd.f32 %v3857, %v4001
    %v4018 = vadd.f32 %v3858, %v4003
    %v4019 = vadd.f32 %v3859, %v4007
    %v4020 = vadd.f32 %v3860, %v4009
    %v4021 = vadd.f32 %v3861, %v4011
    %v4022 = vadd.f32 %v3862, %v4013
    %v4023 = vld [vmem:[%s2] sm:$0x3]
    %v4025 = vlaneseq
    %v4026 = vshrl.u32 %v4025, 7
    %v4027 = vsub.s32 0, %v4026
    %v4028 = vrot.slane %v4023, %v4027
    %v4029 = vlaneseq
    %v4030 = vshrl.u32 %v4029, 7
    %v4031 = vsub.s32 1, %v4030
    %v4032 = vrot.slane %v4023, %v4031
    %v4035 = vadd.f32 %v4015, %v4028
    %v4036 = vadd.f32 %v4016, %v4032
    %v4037 = vadd.f32 %v4017, %v4028
    %v4038 = vadd.f32 %v4018, %v4032
    %v4039 = vadd.f32 %v4019, %v4028
    %v4040 = vadd.f32 %v4020, %v4032
    %v4041 = vadd.f32 %v4021, %v4028
    %v4042 = vadd.f32 %v4022, %v4032
    %v4043 = vmax.f32 %v4035, 0.0
    %v4044 = vmax.f32 %v4036, 0.0
    %v4045 = vmax.f32 %v4037, 0.0
    %v4046 = vmax.f32 %v4038, 0.0
    %v4047 = vmax.f32 %v4039, 0.0
    %v4048 = vmax.f32 %v4040, 0.0
    %v4049 = vmax.f32 %v4041, 0.0
    %v4050 = vmax.f32 %v4042, 0.0
    %v4059 = vrot.slane %v4043, 1
    %v4060 = vrot.slane %v4045, 1
    %v4061 = vsel %vm904, %v4059, %v4060
    %v4062 = vrot.slane %v4044, 1
    %v4063 = vrot.slane %v4046, 1
    %v4064 = vsel %vm904, %v4062, %v4063
    %v4065 = vrot.slane %v4047, 1
    %v4066 = vsel %vm904, %v4060, %v4065
    %v4067 = vrot.slane %v4048, 1
    %v4068 = vsel %vm904, %v4063, %v4067
    %v4069 = vrot.slane %v4049, 1
    %v4070 = vsel %vm904, %v4065, %v4069
    %v4071 = vrot.slane %v4050, 1
    %v4072 = vsel %vm904, %v4067, %v4071
    %v4081 = vmax.f32 %v4043, %v4061
    %v4082 = vmax.f32 %v4044, %v4064
    %v4083 = vmax.f32 %v4045, %v4066
    %v4084 = vmax.f32 %v4046, %v4068
    %v4085 = vmax.f32 %v4047, %v4070
    %v4086 = vmax.f32 %v4048, %v4072
    %v4087 = vmax.f32 %v4049, %v4069
    %v4088 = vmax.f32 %v4050, %v4071
    %4097 = vrot.lane.b32.xlu0 %v4081, 122
    %v4098 = vpop.permute.xlu0 %4097
    %4099 = vrot.lane.b32.xlu0 %v4082, 122
    %v4100 = vpop.permute.xlu0 %4099
    %4101 = vrot.lane.b32.xlu0 %v4083, 122
    %v4102 = vpop.permute.xlu0 %4101
    %4103 = vrot.lane.b32.xlu0 %v4084, 122
    %v4104 = vpop.permute.xlu0 %4103
    %4105 = vrot.lane.b32.xlu0 %v4085, 122
    %v4106 = vpop.permute.xlu0 %4105
    %4107 = vrot.lane.b32.xlu0 %v4086, 122
    %v4108 = vpop.permute.xlu0 %4107
    %4109 = vrot.lane.b32.xlu0 %v4087, 122
    %v4110 = vpop.permute.xlu0 %4109
    %4111 = vrot.lane.b32.xlu0 %v4088, 122
    %v4112 = vpop.permute.xlu0 %4111
    %v4113 = vsel %vm959, %v4098, %v4100
    %v4114 = vsel %vm959, %v4102, %v4104
    %v4115 = vsel %vm959, %v4106, %v4108
    %v4116 = vsel %vm959, %v4110, %v4112
    %v4125 = vmax.f32 %v4081, %v4113
    %v4126 = vmax.f32 %v4082, %v4100
    %v4127 = vmax.f32 %v4083, %v4114
    %v4128 = vmax.f32 %v4084, %v4104
    %v4129 = vmax.f32 %v4085, %v4115
    %v4130 = vmax.f32 %v4086, %v4108
    %v4131 = vmax.f32 %v4087, %v4116
    %v4132 = vmax.f32 %v4088, %v4112
    %v4133 = vpack.c.bf16 %v4127, %v4125
    %v4134 = vpack.c.bf16 %v4128, %v4126
    %v4135 = vpack.c.bf16 %v4131, %v4129
    %v4136 = vpack.c.bf16 %v4132, %v4130
    %v4137 = vld [vmem:[%s3] sm:$0xff]
    %v4138 = vld [vmem:[%s3 + $0x8] sm:$0xff]
    %v4139 = vld [vmem:[%s3 + $0x10] sm:$0xff]
    %v4140 = vld [vmem:[%s3 + $0x18] sm:$0xff]
    %v4141 = vld [vmem:[%s3 + $0x20] sm:$0xff]
    %v4142 = vld [vmem:[%s3 + $0x28] sm:$0xff]
    %v4143 = vld [vmem:[%s3 + $0x30] sm:$0xff]
    %v4144 = vld [vmem:[%s3 + $0x38] sm:$0xff]
    %v4145 = vld [vmem:[%s3 + $0x40] sm:$0xff]
    %v4146 = vld [vmem:[%s3 + $0x48] sm:$0xff]
    %v4147 = vld [vmem:[%s3 + $0x50] sm:$0xff]
    %v4148 = vld [vmem:[%s3 + $0x58] sm:$0xff]
    %v4149 = vld [vmem:[%s3 + $0x60] sm:$0xff]
    %v4150 = vld [vmem:[%s3 + $0x68] sm:$0xff]
    %v4151 = vld [vmem:[%s3 + $0x70] sm:$0xff]
    %v4152 = vld [vmem:[%s3 + $0x78] sm:$0xff]
    %v4153 = vld [vmem:[%s3 + $0x80] sm:$0xff]
    %v4154 = vld [vmem:[%s3 + $0x88] sm:$0xff]
    %v4155 = vld [vmem:[%s3 + $0x90] sm:$0xff]
    %v4156 = vld [vmem:[%s3 + $0x98] sm:$0xff]
    %v4157 = vld [vmem:[%s3 + $0xa0] sm:$0xff]
    %v4158 = vld [vmem:[%s3 + $0xa8] sm:$0xff]
    %v4159 = vld [vmem:[%s3 + $0xb0] sm:$0xff]
    %v4160 = vld [vmem:[%s3 + $0xb8] sm:$0x11]
    %v4161 = vld [vmem:[%s1008] sm:$0xff]
    %v4162 = vld [vmem:[%s1008 + $0x8] sm:$0xff]
    %v4163 = vld [vmem:[%s1008 + $0x10] sm:$0xff]
    %v4164 = vld [vmem:[%s1008 + $0x18] sm:$0xff]
    %v4165 = vld [vmem:[%s1008 + $0x20] sm:$0xff]
    %v4166 = vld [vmem:[%s1008 + $0x28] sm:$0xff]
    %v4167 = vld [vmem:[%s1008 + $0x30] sm:$0xff]
    %v4168 = vld [vmem:[%s1008 + $0x38] sm:$0xff]
    %v4169 = vld [vmem:[%s1008 + $0x40] sm:$0xff]
    %v4170 = vld [vmem:[%s1008 + $0x48] sm:$0xff]
    %v4171 = vld [vmem:[%s1008 + $0x50] sm:$0xff]
    %v4172 = vld [vmem:[%s1008 + $0x58] sm:$0xff]
    %v4173 = vld [vmem:[%s1008 + $0x60] sm:$0xff]
    %v4174 = vld [vmem:[%s1008 + $0x68] sm:$0xff]
    %v4175 = vld [vmem:[%s1008 + $0x70] sm:$0xff]
    %v4176 = vld [vmem:[%s1008 + $0x78] sm:$0xff]
    %v4177 = vld [vmem:[%s1008 + $0x80] sm:$0xff]
    %v4178 = vld [vmem:[%s1008 + $0x88] sm:$0xff]
    %v4179 = vld [vmem:[%s1008 + $0x90] sm:$0xff]
    %v4180 = vld [vmem:[%s1008 + $0x98] sm:$0xff]
    %v4181 = vld [vmem:[%s1008 + $0xa0] sm:$0xff]
    %v4182 = vld [vmem:[%s1008 + $0xa8] sm:$0xff]
    %v4183 = vld [vmem:[%s1008 + $0xb0] sm:$0xff]
    %v4184 = vld [vmem:[%s1008 + $0xb8] sm:$0x11]
    %v4189 = vrot.slane %v4133, 1
    %v4190 = vrot.slane %v4135, 1
    %v4191 = vsel %vm389, %v4189, %v4190
    %v4192 = vrot.slane %v4134, 1
    %v4193 = vrot.slane %v4136, 1
    %v4194 = vsel %vm389, %v4192, %v4193
    %v4221 = vunpack.c.l.b16 %v4161
    %v4222 = vunpack.c.h.b16 %v4161
    %v4223 = vunpack.c.l.b16 %v4162
    %v4224 = vunpack.c.h.b16 %v4162
    %v4225 = vunpack.c.l.b16 %v4163
    %v4226 = vunpack.c.h.b16 %v4163
    %v4227 = vunpack.c.l.b16 %v4164
    %v4228 = vunpack.c.h.b16 %v4164
    %v4229 = vunpack.c.l.b16 %v4165
    %v4230 = vunpack.c.h.b16 %v4165
    %v4231 = vunpack.c.l.b16 %v4166
    %v4232 = vunpack.c.h.b16 %v4166
    %v4233 = vunpack.c.l.b16 %v4167
    %v4234 = vunpack.c.h.b16 %v4167
    %v4235 = vunpack.c.l.b16 %v4168
    %v4236 = vunpack.c.h.b16 %v4168
    %v4237 = vunpack.c.l.b16 %v4169
    %v4238 = vunpack.c.h.b16 %v4169
    %v4239 = vunpack.c.l.b16 %v4170
    %v4240 = vunpack.c.h.b16 %v4170
    %v4241 = vunpack.c.l.b16 %v4171
    %v4242 = vunpack.c.h.b16 %v4171
    %v4243 = vunpack.c.l.b16 %v4172
    %v4244 = vunpack.c.h.b16 %v4172
    %v4245 = vunpack.c.l.b16 %v4173
    %v4246 = vunpack.c.h.b16 %v4173
    %v4247 = vunpack.c.l.b16 %v4174
    %v4248 = vunpack.c.h.b16 %v4174
    %v4249 = vunpack.c.l.b16 %v4175
    %v4250 = vunpack.c.h.b16 %v4175
    %v4251 = vunpack.c.l.b16 %v4176
    %v4252 = vunpack.c.h.b16 %v4176
    %v4253 = vunpack.c.l.b16 %v4177
    %v4254 = vunpack.c.h.b16 %v4177
    %v4255 = vunpack.c.l.b16 %v4178
    %v4256 = vunpack.c.h.b16 %v4178
    %v4257 = vunpack.c.l.b16 %v4179
    %v4258 = vunpack.c.h.b16 %v4179
    %v4259 = vunpack.c.l.b16 %v4180
    %v4260 = vunpack.c.h.b16 %v4180
    %v4261 = vunpack.c.l.b16 %v4181
    %v4262 = vunpack.c.h.b16 %v4181
    %v4263 = vunpack.c.l.b16 %v4182
    %v4264 = vunpack.c.h.b16 %v4182
    %v4265 = vunpack.c.l.b16 %v4183
    %v4266 = vunpack.c.h.b16 %v4183
    %v4267 = vunpack.c.l.b16 %v4184
    %v4268 = vunpack.c.h.b16 %v4184
    %v4269 = vpack.c.b16 %v4223, %v4221
    %v4270 = vpack.c.b16 %v4224, %v4222
    %v4271 = vpack.c.b16 %v4227, %v4225
    %v4272 = vpack.c.b16 %v4228, %v4226
    %v4273 = vpack.c.b16 %v4231, %v4229
    %v4274 = vpack.c.b16 %v4232, %v4230
    %v4275 = vpack.c.b16 %v4235, %v4233
    %v4276 = vpack.c.b16 %v4236, %v4234
    %v4277 = vpack.c.b16 %v4239, %v4237
    %v4278 = vpack.c.b16 %v4240, %v4238
    %v4279 = vpack.c.b16 %v4243, %v4241
    %v4280 = vpack.c.b16 %v4244, %v4242
    %v4281 = vpack.c.b16 %v4247, %v4245
    %v4282 = vpack.c.b16 %v4248, %v4246
    %v4283 = vpack.c.b16 %v4251, %v4249
    %v4284 = vpack.c.b16 %v4252, %v4250
    %v4285 = vpack.c.b16 %v4255, %v4253
    %v4286 = vpack.c.b16 %v4256, %v4254
    %v4287 = vpack.c.b16 %v4259, %v4257
    %v4288 = vpack.c.b16 %v4260, %v4258
    %v4289 = vpack.c.b16 %v4263, %v4261
    %v4290 = vpack.c.b16 %v4264, %v4262
    %v4291 = vpack.c.b16 %v4267, %v4265
    %v4292 = vpack.c.b16 %v4268, %v4266
    %v4316 = vsel %vm1163, %v4194, 0
    %v4319 = vsel %vm1163, %v4193, 0
    %v4322 = vsel %vm1170, %v4291, 0
    %v4325 = vsel %vm1170, %v4292, 0
    %4327 = vmatprep.subr.bf16.mxu0 %v4284
    %4328 = vmatpush1.bf16.msra.mxu0 %v4283
    %4329 = vmatprep.subr.bf16.mxu0 %v4282
    %4330 = vmatpush1.bf16.msra.mxu0 %v4281
    %4331 = vmatprep.subr.bf16.mxu0 %v4280
    %4332 = vmatpush1.bf16.msra.mxu0 %v4279
    %4333 = vmatprep.subr.bf16.mxu0 %v4278
    %4334 = vmatpush1.bf16.msra.mxu0 %v4277
    %4335 = vmatprep.subr.bf16.mxu0 %v4276
    %4336 = vmatpush1.bf16.msra.mxu0 %v4275
    %4337 = vmatprep.subr.bf16.mxu0 %v4274
    %4338 = vmatpush1.bf16.msra.mxu0 %v4273
    %4339 = vmatprep.subr.bf16.mxu0 %v4272
    %4340 = vmatpush1.bf16.msra.mxu0 %v4271
    %4341 = vmatprep.subr.bf16.mxu0 %v4270
    %4342 = vmatpush1.bf16.msra.mxu0 %v4269
    %4343 = vmatprep.subr.bf16.mxu0 0
    %4344 = vmatpush2.bf16.msra.mxu0 0
    %4345 = vmatprep.subr.bf16.mxu0 0
    %4346 = vmatpush2.bf16.msra.mxu0 0
    %4347 = vmatprep.subr.bf16.mxu0 0
    %4348 = vmatpush2.bf16.msra.mxu0 0
    %4349 = vmatprep.subr.bf16.mxu0 0
    %4350 = vmatpush2.bf16.msra.mxu0 0
    %4351 = vmatprep.subr.bf16.mxu0 %v4325
    %4352 = vmatpush2.bf16.msra.mxu0 %v4322
    %4353 = vmatprep.subr.bf16.mxu0 %v4290
    %4354 = vmatpush2.bf16.msra.mxu0 %v4289
    %4355 = vmatprep.subr.bf16.mxu0 %v4288
    %4356 = vmatpush2.bf16.msra.mxu0 %v4287
    %4357 = vmatprep.subr.bf16.mxu0 %v4286
    %4358 = vmatpush2.bf16.msra.mxu0 %v4285
    %4359 = vmatprep.mubr.bf16.mxu0 %v4316
    %4360 = vmatmul.mubr.bf16.gmra.mxu0 %v4191
    %v4361 = vpop.f32.mrf.mxu0
    %v4362 = vadd.f32 0.0, %v4361
    %v4363 = vpop.f32.mrf.mxu0
    %v4364 = vadd.f32 0.0, %v4363
    %v4365 = vpop.f32.mrf.mxu0
    %v4366 = vadd.f32 0.0, %v4365
    %v4367 = vpop.f32.mrf.mxu0
    %v4368 = vadd.f32 0.0, %v4367
    %4369 = vmatprep.mubr.bf16.mxu0 %v4319
    %4370 = vmatmul.mubr.bf16.gmra.mxu0 %v4190
    %v4371 = vpop.f32.mrf.mxu0
    %v4372 = vadd.f32 0.0, %v4371
    %v4373 = vpop.f32.mrf.mxu0
    %v4374 = vadd.f32 0.0, %v4373
    %v4375 = vpop.f32.mrf.mxu0
    %v4376 = vpop.f32.mrf.mxu0
    %4377 = vdwg.mxu0
    %v4402 = vunpack.c.l.b16 %v4137
    %v4403 = vunpack.c.h.b16 %v4137
    %v4404 = vunpack.c.l.b16 %v4138
    %v4405 = vunpack.c.h.b16 %v4138
    %v4406 = vunpack.c.l.b16 %v4139
    %v4407 = vunpack.c.h.b16 %v4139
    %v4408 = vunpack.c.l.b16 %v4140
    %v4409 = vunpack.c.h.b16 %v4140
    %v4410 = vunpack.c.l.b16 %v4141
    %v4411 = vunpack.c.h.b16 %v4141
    %v4412 = vunpack.c.l.b16 %v4142
    %v4413 = vunpack.c.h.b16 %v4142
    %v4414 = vunpack.c.l.b16 %v4143
    %v4415 = vunpack.c.h.b16 %v4143
    %v4416 = vunpack.c.l.b16 %v4144
    %v4417 = vunpack.c.h.b16 %v4144
    %v4418 = vunpack.c.l.b16 %v4145
    %v4419 = vunpack.c.h.b16 %v4145
    %v4420 = vunpack.c.l.b16 %v4146
    %v4421 = vunpack.c.h.b16 %v4146
    %v4422 = vunpack.c.l.b16 %v4147
    %v4423 = vunpack.c.h.b16 %v4147
    %v4424 = vunpack.c.l.b16 %v4148
    %v4425 = vunpack.c.h.b16 %v4148
    %v4426 = vunpack.c.l.b16 %v4149
    %v4427 = vunpack.c.h.b16 %v4149
    %v4428 = vunpack.c.l.b16 %v4150
    %v4429 = vunpack.c.h.b16 %v4150
    %v4430 = vunpack.c.l.b16 %v4151
    %v4431 = vunpack.c.h.b16 %v4151
    %v4432 = vunpack.c.l.b16 %v4152
    %v4433 = vunpack.c.h.b16 %v4152
    %v4434 = vunpack.c.l.b16 %v4153
    %v4435 = vunpack.c.h.b16 %v4153
    %v4436 = vunpack.c.l.b16 %v4154
    %v4437 = vunpack.c.h.b16 %v4154
    %v4438 = vunpack.c.l.b16 %v4155
    %v4439 = vunpack.c.h.b16 %v4155
    %v4440 = vunpack.c.l.b16 %v4156
    %v4441 = vunpack.c.h.b16 %v4156
    %v4442 = vunpack.c.l.b16 %v4157
    %v4443 = vunpack.c.h.b16 %v4157
    %v4444 = vunpack.c.l.b16 %v4158
    %v4445 = vunpack.c.h.b16 %v4158
    %v4446 = vunpack.c.l.b16 %v4159
    %v4447 = vunpack.c.h.b16 %v4159
    %v4448 = vunpack.c.l.b16 %v4160
    %v4449 = vunpack.c.h.b16 %v4160
    %v4450 = vpack.c.b16 %v4404, %v4402
    %v4451 = vpack.c.b16 %v4405, %v4403
    %v4452 = vpack.c.b16 %v4408, %v4406
    %v4453 = vpack.c.b16 %v4409, %v4407
    %v4454 = vpack.c.b16 %v4412, %v4410
    %v4455 = vpack.c.b16 %v4413, %v4411
    %v4456 = vpack.c.b16 %v4416, %v4414
    %v4457 = vpack.c.b16 %v4417, %v4415
    %v4458 = vpack.c.b16 %v4420, %v4418
    %v4459 = vpack.c.b16 %v4421, %v4419
    %v4460 = vpack.c.b16 %v4424, %v4422
    %v4461 = vpack.c.b16 %v4425, %v4423
    %v4462 = vpack.c.b16 %v4428, %v4426
    %v4463 = vpack.c.b16 %v4429, %v4427
    %v4464 = vpack.c.b16 %v4432, %v4430
    %v4465 = vpack.c.b16 %v4433, %v4431
    %v4466 = vpack.c.b16 %v4436, %v4434
    %v4467 = vpack.c.b16 %v4437, %v4435
    %v4468 = vpack.c.b16 %v4440, %v4438
    %v4469 = vpack.c.b16 %v4441, %v4439
    %v4470 = vpack.c.b16 %v4444, %v4442
    %v4471 = vpack.c.b16 %v4445, %v4443
    %v4472 = vpack.c.b16 %v4448, %v4446
    %v4473 = vpack.c.b16 %v4449, %v4447
    %v4497 = vsel %vm1163, %v4134, 0
    %v4500 = vsel %vm1163, %v4136, 0
    %v4503 = vsel %vm1170, %v4472, 0
    %v4506 = vsel %vm1170, %v4473, 0
    %4508 = vmatprep.subr.bf16.mxu0 %v4465
    %4509 = vmatpush1.bf16.msra.mxu0 %v4464
    %4510 = vmatprep.subr.bf16.mxu0 %v4463
    %4511 = vmatpush1.bf16.msra.mxu0 %v4462
    %4512 = vmatprep.subr.bf16.mxu0 %v4461
    %4513 = vmatpush1.bf16.msra.mxu0 %v4460
    %4514 = vmatprep.subr.bf16.mxu0 %v4459
    %4515 = vmatpush1.bf16.msra.mxu0 %v4458
    %4516 = vmatprep.subr.bf16.mxu0 %v4457
    %4517 = vmatpush1.bf16.msra.mxu0 %v4456
    %4518 = vmatprep.subr.bf16.mxu0 %v4455
    %4519 = vmatpush1.bf16.msra.mxu0 %v4454
    %4520 = vmatprep.subr.bf16.mxu0 %v4453
    %4521 = vmatpush1.bf16.msra.mxu0 %v4452
    %4522 = vmatprep.subr.bf16.mxu0 %v4451
    %4523 = vmatpush1.bf16.msra.mxu0 %v4450
    %4524 = vmatprep.subr.bf16.mxu0 0
    %4525 = vmatpush2.bf16.msra.mxu0 0
    %4526 = vmatprep.subr.bf16.mxu0 0
    %4527 = vmatpush2.bf16.msra.mxu0 0
    %4528 = vmatprep.subr.bf16.mxu0 0
    %4529 = vmatpush2.bf16.msra.mxu0 0
    %4530 = vmatprep.subr.bf16.mxu0 0
    %4531 = vmatpush2.bf16.msra.mxu0 0
    %4532 = vmatprep.subr.bf16.mxu0 %v4506
    %4533 = vmatpush2.bf16.msra.mxu0 %v4503
    %4534 = vmatprep.subr.bf16.mxu0 %v4471
    %4535 = vmatpush2.bf16.msra.mxu0 %v4470
    %4536 = vmatprep.subr.bf16.mxu0 %v4469
    %4537 = vmatpush2.bf16.msra.mxu0 %v4468
    %4538 = vmatprep.subr.bf16.mxu0 %v4467
    %4539 = vmatpush2.bf16.msra.mxu0 %v4466
    %4540 = vmatprep.mubr.bf16.mxu0 %v4497
    %4541 = vmatmul.mubr.bf16.gmra.mxu0 %v4133
    %v4542 = vpop.f32.mrf.mxu0
    %v4543 = vadd.f32 %v4362, %v4542
    %v4544 = vpop.f32.mrf.mxu0
    %v4545 = vadd.f32 %v4364, %v4544
    %v4546 = vpop.f32.mrf.mxu0
    %v4547 = vadd.f32 %v4366, %v4546
    %v4548 = vpop.f32.mrf.mxu0
    %v4549 = vadd.f32 %v4368, %v4548
    %4550 = vmatprep.mubr.bf16.mxu0 %v4500
    %4551 = vmatmul.mubr.bf16.gmra.mxu0 %v4135
    %v4552 = vpop.f32.mrf.mxu0
    %v4553 = vadd.f32 %v4372, %v4552
    %v4554 = vpop.f32.mrf.mxu0
    %v4555 = vadd.f32 %v4374, %v4554
    %v4556 = vpop.f32.mrf.mxu0
    %v4557 = vpop.f32.mrf.mxu0
    %4558 = vdwg.mxu0
    %v4559 = vld [vmem:[%s1409] sm:$0xff]
    %v4560 = vld [vmem:[%s1409 + $0x8] sm:$0xff]
    %v4561 = vld [vmem:[%s1409 + $0x10] sm:$0xff]
    %v4562 = vld [vmem:[%s1409 + $0x18] sm:$0xff]
    %v4563 = vld [vmem:[%s1409 + $0x20] sm:$0xff]
    %v4564 = vld [vmem:[%s1409 + $0x28] sm:$0xff]
    %v4565 = vld [vmem:[%s1409 + $0x30] sm:$0xff]
    %v4566 = vld [vmem:[%s1409 + $0x38] sm:$0xff]
    %v4567 = vld [vmem:[%s1409 + $0x40] sm:$0xff]
    %v4568 = vld [vmem:[%s1409 + $0x48] sm:$0xff]
    %v4569 = vld [vmem:[%s1409 + $0x50] sm:$0xff]
    %v4570 = vld [vmem:[%s1409 + $0x58] sm:$0xff]
    %v4571 = vld [vmem:[%s1409 + $0x60] sm:$0xff]
    %v4572 = vld [vmem:[%s1409 + $0x68] sm:$0xff]
    %v4573 = vld [vmem:[%s1409 + $0x70] sm:$0xff]
    %v4574 = vld [vmem:[%s1409 + $0x78] sm:$0xff]
    %v4575 = vld [vmem:[%s1409 + $0x80] sm:$0xff]
    %v4576 = vld [vmem:[%s1409 + $0x88] sm:$0xff]
    %v4577 = vld [vmem:[%s1409 + $0x90] sm:$0xff]
    %v4578 = vld [vmem:[%s1409 + $0x98] sm:$0xff]
    %v4579 = vld [vmem:[%s1409 + $0xa0] sm:$0xff]
    %v4580 = vld [vmem:[%s1409 + $0xa8] sm:$0xff]
    %v4581 = vld [vmem:[%s1409 + $0xb0] sm:$0xff]
    %v4582 = vld [vmem:[%s1409 + $0xb8] sm:$0x11]
    %v4583 = vrot.slane %v4133, 2
    %v4584 = vrot.slane %v4135, 2
    %v4585 = vsel %vm721, %v4583, %v4584
    %v4586 = vrot.slane %v4134, 2
    %v4587 = vrot.slane %v4136, 2
    %v4588 = vsel %vm721, %v4586, %v4587
    %v4615 = vunpack.c.l.b16 %v4559
    %v4616 = vunpack.c.h.b16 %v4559
    %v4617 = vunpack.c.l.b16 %v4560
    %v4618 = vunpack.c.h.b16 %v4560
    %v4619 = vunpack.c.l.b16 %v4561
    %v4620 = vunpack.c.h.b16 %v4561
    %v4621 = vunpack.c.l.b16 %v4562
    %v4622 = vunpack.c.h.b16 %v4562
    %v4623 = vunpack.c.l.b16 %v4563
    %v4624 = vunpack.c.h.b16 %v4563
    %v4625 = vunpack.c.l.b16 %v4564
    %v4626 = vunpack.c.h.b16 %v4564
    %v4627 = vunpack.c.l.b16 %v4565
    %v4628 = vunpack.c.h.b16 %v4565
    %v4629 = vunpack.c.l.b16 %v4566
    %v4630 = vunpack.c.h.b16 %v4566
    %v4631 = vunpack.c.l.b16 %v4567
    %v4632 = vunpack.c.h.b16 %v4567
    %v4633 = vunpack.c.l.b16 %v4568
    %v4634 = vunpack.c.h.b16 %v4568
    %v4635 = vunpack.c.l.b16 %v4569
    %v4636 = vunpack.c.h.b16 %v4569
    %v4637 = vunpack.c.l.b16 %v4570
    %v4638 = vunpack.c.h.b16 %v4570
    %v4639 = vunpack.c.l.b16 %v4571
    %v4640 = vunpack.c.h.b16 %v4571
    %v4641 = vunpack.c.l.b16 %v4572
    %v4642 = vunpack.c.h.b16 %v4572
    %v4643 = vunpack.c.l.b16 %v4573
    %v4644 = vunpack.c.h.b16 %v4573
    %v4645 = vunpack.c.l.b16 %v4574
    %v4646 = vunpack.c.h.b16 %v4574
    %v4647 = vunpack.c.l.b16 %v4575
    %v4648 = vunpack.c.h.b16 %v4575
    %v4649 = vunpack.c.l.b16 %v4576
    %v4650 = vunpack.c.h.b16 %v4576
    %v4651 = vunpack.c.l.b16 %v4577
    %v4652 = vunpack.c.h.b16 %v4577
    %v4653 = vunpack.c.l.b16 %v4578
    %v4654 = vunpack.c.h.b16 %v4578
    %v4655 = vunpack.c.l.b16 %v4579
    %v4656 = vunpack.c.h.b16 %v4579
    %v4657 = vunpack.c.l.b16 %v4580
    %v4658 = vunpack.c.h.b16 %v4580
    %v4659 = vunpack.c.l.b16 %v4581
    %v4660 = vunpack.c.h.b16 %v4581
    %v4661 = vunpack.c.l.b16 %v4582
    %v4662 = vunpack.c.h.b16 %v4582
    %v4663 = vpack.c.b16 %v4617, %v4615
    %v4664 = vpack.c.b16 %v4618, %v4616
    %v4665 = vpack.c.b16 %v4621, %v4619
    %v4666 = vpack.c.b16 %v4622, %v4620
    %v4667 = vpack.c.b16 %v4625, %v4623
    %v4668 = vpack.c.b16 %v4626, %v4624
    %v4669 = vpack.c.b16 %v4629, %v4627
    %v4670 = vpack.c.b16 %v4630, %v4628
    %v4671 = vpack.c.b16 %v4633, %v4631
    %v4672 = vpack.c.b16 %v4634, %v4632
    %v4673 = vpack.c.b16 %v4637, %v4635
    %v4674 = vpack.c.b16 %v4638, %v4636
    %v4675 = vpack.c.b16 %v4641, %v4639
    %v4676 = vpack.c.b16 %v4642, %v4640
    %v4677 = vpack.c.b16 %v4645, %v4643
    %v4678 = vpack.c.b16 %v4646, %v4644
    %v4679 = vpack.c.b16 %v4649, %v4647
    %v4680 = vpack.c.b16 %v4650, %v4648
    %v4681 = vpack.c.b16 %v4653, %v4651
    %v4682 = vpack.c.b16 %v4654, %v4652
    %v4683 = vpack.c.b16 %v4657, %v4655
    %v4684 = vpack.c.b16 %v4658, %v4656
    %v4685 = vpack.c.b16 %v4661, %v4659
    %v4686 = vpack.c.b16 %v4662, %v4660
    %v4710 = vsel %vm1163, %v4588, 0
    %v4713 = vsel %vm1163, %v4587, 0
    %v4716 = vsel %vm1170, %v4685, 0
    %v4719 = vsel %vm1170, %v4686, 0
    %4721 = vmatprep.subr.bf16.mxu0 %v4678
    %4722 = vmatpush1.bf16.msra.mxu0 %v4677
    %4723 = vmatprep.subr.bf16.mxu0 %v4676
    %4724 = vmatpush1.bf16.msra.mxu0 %v4675
    %4725 = vmatprep.subr.bf16.mxu0 %v4674
    %4726 = vmatpush1.bf16.msra.mxu0 %v4673
    %4727 = vmatprep.subr.bf16.mxu0 %v4672
    %4728 = vmatpush1.bf16.msra.mxu0 %v4671
    %4729 = vmatprep.subr.bf16.mxu0 %v4670
    %4730 = vmatpush1.bf16.msra.mxu0 %v4669
    %4731 = vmatprep.subr.bf16.mxu0 %v4668
    %4732 = vmatpush1.bf16.msra.mxu0 %v4667
    %4733 = vmatprep.subr.bf16.mxu0 %v4666
    %4734 = vmatpush1.bf16.msra.mxu0 %v4665
    %4735 = vmatprep.subr.bf16.mxu0 %v4664
    %4736 = vmatpush1.bf16.msra.mxu0 %v4663
    %4737 = vmatprep.subr.bf16.mxu0 0
    %4738 = vmatpush2.bf16.msra.mxu0 0
    %4739 = vmatprep.subr.bf16.mxu0 0
    %4740 = vmatpush2.bf16.msra.mxu0 0
    %4741 = vmatprep.subr.bf16.mxu0 0
    %4742 = vmatpush2.bf16.msra.mxu0 0
    %4743 = vmatprep.subr.bf16.mxu0 0
    %4744 = vmatpush2.bf16.msra.mxu0 0
    %4745 = vmatprep.subr.bf16.mxu0 %v4719
    %4746 = vmatpush2.bf16.msra.mxu0 %v4716
    %4747 = vmatprep.subr.bf16.mxu0 %v4684
    %4748 = vmatpush2.bf16.msra.mxu0 %v4683
    %4749 = vmatprep.subr.bf16.mxu0 %v4682
    %4750 = vmatpush2.bf16.msra.mxu0 %v4681
    %4751 = vmatprep.subr.bf16.mxu0 %v4680
    %4752 = vmatpush2.bf16.msra.mxu0 %v4679
    %4753 = vmatprep.mubr.bf16.mxu0 %v4710
    %4754 = vmatmul.mubr.bf16.gmra.mxu0 %v4585
    %v4755 = vpop.f32.mrf.mxu0
    %v4756 = vadd.f32 0.0, %v4755
    %v4757 = vpop.f32.mrf.mxu0
    %v4758 = vadd.f32 0.0, %v4757
    %v4759 = vpop.f32.mrf.mxu0
    %v4760 = vadd.f32 0.0, %v4759
    %v4761 = vpop.f32.mrf.mxu0
    %v4762 = vadd.f32 0.0, %v4761
    %4763 = vmatprep.mubr.bf16.mxu0 %v4713
    %4764 = vmatmul.mubr.bf16.gmra.mxu0 %v4584
    %v4765 = vpop.f32.mrf.mxu0
    %v4766 = vadd.f32 0.0, %v4765
    %v4767 = vpop.f32.mrf.mxu0
    %v4768 = vadd.f32 0.0, %v4767
    %v4769 = vpop.f32.mrf.mxu0
    %v4770 = vpop.f32.mrf.mxu0
    %4771 = vdwg.mxu0
    %v4772 = vadd.f32 %v4543, %v4756
    %v4773 = vadd.f32 %v4545, %v4758
    %v4774 = vadd.f32 %v4547, %v4760
    %v4775 = vadd.f32 %v4549, %v4762
    %v4776 = vadd.f32 %v4553, %v4766
    %v4777 = vadd.f32 %v4555, %v4768
    %v4778 = vld [vmem:[%s1629] sm:$0xff]
    %v4779 = vld [vmem:[%s1629 + $0x8] sm:$0xff]
    %v4780 = vld [vmem:[%s1629 + $0x10] sm:$0xff]
    %v4781 = vld [vmem:[%s1629 + $0x18] sm:$0xff]
    %v4782 = vld [vmem:[%s1629 + $0x20] sm:$0xff]
    %v4783 = vld [vmem:[%s1629 + $0x28] sm:$0xff]
    %v4784 = vld [vmem:[%s1629 + $0x30] sm:$0xff]
    %v4785 = vld [vmem:[%s1629 + $0x38] sm:$0xff]
    %v4786 = vld [vmem:[%s1629 + $0x40] sm:$0xff]
    %v4787 = vld [vmem:[%s1629 + $0x48] sm:$0xff]
    %v4788 = vld [vmem:[%s1629 + $0x50] sm:$0xff]
    %v4789 = vld [vmem:[%s1629 + $0x58] sm:$0xff]
    %v4790 = vld [vmem:[%s1629 + $0x60] sm:$0xff]
    %v4791 = vld [vmem:[%s1629 + $0x68] sm:$0xff]
    %v4792 = vld [vmem:[%s1629 + $0x70] sm:$0xff]
    %v4793 = vld [vmem:[%s1629 + $0x78] sm:$0xff]
    %v4794 = vld [vmem:[%s1629 + $0x80] sm:$0xff]
    %v4795 = vld [vmem:[%s1629 + $0x88] sm:$0xff]
    %v4796 = vld [vmem:[%s1629 + $0x90] sm:$0xff]
    %v4797 = vld [vmem:[%s1629 + $0x98] sm:$0xff]
    %v4798 = vld [vmem:[%s1629 + $0xa0] sm:$0xff]
    %v4799 = vld [vmem:[%s1629 + $0xa8] sm:$0xff]
    %v4800 = vld [vmem:[%s1629 + $0xb0] sm:$0xff]
    %v4801 = vld [vmem:[%s1629 + $0xb8] sm:$0x11]
    %v4802 = vrot.slane %v4133, 3
    %v4803 = vrot.slane %v4135, 3
    %v4804 = vsel %vm1654, %v4802, %v4803
    %v4805 = vrot.slane %v4134, 3
    %v4806 = vrot.slane %v4136, 3
    %v4807 = vsel %vm1654, %v4805, %v4806
    %v4834 = vunpack.c.l.b16 %v4778
    %v4835 = vunpack.c.h.b16 %v4778
    %v4836 = vunpack.c.l.b16 %v4779
    %v4837 = vunpack.c.h.b16 %v4779
    %v4838 = vunpack.c.l.b16 %v4780
    %v4839 = vunpack.c.h.b16 %v4780
    %v4840 = vunpack.c.l.b16 %v4781
    %v4841 = vunpack.c.h.b16 %v4781
    %v4842 = vunpack.c.l.b16 %v4782
    %v4843 = vunpack.c.h.b16 %v4782
    %v4844 = vunpack.c.l.b16 %v4783
    %v4845 = vunpack.c.h.b16 %v4783
    %v4846 = vunpack.c.l.b16 %v4784
    %v4847 = vunpack.c.h.b16 %v4784
    %v4848 = vunpack.c.l.b16 %v4785
    %v4849 = vunpack.c.h.b16 %v4785
    %v4850 = vunpack.c.l.b16 %v4786
    %v4851 = vunpack.c.h.b16 %v4786
    %v4852 = vunpack.c.l.b16 %v4787
    %v4853 = vunpack.c.h.b16 %v4787
    %v4854 = vunpack.c.l.b16 %v4788
    %v4855 = vunpack.c.h.b16 %v4788
    %v4856 = vunpack.c.l.b16 %v4789
    %v4857 = vunpack.c.h.b16 %v4789
    %v4858 = vunpack.c.l.b16 %v4790
    %v4859 = vunpack.c.h.b16 %v4790
    %v4860 = vunpack.c.l.b16 %v4791
    %v4861 = vunpack.c.h.b16 %v4791
    %v4862 = vunpack.c.l.b16 %v4792
    %v4863 = vunpack.c.h.b16 %v4792
    %v4864 = vunpack.c.l.b16 %v4793
    %v4865 = vunpack.c.h.b16 %v4793
    %v4866 = vunpack.c.l.b16 %v4794
    %v4867 = vunpack.c.h.b16 %v4794
    %v4868 = vunpack.c.l.b16 %v4795
    %v4869 = vunpack.c.h.b16 %v4795
    %v4870 = vunpack.c.l.b16 %v4796
    %v4871 = vunpack.c.h.b16 %v4796
    %v4872 = vunpack.c.l.b16 %v4797
    %v4873 = vunpack.c.h.b16 %v4797
    %v4874 = vunpack.c.l.b16 %v4798
    %v4875 = vunpack.c.h.b16 %v4798
    %v4876 = vunpack.c.l.b16 %v4799
    %v4877 = vunpack.c.h.b16 %v4799
    %v4878 = vunpack.c.l.b16 %v4800
    %v4879 = vunpack.c.h.b16 %v4800
    %v4880 = vunpack.c.l.b16 %v4801
    %v4881 = vunpack.c.h.b16 %v4801
    %v4882 = vpack.c.b16 %v4836, %v4834
    %v4883 = vpack.c.b16 %v4837, %v4835
    %v4884 = vpack.c.b16 %v4840, %v4838
    %v4885 = vpack.c.b16 %v4841, %v4839
    %v4886 = vpack.c.b16 %v4844, %v4842
    %v4887 = vpack.c.b16 %v4845, %v4843
    %v4888 = vpack.c.b16 %v4848, %v4846
    %v4889 = vpack.c.b16 %v4849, %v4847
    %v4890 = vpack.c.b16 %v4852, %v4850
    %v4891 = vpack.c.b16 %v4853, %v4851
    %v4892 = vpack.c.b16 %v4856, %v4854
    %v4893 = vpack.c.b16 %v4857, %v4855
    %v4894 = vpack.c.b16 %v4860, %v4858
    %v4895 = vpack.c.b16 %v4861, %v4859
    %v4896 = vpack.c.b16 %v4864, %v4862
    %v4897 = vpack.c.b16 %v4865, %v4863
    %v4898 = vpack.c.b16 %v4868, %v4866
    %v4899 = vpack.c.b16 %v4869, %v4867
    %v4900 = vpack.c.b16 %v4872, %v4870
    %v4901 = vpack.c.b16 %v4873, %v4871
    %v4902 = vpack.c.b16 %v4876, %v4874
    %v4903 = vpack.c.b16 %v4877, %v4875
    %v4904 = vpack.c.b16 %v4880, %v4878
    %v4905 = vpack.c.b16 %v4881, %v4879
    %v4929 = vsel %vm1163, %v4807, 0
    %v4932 = vsel %vm1163, %v4806, 0
    %v4935 = vsel %vm1170, %v4904, 0
    %v4938 = vsel %vm1170, %v4905, 0
    %4940 = vmatprep.subr.bf16.mxu0 %v4897
    %4941 = vmatpush1.bf16.msra.mxu0 %v4896
    %4942 = vmatprep.subr.bf16.mxu0 %v4895
    %4943 = vmatpush1.bf16.msra.mxu0 %v4894
    %4944 = vmatprep.subr.bf16.mxu0 %v4893
    %4945 = vmatpush1.bf16.msra.mxu0 %v4892
    %4946 = vmatprep.subr.bf16.mxu0 %v4891
    %4947 = vmatpush1.bf16.msra.mxu0 %v4890
    %4948 = vmatprep.subr.bf16.mxu0 %v4889
    %4949 = vmatpush1.bf16.msra.mxu0 %v4888
    %4950 = vmatprep.subr.bf16.mxu0 %v4887
    %4951 = vmatpush1.bf16.msra.mxu0 %v4886
    %4952 = vmatprep.subr.bf16.mxu0 %v4885
    %4953 = vmatpush1.bf16.msra.mxu0 %v4884
    %4954 = vmatprep.subr.bf16.mxu0 %v4883
    %4955 = vmatpush1.bf16.msra.mxu0 %v4882
    %4956 = vmatprep.subr.bf16.mxu0 0
    %4957 = vmatpush2.bf16.msra.mxu0 0
    %4958 = vmatprep.subr.bf16.mxu0 0
    %4959 = vmatpush2.bf16.msra.mxu0 0
    %4960 = vmatprep.subr.bf16.mxu0 0
    %4961 = vmatpush2.bf16.msra.mxu0 0
    %4962 = vmatprep.subr.bf16.mxu0 0
    %4963 = vmatpush2.bf16.msra.mxu0 0
    %4964 = vmatprep.subr.bf16.mxu0 %v4938
    %4965 = vmatpush2.bf16.msra.mxu0 %v4935
    %4966 = vmatprep.subr.bf16.mxu0 %v4903
    %4967 = vmatpush2.bf16.msra.mxu0 %v4902
    %4968 = vmatprep.subr.bf16.mxu0 %v4901
    %4969 = vmatpush2.bf16.msra.mxu0 %v4900
    %4970 = vmatprep.subr.bf16.mxu0 %v4899
    %4971 = vmatpush2.bf16.msra.mxu0 %v4898
    %4972 = vmatprep.mubr.bf16.mxu0 %v4929
    %4973 = vmatmul.mubr.bf16.gmra.mxu0 %v4804
    %v4974 = vpop.f32.mrf.mxu0
    %v4975 = vadd.f32 0.0, %v4974
    %v4976 = vpop.f32.mrf.mxu0
    %v4977 = vadd.f32 0.0, %v4976
    %v4978 = vpop.f32.mrf.mxu0
    %v4979 = vadd.f32 0.0, %v4978
    %v4980 = vpop.f32.mrf.mxu0
    %v4981 = vadd.f32 0.0, %v4980
    %4982 = vmatprep.mubr.bf16.mxu0 %v4932
    %4983 = vmatmul.mubr.bf16.gmra.mxu0 %v4803
    %v4984 = vpop.f32.mrf.mxu0
    %v4985 = vadd.f32 0.0, %v4984
    %v4986 = vpop.f32.mrf.mxu0
    %v4987 = vadd.f32 0.0, %v4986
    %v4988 = vpop.f32.mrf.mxu0
    %v4989 = vpop.f32.mrf.mxu0
    %4990 = vdwg.mxu0
    %v4991 = vadd.f32 %v4772, %v4975
    %v4992 = vadd.f32 %v4773, %v4977
    %v4993 = vadd.f32 %v4774, %v4979
    %v4994 = vadd.f32 %v4775, %v4981
    %v4995 = vadd.f32 %v4776, %v4985
    %v4996 = vadd.f32 %v4777, %v4987
    %v4997 = vld [vmem:[%s1850] sm:$0xff]
    %v4998 = vld [vmem:[%s1850 + $0x8] sm:$0xff]
    %v4999 = vld [vmem:[%s1850 + $0x10] sm:$0xff]
    %v5000 = vld [vmem:[%s1850 + $0x18] sm:$0xff]
    %v5001 = vld [vmem:[%s1850 + $0x20] sm:$0xff]
    %v5002 = vld [vmem:[%s1850 + $0x28] sm:$0xff]
    %v5003 = vld [vmem:[%s1850 + $0x30] sm:$0xff]
    %v5004 = vld [vmem:[%s1850 + $0x38] sm:$0xff]
    %v5005 = vld [vmem:[%s1850 + $0x40] sm:$0xff]
    %v5006 = vld [vmem:[%s1850 + $0x48] sm:$0xff]
    %v5007 = vld [vmem:[%s1850 + $0x50] sm:$0xff]
    %v5008 = vld [vmem:[%s1850 + $0x58] sm:$0xff]
    %v5009 = vld [vmem:[%s1850 + $0x60] sm:$0xff]
    %v5010 = vld [vmem:[%s1850 + $0x68] sm:$0xff]
    %v5011 = vld [vmem:[%s1850 + $0x70] sm:$0xff]
    %v5012 = vld [vmem:[%s1850 + $0x78] sm:$0xff]
    %v5013 = vld [vmem:[%s1850 + $0x80] sm:$0xff]
    %v5014 = vld [vmem:[%s1850 + $0x88] sm:$0xff]
    %v5015 = vld [vmem:[%s1850 + $0x90] sm:$0xff]
    %v5016 = vld [vmem:[%s1850 + $0x98] sm:$0xff]
    %v5017 = vld [vmem:[%s1850 + $0xa0] sm:$0xff]
    %v5018 = vld [vmem:[%s1850 + $0xa8] sm:$0xff]
    %v5019 = vld [vmem:[%s1850 + $0xb0] sm:$0xff]
    %v5020 = vld [vmem:[%s1850 + $0xb8] sm:$0x11]
    %v5021 = vrot.slane %v4133, 4
    %v5022 = vrot.slane %v4135, 4
    %v5023 = vsel %vm1875, %v5021, %v5022
    %v5024 = vrot.slane %v4134, 4
    %v5025 = vrot.slane %v4136, 4
    %v5026 = vsel %vm1875, %v5024, %v5025
    %v5053 = vunpack.c.l.b16 %v4997
    %v5054 = vunpack.c.h.b16 %v4997
    %v5055 = vunpack.c.l.b16 %v4998
    %v5056 = vunpack.c.h.b16 %v4998
    %v5057 = vunpack.c.l.b16 %v4999
    %v5058 = vunpack.c.h.b16 %v4999
    %v5059 = vunpack.c.l.b16 %v5000
    %v5060 = vunpack.c.h.b16 %v5000
    %v5061 = vunpack.c.l.b16 %v5001
    %v5062 = vunpack.c.h.b16 %v5001
    %v5063 = vunpack.c.l.b16 %v5002
    %v5064 = vunpack.c.h.b16 %v5002
    %v5065 = vunpack.c.l.b16 %v5003
    %v5066 = vunpack.c.h.b16 %v5003
    %v5067 = vunpack.c.l.b16 %v5004
    %v5068 = vunpack.c.h.b16 %v5004
    %v5069 = vunpack.c.l.b16 %v5005
    %v5070 = vunpack.c.h.b16 %v5005
    %v5071 = vunpack.c.l.b16 %v5006
    %v5072 = vunpack.c.h.b16 %v5006
    %v5073 = vunpack.c.l.b16 %v5007
    %v5074 = vunpack.c.h.b16 %v5007
    %v5075 = vunpack.c.l.b16 %v5008
    %v5076 = vunpack.c.h.b16 %v5008
    %v5077 = vunpack.c.l.b16 %v5009
    %v5078 = vunpack.c.h.b16 %v5009
    %v5079 = vunpack.c.l.b16 %v5010
    %v5080 = vunpack.c.h.b16 %v5010
    %v5081 = vunpack.c.l.b16 %v5011
    %v5082 = vunpack.c.h.b16 %v5011
    %v5083 = vunpack.c.l.b16 %v5012
    %v5084 = vunpack.c.h.b16 %v5012
    %v5085 = vunpack.c.l.b16 %v5013
    %v5086 = vunpack.c.h.b16 %v5013
    %v5087 = vunpack.c.l.b16 %v5014
    %v5088 = vunpack.c.h.b16 %v5014
    %v5089 = vunpack.c.l.b16 %v5015
    %v5090 = vunpack.c.h.b16 %v5015
    %v5091 = vunpack.c.l.b16 %v5016
    %v5092 = vunpack.c.h.b16 %v5016
    %v5093 = vunpack.c.l.b16 %v5017
    %v5094 = vunpack.c.h.b16 %v5017
    %v5095 = vunpack.c.l.b16 %v5018
    %v5096 = vunpack.c.h.b16 %v5018
    %v5097 = vunpack.c.l.b16 %v5019
    %v5098 = vunpack.c.h.b16 %v5019
    %v5099 = vunpack.c.l.b16 %v5020
    %v5100 = vunpack.c.h.b16 %v5020
    %v5101 = vpack.c.b16 %v5055, %v5053
    %v5102 = vpack.c.b16 %v5056, %v5054
    %v5103 = vpack.c.b16 %v5059, %v5057
    %v5104 = vpack.c.b16 %v5060, %v5058
    %v5105 = vpack.c.b16 %v5063, %v5061
    %v5106 = vpack.c.b16 %v5064, %v5062
    %v5107 = vpack.c.b16 %v5067, %v5065
    %v5108 = vpack.c.b16 %v5068, %v5066
    %v5109 = vpack.c.b16 %v5071, %v5069
    %v5110 = vpack.c.b16 %v5072, %v5070
    %v5111 = vpack.c.b16 %v5075, %v5073
    %v5112 = vpack.c.b16 %v5076, %v5074
    %v5113 = vpack.c.b16 %v5079, %v5077
    %v5114 = vpack.c.b16 %v5080, %v5078
    %v5115 = vpack.c.b16 %v5083, %v5081
    %v5116 = vpack.c.b16 %v5084, %v5082
    %v5117 = vpack.c.b16 %v5087, %v5085
    %v5118 = vpack.c.b16 %v5088, %v5086
    %v5119 = vpack.c.b16 %v5091, %v5089
    %v5120 = vpack.c.b16 %v5092, %v5090
    %v5121 = vpack.c.b16 %v5095, %v5093
    %v5122 = vpack.c.b16 %v5096, %v5094
    %v5123 = vpack.c.b16 %v5099, %v5097
    %v5124 = vpack.c.b16 %v5100, %v5098
    %v5148 = vsel %vm1163, %v5026, 0
    %v5151 = vsel %vm1163, %v5025, 0
    %v5154 = vsel %vm1170, %v5123, 0
    %v5157 = vsel %vm1170, %v5124, 0
    %5159 = vmatprep.subr.bf16.mxu0 %v5116
    %5160 = vmatpush1.bf16.msra.mxu0 %v5115
    %5161 = vmatprep.subr.bf16.mxu0 %v5114
    %5162 = vmatpush1.bf16.msra.mxu0 %v5113
    %5163 = vmatprep.subr.bf16.mxu0 %v5112
    %5164 = vmatpush1.bf16.msra.mxu0 %v5111
    %5165 = vmatprep.subr.bf16.mxu0 %v5110
    %5166 = vmatpush1.bf16.msra.mxu0 %v5109
    %5167 = vmatprep.subr.bf16.mxu0 %v5108
    %5168 = vmatpush1.bf16.msra.mxu0 %v5107
    %5169 = vmatprep.subr.bf16.mxu0 %v5106
    %5170 = vmatpush1.bf16.msra.mxu0 %v5105
    %5171 = vmatprep.subr.bf16.mxu0 %v5104
    %5172 = vmatpush1.bf16.msra.mxu0 %v5103
    %5173 = vmatprep.subr.bf16.mxu0 %v5102
    %5174 = vmatpush1.bf16.msra.mxu0 %v5101
    %5175 = vmatprep.subr.bf16.mxu0 0
    %5176 = vmatpush2.bf16.msra.mxu0 0
    %5177 = vmatprep.subr.bf16.mxu0 0
    %5178 = vmatpush2.bf16.msra.mxu0 0
    %5179 = vmatprep.subr.bf16.mxu0 0
    %5180 = vmatpush2.bf16.msra.mxu0 0
    %5181 = vmatprep.subr.bf16.mxu0 0
    %5182 = vmatpush2.bf16.msra.mxu0 0
    %5183 = vmatprep.subr.bf16.mxu0 %v5157
    %5184 = vmatpush2.bf16.msra.mxu0 %v5154
    %5185 = vmatprep.subr.bf16.mxu0 %v5122
    %5186 = vmatpush2.bf16.msra.mxu0 %v5121
    %5187 = vmatprep.subr.bf16.mxu0 %v5120
    %5188 = vmatpush2.bf16.msra.mxu0 %v5119
    %5189 = vmatprep.subr.bf16.mxu0 %v5118
    %5190 = vmatpush2.bf16.msra.mxu0 %v5117
    %5191 = vmatprep.mubr.bf16.mxu0 %v5148
    %5192 = vmatmul.mubr.bf16.gmra.mxu0 %v5023
    %v5193 = vpop.f32.mrf.mxu0
    %v5194 = vadd.f32 0.0, %v5193
    %v5195 = vpop.f32.mrf.mxu0
    %v5196 = vadd.f32 0.0, %v5195
    %v5197 = vpop.f32.mrf.mxu0
    %v5198 = vadd.f32 0.0, %v5197
    %v5199 = vpop.f32.mrf.mxu0
    %v5200 = vadd.f32 0.0, %v5199
    %5201 = vmatprep.mubr.bf16.mxu0 %v5151
    %5202 = vmatmul.mubr.bf16.gmra.mxu0 %v5022
    %v5203 = vpop.f32.mrf.mxu0
    %v5204 = vadd.f32 0.0, %v5203
    %v5205 = vpop.f32.mrf.mxu0
    %v5206 = vadd.f32 0.0, %v5205
    %v5207 = vpop.f32.mrf.mxu0
    %v5208 = vpop.f32.mrf.mxu0
    %5209 = vdwg.mxu0
    %v5210 = vadd.f32 %v4991, %v5194
    %v5211 = vadd.f32 %v4992, %v5196
    %v5212 = vadd.f32 %v4993, %v5198
    %v5213 = vadd.f32 %v4994, %v5200
    %v5214 = vadd.f32 %v4995, %v5204
    %v5215 = vadd.f32 %v4996, %v5206
    %v5216 = vld [vmem:[%s4] sm:$0x3]
    %v5218 = vlaneseq
    %v5219 = vshrl.u32 %v5218, 7
    %v5220 = vsub.s32 0, %v5219
    %v5221 = vrot.slane %v5216, %v5220
    %v5222 = vlaneseq
    %v5223 = vshrl.u32 %v5222, 7
    %v5224 = vsub.s32 1, %v5223
    %v5225 = vrot.slane %v5216, %v5224
    %v5228 = vadd.f32 %v5210, %v5221
    %v5229 = vadd.f32 %v5211, %v5225
    %v5230 = vadd.f32 %v5212, %v5221
    %v5231 = vadd.f32 %v5213, %v5225
    %v5232 = vadd.f32 %v5214, %v5221
    %v5233 = vadd.f32 %v5215, %v5225
    %v5234 = vmax.f32 %v5228, 0.0
    %v5235 = vmax.f32 %v5229, 0.0
    %v5236 = vmax.f32 %v5230, 0.0
    %v5237 = vmax.f32 %v5231, 0.0
    %v5238 = vmax.f32 %v5232, 0.0
    %v5239 = vmax.f32 %v5233, 0.0
    %v5246 = vrot.slane %v5234, 2
    %v5247 = vrot.slane %v5236, 2
    %v5248 = vsel %vm183, %v5246, %v5247
    %v5249 = vrot.slane %v5235, 2
    %v5250 = vrot.slane %v5237, 2
    %v5251 = vsel %vm183, %v5249, %v5250
    %v5252 = vrot.slane %v5238, 2
    %v5253 = vsel %vm183, %v5247, %v5252
    %v5254 = vrot.slane %v5239, 2
    %v5255 = vsel %vm183, %v5250, %v5254
    %v5262 = vmax.f32 %v5234, %v5248
    %v5263 = vmax.f32 %v5235, %v5251
    %v5264 = vmax.f32 %v5236, %v5253
    %v5265 = vmax.f32 %v5237, %v5255
    %v5266 = vmax.f32 %v5238, %v5252
    %v5267 = vmax.f32 %v5239, %v5254
    %5274 = vrot.lane.b32.xlu0 %v5262, 112
    %v5275 = vpop.permute.xlu0 %5274
    %5276 = vrot.lane.b32.xlu0 %v5263, 112
    %v5277 = vpop.permute.xlu0 %5276
    %5278 = vrot.lane.b32.xlu0 %v5264, 112
    %v5279 = vpop.permute.xlu0 %5278
    %5280 = vrot.lane.b32.xlu0 %v5265, 112
    %v5281 = vpop.permute.xlu0 %5280
    %5282 = vrot.lane.b32.xlu0 %v5266, 112
    %v5283 = vpop.permute.xlu0 %5282
    %5284 = vrot.lane.b32.xlu0 %v5267, 112
    %v5285 = vpop.permute.xlu0 %5284
    %v5286 = vsel %vm2141, %v5275, %v5277
    %v5287 = vsel %vm2141, %v5279, %v5281
    %v5288 = vsel %vm2141, %v5283, %v5285
    %v5295 = vmax.f32 %v5262, %v5286
    %v5296 = vmax.f32 %v5263, %v5277
    %v5297 = vmax.f32 %v5264, %v5287
    %v5298 = vmax.f32 %v5265, %v5281
    %v5299 = vmax.f32 %v5266, %v5288
    %v5300 = vmax.f32 %v5267, %v5285
    %v5301 = vpack.c.bf16 %v5297, %v5295
    %v5302 = vpack.c.bf16 %v5298, %v5296
    %v5303 = vpack.c.bf16 %v5299, %v5299
    %v5304 = vpack.c.bf16 %v5300, %v5300
    %v5305 = vld [vmem:[%s5] sm:$0xf]
    %v5306 = vld [vmem:[%s5 + $0x4] sm:$0xf]
    %v5307 = vld [vmem:[%s5 + $0x8] sm:$0xf]
    %v5308 = vld [vmem:[%s5 + $0xc] sm:$0xf]
    %v5309 = vld [vmem:[%s5 + $0x10] sm:$0xf]
    %v5310 = vld [vmem:[%s5 + $0x14] sm:$0xf]
    %v5311 = vld [vmem:[%s5 + $0x18] sm:$0xf]
    %v5312 = vld [vmem:[%s5 + $0x1c] sm:$0xf]
    %v5313 = vld [vmem:[%s5 + $0x20] sm:$0xf]
    %v5314 = vld [vmem:[%s5 + $0x24] sm:$0xf]
    %v5315 = vld [vmem:[%s5 + $0x28] sm:$0xf]
    %v5316 = vld [vmem:[%s5 + $0x2c] sm:$0xf]
    %v5317 = vld [vmem:[%s5 + $0x30] sm:$0xf]
    %v5318 = vld [vmem:[%s5 + $0x34] sm:$0xf]
    %v5319 = vld [vmem:[%s5 + $0x38] sm:$0xf]
    %v5320 = vld [vmem:[%s5 + $0x3c] sm:$0xf]
    %v5321 = vld [vmem:[%s5 + $0x40] sm:$0xf]
    %v5322 = vld [vmem:[%s5 + $0x44] sm:$0xf]
    %v5323 = vld [vmem:[%s5 + $0x48] sm:$0xf]
    %v5324 = vld [vmem:[%s5 + $0x4c] sm:$0xf]
    %v5325 = vld [vmem:[%s5 + $0x50] sm:$0xf]
    %v5326 = vld [vmem:[%s5 + $0x54] sm:$0xf]
    %v5327 = vld [vmem:[%s5 + $0x58] sm:$0xf]
    %v5328 = vld [vmem:[%s5 + $0x5c] sm:$0xf]
    %v5329 = vld [vmem:[%s5 + $0x60] sm:$0xf]
    %v5330 = vld [vmem:[%s5 + $0x64] sm:$0xf]
    %v5331 = vld [vmem:[%s5 + $0x68] sm:$0xf]
    %v5332 = vld [vmem:[%s5 + $0x6c] sm:$0xf]
    %v5333 = vld [vmem:[%s5 + $0x70] sm:$0xf]
    %v5334 = vld [vmem:[%s5 + $0x74] sm:$0xf]
    %v5335 = vld [vmem:[%s2191] sm:$0xf]
    %v5336 = vld [vmem:[%s2191 + $0x4] sm:$0xf]
    %v5337 = vld [vmem:[%s2191 + $0x8] sm:$0xf]
    %v5338 = vld [vmem:[%s2191 + $0xc] sm:$0xf]
    %v5339 = vld [vmem:[%s2191 + $0x10] sm:$0xf]
    %v5340 = vld [vmem:[%s2191 + $0x14] sm:$0xf]
    %v5341 = vld [vmem:[%s2191 + $0x18] sm:$0xf]
    %v5342 = vld [vmem:[%s2191 + $0x1c] sm:$0xf]
    %v5343 = vld [vmem:[%s2191 + $0x20] sm:$0xf]
    %v5344 = vld [vmem:[%s2191 + $0x24] sm:$0xf]
    %v5345 = vld [vmem:[%s2191 + $0x28] sm:$0xf]
    %v5346 = vld [vmem:[%s2191 + $0x2c] sm:$0xf]
    %v5347 = vld [vmem:[%s2191 + $0x30] sm:$0xf]
    %v5348 = vld [vmem:[%s2191 + $0x34] sm:$0xf]
    %v5349 = vld [vmem:[%s2191 + $0x38] sm:$0xf]
    %v5350 = vld [vmem:[%s2191 + $0x3c] sm:$0xf]
    %v5351 = vld [vmem:[%s2191 + $0x40] sm:$0xf]
    %v5352 = vld [vmem:[%s2191 + $0x44] sm:$0xf]
    %v5353 = vld [vmem:[%s2191 + $0x48] sm:$0xf]
    %v5354 = vld [vmem:[%s2191 + $0x4c] sm:$0xf]
    %v5355 = vld [vmem:[%s2191 + $0x50] sm:$0xf]
    %v5356 = vld [vmem:[%s2191 + $0x54] sm:$0xf]
    %v5357 = vld [vmem:[%s2191 + $0x58] sm:$0xf]
    %v5358 = vld [vmem:[%s2191 + $0x5c] sm:$0xf]
    %v5359 = vld [vmem:[%s2191 + $0x60] sm:$0xf]
    %v5360 = vld [vmem:[%s2191 + $0x64] sm:$0xf]
    %v5361 = vld [vmem:[%s2191 + $0x68] sm:$0xf]
    %v5362 = vld [vmem:[%s2191 + $0x6c] sm:$0xf]
    %v5363 = vld [vmem:[%s2191 + $0x70] sm:$0xf]
    %v5364 = vld [vmem:[%s2191 + $0x74] sm:$0xf]
    %v5367 = vrot.slane %v5301, 2
    %v5368 = vrot.slane %v5302, 2
    %v5400 = vunpack.c.l.b16 %v5335
    %v5401 = vunpack.c.l.b16 %v5336
    %v5402 = vunpack.c.l.b16 %v5337
    %v5403 = vunpack.c.l.b16 %v5338
    %v5404 = vunpack.c.l.b16 %v5339
    %v5405 = vunpack.c.l.b16 %v5340
    %v5406 = vunpack.c.l.b16 %v5341
    %v5407 = vunpack.c.l.b16 %v5342
    %v5408 = vunpack.c.l.b16 %v5343
    %v5409 = vunpack.c.l.b16 %v5344
    %v5410 = vunpack.c.l.b16 %v5345
    %v5411 = vunpack.c.l.b16 %v5346
    %v5412 = vunpack.c.l.b16 %v5347
    %v5413 = vunpack.c.l.b16 %v5348
    %v5414 = vunpack.c.l.b16 %v5349
    %v5415 = vunpack.c.l.b16 %v5350
    %v5416 = vunpack.c.l.b16 %v5351
    %v5417 = vunpack.c.l.b16 %v5352
    %v5418 = vunpack.c.l.b16 %v5353
    %v5419 = vunpack.c.l.b16 %v5354
    %v5420 = vunpack.c.l.b16 %v5355
    %v5421 = vunpack.c.l.b16 %v5356
    %v5422 = vunpack.c.l.b16 %v5357
    %v5423 = vunpack.c.l.b16 %v5358
    %v5424 = vunpack.c.l.b16 %v5359
    %v5425 = vunpack.c.l.b16 %v5360
    %v5426 = vunpack.c.l.b16 %v5361
    %v5427 = vunpack.c.l.b16 %v5362
    %v5428 = vunpack.c.l.b16 %v5363
    %v5429 = vunpack.c.l.b16 %v5364
    %v5430 = vpack.c.b16 %v5401, %v5400
    %v5431 = vpack.c.b16 %v5403, %v5402
    %v5432 = vpack.c.b16 %v5405, %v5404
    %v5433 = vpack.c.b16 %v5407, %v5406
    %v5434 = vpack.c.b16 %v5409, %v5408
    %v5435 = vpack.c.b16 %v5411, %v5410
    %v5436 = vpack.c.b16 %v5413, %v5412
    %v5437 = vpack.c.b16 %v5415, %v5414
    %v5438 = vpack.c.b16 %v5417, %v5416
    %v5439 = vpack.c.b16 %v5419, %v5418
    %v5440 = vpack.c.b16 %v5421, %v5420
    %v5441 = vpack.c.b16 %v5423, %v5422
    %v5442 = vpack.c.b16 %v5425, %v5424
    %v5443 = vpack.c.b16 %v5427, %v5426
    %v5444 = vpack.c.b16 %v5429, %v5428
    %v5461 = vsel %vm2141, %v5368, 0
    %5463 = vmatprep.subr.bf16.mxu0 0
    %5464 = vmatpush1.bf16.msra.mxu0 %v5437
    %5465 = vmatprep.subr.bf16.mxu0 0
    %5466 = vmatpush1.bf16.msra.mxu0 %v5436
    %5467 = vmatprep.subr.bf16.mxu0 0
    %5468 = vmatpush1.bf16.msra.mxu0 %v5435
    %5469 = vmatprep.subr.bf16.mxu0 0
    %5470 = vmatpush1.bf16.msra.mxu0 %v5434
    %5471 = vmatprep.subr.bf16.mxu0 0
    %5472 = vmatpush1.bf16.msra.mxu0 %v5433
    %5473 = vmatprep.subr.bf16.mxu0 0
    %5474 = vmatpush1.bf16.msra.mxu0 %v5432
    %5475 = vmatprep.subr.bf16.mxu0 0
    %5476 = vmatpush1.bf16.msra.mxu0 %v5431
    %5477 = vmatprep.subr.bf16.mxu0 0
    %5478 = vmatpush1.bf16.msra.mxu0 %v5430
    %5479 = vmatprep.subr.bf16.mxu0 0
    %5480 = vmatpush2.bf16.msra.mxu0 0
    %5481 = vmatprep.subr.bf16.mxu0 0
    %5482 = vmatpush2.bf16.msra.mxu0 %v5444
    %5483 = vmatprep.subr.bf16.mxu0 0
    %5484 = vmatpush2.bf16.msra.mxu0 %v5443
    %5485 = vmatprep.subr.bf16.mxu0 0
    %5486 = vmatpush2.bf16.msra.mxu0 %v5442
    %5487 = vmatprep.subr.bf16.mxu0 0
    %5488 = vmatpush2.bf16.msra.mxu0 %v5441
    %5489 = vmatprep.subr.bf16.mxu0 0
    %5490 = vmatpush2.bf16.msra.mxu0 %v5440
    %5491 = vmatprep.subr.bf16.mxu0 0
    %5492 = vmatpush2.bf16.msra.mxu0 %v5439
    %5493 = vmatprep.subr.bf16.mxu0 0
    %5494 = vmatpush2.bf16.msra.mxu0 %v5438
    %5495 = vmatprep.mubr.bf16.mxu0 %v5461
    %5496 = vmatmul.mubr.bf16.gmra.mxu0 %v5367
    %v5497 = vpop.f32.mrf.mxu0
    %v5498 = vadd.f32 0.0, %v5497
    %v5499 = vpop.f32.mrf.mxu0
    %v5500 = vpop.f32.mrf.mxu0
    %v5501 = vpop.f32.mrf.mxu0
    %5502 = vdwg.mxu0
    %v5533 = vunpack.c.l.b16 %v5305
    %v5534 = vunpack.c.l.b16 %v5306
    %v5535 = vunpack.c.l.b16 %v5307
    %v5536 = vunpack.c.l.b16 %v5308
    %v5537 = vunpack.c.l.b16 %v5309
    %v5538 = vunpack.c.l.b16 %v5310
    %v5539 = vunpack.c.l.b16 %v5311
    %v5540 = vunpack.c.l.b16 %v5312
    %v5541 = vunpack.c.l.b16 %v5313
    %v5542 = vunpack.c.l.b16 %v5314
    %v5543 = vunpack.c.l.b16 %v5315
    %v5544 = vunpack.c.l.b16 %v5316
    %v5545 = vunpack.c.l.b16 %v5317
    %v5546 = vunpack.c.l.b16 %v5318
    %v5547 = vunpack.c.l.b16 %v5319
    %v5548 = vunpack.c.l.b16 %v5320
    %v5549 = vunpack.c.l.b16 %v5321
    %v5550 = vunpack.c.l.b16 %v5322
    %v5551 = vunpack.c.l.b16 %v5323
    %v5552 = vunpack.c.l.b16 %v5324
    %v5553 = vunpack.c.l.b16 %v5325
    %v5554 = vunpack.c.l.b16 %v5326
    %v5555 = vunpack.c.l.b16 %v5327
    %v5556 = vunpack.c.l.b16 %v5328
    %v5557 = vunpack.c.l.b16 %v5329
    %v5558 = vunpack.c.l.b16 %v5330
    %v5559 = vunpack.c.l.b16 %v5331
    %v5560 = vunpack.c.l.b16 %v5332
    %v5561 = vunpack.c.l.b16 %v5333
    %v5562 = vunpack.c.l.b16 %v5334
    %v5563 = vpack.c.b16 %v5534, %v5533
    %v5564 = vpack.c.b16 %v5536, %v5535
    %v5565 = vpack.c.b16 %v5538, %v5537
    %v5566 = vpack.c.b16 %v5540, %v5539
    %v5567 = vpack.c.b16 %v5542, %v5541
    %v5568 = vpack.c.b16 %v5544, %v5543
    %v5569 = vpack.c.b16 %v5546, %v5545
    %v5570 = vpack.c.b16 %v5548, %v5547
    %v5571 = vpack.c.b16 %v5550, %v5549
    %v5572 = vpack.c.b16 %v5552, %v5551
    %v5573 = vpack.c.b16 %v5554, %v5553
    %v5574 = vpack.c.b16 %v5556, %v5555
    %v5575 = vpack.c.b16 %v5558, %v5557
    %v5576 = vpack.c.b16 %v5560, %v5559
    %v5577 = vpack.c.b16 %v5562, %v5561
    %v5594 = vsel %vm2141, %v5302, 0
    %5596 = vmatprep.subr.bf16.mxu0 0
    %5597 = vmatpush1.bf16.msra.mxu0 %v5570
    %5598 = vmatprep.subr.bf16.mxu0 0
    %5599 = vmatpush1.bf16.msra.mxu0 %v5569
    %5600 = vmatprep.subr.bf16.mxu0 0
    %5601 = vmatpush1.bf16.msra.mxu0 %v5568
    %5602 = vmatprep.subr.bf16.mxu0 0
    %5603 = vmatpush1.bf16.msra.mxu0 %v5567
    %5604 = vmatprep.subr.bf16.mxu0 0
    %5605 = vmatpush1.bf16.msra.mxu0 %v5566
    %5606 = vmatprep.subr.bf16.mxu0 0
    %5607 = vmatpush1.bf16.msra.mxu0 %v5565
    %5608 = vmatprep.subr.bf16.mxu0 0
    %5609 = vmatpush1.bf16.msra.mxu0 %v5564
    %5610 = vmatprep.subr.bf16.mxu0 0
    %5611 = vmatpush1.bf16.msra.mxu0 %v5563
    %5612 = vmatprep.subr.bf16.mxu0 0
    %5613 = vmatpush2.bf16.msra.mxu0 0
    %5614 = vmatprep.subr.bf16.mxu0 0
    %5615 = vmatpush2.bf16.msra.mxu0 %v5577
    %5616 = vmatprep.subr.bf16.mxu0 0
    %5617 = vmatpush2.bf16.msra.mxu0 %v5576
    %5618 = vmatprep.subr.bf16.mxu0 0
    %5619 = vmatpush2.bf16.msra.mxu0 %v5575
    %5620 = vmatprep.subr.bf16.mxu0 0
    %5621 = vmatpush2.bf16.msra.mxu0 %v5574
    %5622 = vmatprep.subr.bf16.mxu0 0
    %5623 = vmatpush2.bf16.msra.mxu0 %v5573
    %5624 = vmatprep.subr.bf16.mxu0 0
    %5625 = vmatpush2.bf16.msra.mxu0 %v5572
    %5626 = vmatprep.subr.bf16.mxu0 0
    %5627 = vmatpush2.bf16.msra.mxu0 %v5571
    %5628 = vmatprep.mubr.bf16.mxu0 %v5594
    %5629 = vmatmul.mubr.bf16.gmra.mxu0 %v5301
    %v5630 = vpop.f32.mrf.mxu0
    %v5631 = vadd.f32 %v5498, %v5630
    %v5632 = vpop.f32.mrf.mxu0
    %v5633 = vpop.f32.mrf.mxu0
    %v5634 = vpop.f32.mrf.mxu0
    %5635 = vdwg.mxu0
    %v5636 = vld [vmem:[%s2493] sm:$0xf]
    %v5637 = vld [vmem:[%s2493 + $0x4] sm:$0xf]
    %v5638 = vld [vmem:[%s2493 + $0x8] sm:$0xf]
    %v5639 = vld [vmem:[%s2493 + $0xc] sm:$0xf]
    %v5640 = vld [vmem:[%s2493 + $0x10] sm:$0xf]
    %v5641 = vld [vmem:[%s2493 + $0x14] sm:$0xf]
    %v5642 = vld [vmem:[%s2493 + $0x18] sm:$0xf]
    %v5643 = vld [vmem:[%s2493 + $0x1c] sm:$0xf]
    %v5644 = vld [vmem:[%s2493 + $0x20] sm:$0xf]
    %v5645 = vld [vmem:[%s2493 + $0x24] sm:$0xf]
    %v5646 = vld [vmem:[%s2493 + $0x28] sm:$0xf]
    %v5647 = vld [vmem:[%s2493 + $0x2c] sm:$0xf]
    %v5648 = vld [vmem:[%s2493 + $0x30] sm:$0xf]
    %v5649 = vld [vmem:[%s2493 + $0x34] sm:$0xf]
    %v5650 = vld [vmem:[%s2493 + $0x38] sm:$0xf]
    %v5651 = vld [vmem:[%s2493 + $0x3c] sm:$0xf]
    %v5652 = vld [vmem:[%s2493 + $0x40] sm:$0xf]
    %v5653 = vld [vmem:[%s2493 + $0x44] sm:$0xf]
    %v5654 = vld [vmem:[%s2493 + $0x48] sm:$0xf]
    %v5655 = vld [vmem:[%s2493 + $0x4c] sm:$0xf]
    %v5656 = vld [vmem:[%s2493 + $0x50] sm:$0xf]
    %v5657 = vld [vmem:[%s2493 + $0x54] sm:$0xf]
    %v5658 = vld [vmem:[%s2493 + $0x58] sm:$0xf]
    %v5659 = vld [vmem:[%s2493 + $0x5c] sm:$0xf]
    %v5660 = vld [vmem:[%s2493 + $0x60] sm:$0xf]
    %v5661 = vld [vmem:[%s2493 + $0x64] sm:$0xf]
    %v5662 = vld [vmem:[%s2493 + $0x68] sm:$0xf]
    %v5663 = vld [vmem:[%s2493 + $0x6c] sm:$0xf]
    %v5664 = vld [vmem:[%s2493 + $0x70] sm:$0xf]
    %v5665 = vld [vmem:[%s2493 + $0x74] sm:$0xf]
    %v5666 = vrot.slane %v5301, 4
    %v5667 = vrot.slane %v5302, 4
    %v5699 = vunpack.c.l.b16 %v5636
    %v5700 = vunpack.c.l.b16 %v5637
    %v5701 = vunpack.c.l.b16 %v5638
    %v5702 = vunpack.c.l.b16 %v5639
    %v5703 = vunpack.c.l.b16 %v5640
    %v5704 = vunpack.c.l.b16 %v5641
    %v5705 = vunpack.c.l.b16 %v5642
    %v5706 = vunpack.c.l.b16 %v5643
    %v5707 = vunpack.c.l.b16 %v5644
    %v5708 = vunpack.c.l.b16 %v5645
    %v5709 = vunpack.c.l.b16 %v5646
    %v5710 = vunpack.c.l.b16 %v5647
    %v5711 = vunpack.c.l.b16 %v5648
    %v5712 = vunpack.c.l.b16 %v5649
    %v5713 = vunpack.c.l.b16 %v5650
    %v5714 = vunpack.c.l.b16 %v5651
    %v5715 = vunpack.c.l.b16 %v5652
    %v5716 = vunpack.c.l.b16 %v5653
    %v5717 = vunpack.c.l.b16 %v5654
    %v5718 = vunpack.c.l.b16 %v5655
    %v5719 = vunpack.c.l.b16 %v5656
    %v5720 = vunpack.c.l.b16 %v5657
    %v5721 = vunpack.c.l.b16 %v5658
    %v5722 = vunpack.c.l.b16 %v5659
    %v5723 = vunpack.c.l.b16 %v5660
    %v5724 = vunpack.c.l.b16 %v5661
    %v5725 = vunpack.c.l.b16 %v5662
    %v5726 = vunpack.c.l.b16 %v5663
    %v5727 = vunpack.c.l.b16 %v5664
    %v5728 = vunpack.c.l.b16 %v5665
    %v5729 = vpack.c.b16 %v5700, %v5699
    %v5730 = vpack.c.b16 %v5702, %v5701
    %v5731 = vpack.c.b16 %v5704, %v5703
    %v5732 = vpack.c.b16 %v5706, %v5705
    %v5733 = vpack.c.b16 %v5708, %v5707
    %v5734 = vpack.c.b16 %v5710, %v5709
    %v5735 = vpack.c.b16 %v5712, %v5711
    %v5736 = vpack.c.b16 %v5714, %v5713
    %v5737 = vpack.c.b16 %v5716, %v5715
    %v5738 = vpack.c.b16 %v5718, %v5717
    %v5739 = vpack.c.b16 %v5720, %v5719
    %v5740 = vpack.c.b16 %v5722, %v5721
    %v5741 = vpack.c.b16 %v5724, %v5723
    %v5742 = vpack.c.b16 %v5726, %v5725
    %v5743 = vpack.c.b16 %v5728, %v5727
    %v5760 = vsel %vm2141, %v5667, 0
    %5762 = vmatprep.subr.bf16.mxu0 0
    %5763 = vmatpush1.bf16.msra.mxu0 %v5736
    %5764 = vmatprep.subr.bf16.mxu0 0
    %5765 = vmatpush1.bf16.msra.mxu0 %v5735
    %5766 = vmatprep.subr.bf16.mxu0 0
    %5767 = vmatpush1.bf16.msra.mxu0 %v5734
    %5768 = vmatprep.subr.bf16.mxu0 0
    %5769 = vmatpush1.bf16.msra.mxu0 %v5733
    %5770 = vmatprep.subr.bf16.mxu0 0
    %5771 = vmatpush1.bf16.msra.mxu0 %v5732
    %5772 = vmatprep.subr.bf16.mxu0 0
    %5773 = vmatpush1.bf16.msra.mxu0 %v5731
    %5774 = vmatprep.subr.bf16.mxu0 0
    %5775 = vmatpush1.bf16.msra.mxu0 %v5730
    %5776 = vmatprep.subr.bf16.mxu0 0
    %5777 = vmatpush1.bf16.msra.mxu0 %v5729
    %5778 = vmatprep.subr.bf16.mxu0 0
    %5779 = vmatpush2.bf16.msra.mxu0 0
    %5780 = vmatprep.subr.bf16.mxu0 0
    %5781 = vmatpush2.bf16.msra.mxu0 %v5743
    %5782 = vmatprep.subr.bf16.mxu0 0
    %5783 = vmatpush2.bf16.msra.mxu0 %v5742
    %5784 = vmatprep.subr.bf16.mxu0 0
    %5785 = vmatpush2.bf16.msra.mxu0 %v5741
    %5786 = vmatprep.subr.bf16.mxu0 0
    %5787 = vmatpush2.bf16.msra.mxu0 %v5740
    %5788 = vmatprep.subr.bf16.mxu0 0
    %5789 = vmatpush2.bf16.msra.mxu0 %v5739
    %5790 = vmatprep.subr.bf16.mxu0 0
    %5791 = vmatpush2.bf16.msra.mxu0 %v5738
    %5792 = vmatprep.subr.bf16.mxu0 0
    %5793 = vmatpush2.bf16.msra.mxu0 %v5737
    %5794 = vmatprep.mubr.bf16.mxu0 %v5760
    %5795 = vmatmul.mubr.bf16.gmra.mxu0 %v5666
    %v5796 = vpop.f32.mrf.mxu0
    %v5797 = vadd.f32 0.0, %v5796
    %v5798 = vpop.f32.mrf.mxu0
    %v5799 = vpop.f32.mrf.mxu0
    %v5800 = vpop.f32.mrf.mxu0
    %5801 = vdwg.mxu0
    %v5802 = vadd.f32 %v5631, %v5797
    %v5803 = vld [vmem:[%s2661] sm:$0xf]
    %v5804 = vld [vmem:[%s2661 + $0x4] sm:$0xf]
    %v5805 = vld [vmem:[%s2661 + $0x8] sm:$0xf]
    %v5806 = vld [vmem:[%s2661 + $0xc] sm:$0xf]
    %v5807 = vld [vmem:[%s2661 + $0x10] sm:$0xf]
    %v5808 = vld [vmem:[%s2661 + $0x14] sm:$0xf]
    %v5809 = vld [vmem:[%s2661 + $0x18] sm:$0xf]
    %v5810 = vld [vmem:[%s2661 + $0x1c] sm:$0xf]
    %v5811 = vld [vmem:[%s2661 + $0x20] sm:$0xf]
    %v5812 = vld [vmem:[%s2661 + $0x24] sm:$0xf]
    %v5813 = vld [vmem:[%s2661 + $0x28] sm:$0xf]
    %v5814 = vld [vmem:[%s2661 + $0x2c] sm:$0xf]
    %v5815 = vld [vmem:[%s2661 + $0x30] sm:$0xf]
    %v5816 = vld [vmem:[%s2661 + $0x34] sm:$0xf]
    %v5817 = vld [vmem:[%s2661 + $0x38] sm:$0xf]
    %v5818 = vld [vmem:[%s2661 + $0x3c] sm:$0xf]
    %v5819 = vld [vmem:[%s2661 + $0x40] sm:$0xf]
    %v5820 = vld [vmem:[%s2661 + $0x44] sm:$0xf]
    %v5821 = vld [vmem:[%s2661 + $0x48] sm:$0xf]
    %v5822 = vld [vmem:[%s2661 + $0x4c] sm:$0xf]
    %v5823 = vld [vmem:[%s2661 + $0x50] sm:$0xf]
    %v5824 = vld [vmem:[%s2661 + $0x54] sm:$0xf]
    %v5825 = vld [vmem:[%s2661 + $0x58] sm:$0xf]
    %v5826 = vld [vmem:[%s2661 + $0x5c] sm:$0xf]
    %v5827 = vld [vmem:[%s2661 + $0x60] sm:$0xf]
    %v5828 = vld [vmem:[%s2661 + $0x64] sm:$0xf]
    %v5829 = vld [vmem:[%s2661 + $0x68] sm:$0xf]
    %v5830 = vld [vmem:[%s2661 + $0x6c] sm:$0xf]
    %v5831 = vld [vmem:[%s2661 + $0x70] sm:$0xf]
    %v5832 = vld [vmem:[%s2661 + $0x74] sm:$0xf]
    %v5833 = vrot.slane %v5301, 6
    %v5834 = vrot.slane %v5302, 6
    %v5866 = vunpack.c.l.b16 %v5803
    %v5867 = vunpack.c.l.b16 %v5804
    %v5868 = vunpack.c.l.b16 %v5805
    %v5869 = vunpack.c.l.b16 %v5806
    %v5870 = vunpack.c.l.b16 %v5807
    %v5871 = vunpack.c.l.b16 %v5808
    %v5872 = vunpack.c.l.b16 %v5809
    %v5873 = vunpack.c.l.b16 %v5810
    %v5874 = vunpack.c.l.b16 %v5811
    %v5875 = vunpack.c.l.b16 %v5812
    %v5876 = vunpack.c.l.b16 %v5813
    %v5877 = vunpack.c.l.b16 %v5814
    %v5878 = vunpack.c.l.b16 %v5815
    %v5879 = vunpack.c.l.b16 %v5816
    %v5880 = vunpack.c.l.b16 %v5817
    %v5881 = vunpack.c.l.b16 %v5818
    %v5882 = vunpack.c.l.b16 %v5819
    %v5883 = vunpack.c.l.b16 %v5820
    %v5884 = vunpack.c.l.b16 %v5821
    %v5885 = vunpack.c.l.b16 %v5822
    %v5886 = vunpack.c.l.b16 %v5823
    %v5887 = vunpack.c.l.b16 %v5824
    %v5888 = vunpack.c.l.b16 %v5825
    %v5889 = vunpack.c.l.b16 %v5826
    %v5890 = vunpack.c.l.b16 %v5827
    %v5891 = vunpack.c.l.b16 %v5828
    %v5892 = vunpack.c.l.b16 %v5829
    %v5893 = vunpack.c.l.b16 %v5830
    %v5894 = vunpack.c.l.b16 %v5831
    %v5895 = vunpack.c.l.b16 %v5832
    %v5896 = vpack.c.b16 %v5867, %v5866
    %v5897 = vpack.c.b16 %v5869, %v5868
    %v5898 = vpack.c.b16 %v5871, %v5870
    %v5899 = vpack.c.b16 %v5873, %v5872
    %v5900 = vpack.c.b16 %v5875, %v5874
    %v5901 = vpack.c.b16 %v5877, %v5876
    %v5902 = vpack.c.b16 %v5879, %v5878
    %v5903 = vpack.c.b16 %v5881, %v5880
    %v5904 = vpack.c.b16 %v5883, %v5882
    %v5905 = vpack.c.b16 %v5885, %v5884
    %v5906 = vpack.c.b16 %v5887, %v5886
    %v5907 = vpack.c.b16 %v5889, %v5888
    %v5908 = vpack.c.b16 %v5891, %v5890
    %v5909 = vpack.c.b16 %v5893, %v5892
    %v5910 = vpack.c.b16 %v5895, %v5894
    %v5927 = vsel %vm2141, %v5834, 0
    %5929 = vmatprep.subr.bf16.mxu0 0
    %5930 = vmatpush1.bf16.msra.mxu0 %v5903
    %5931 = vmatprep.subr.bf16.mxu0 0
    %5932 = vmatpush1.bf16.msra.mxu0 %v5902
    %5933 = vmatprep.subr.bf16.mxu0 0
    %5934 = vmatpush1.bf16.msra.mxu0 %v5901
    %5935 = vmatprep.subr.bf16.mxu0 0
    %5936 = vmatpush1.bf16.msra.mxu0 %v5900
    %5937 = vmatprep.subr.bf16.mxu0 0
    %5938 = vmatpush1.bf16.msra.mxu0 %v5899
    %5939 = vmatprep.subr.bf16.mxu0 0
    %5940 = vmatpush1.bf16.msra.mxu0 %v5898
    %5941 = vmatprep.subr.bf16.mxu0 0
    %5942 = vmatpush1.bf16.msra.mxu0 %v5897
    %5943 = vmatprep.subr.bf16.mxu0 0
    %5944 = vmatpush1.bf16.msra.mxu0 %v5896
    %5945 = vmatprep.subr.bf16.mxu0 0
    %5946 = vmatpush2.bf16.msra.mxu0 0
    %5947 = vmatprep.subr.bf16.mxu0 0
    %5948 = vmatpush2.bf16.msra.mxu0 %v5910
    %5949 = vmatprep.subr.bf16.mxu0 0
    %5950 = vmatpush2.bf16.msra.mxu0 %v5909
    %5951 = vmatprep.subr.bf16.mxu0 0
    %5952 = vmatpush2.bf16.msra.mxu0 %v5908
    %5953 = vmatprep.subr.bf16.mxu0 0
    %5954 = vmatpush2.bf16.msra.mxu0 %v5907
    %5955 = vmatprep.subr.bf16.mxu0 0
    %5956 = vmatpush2.bf16.msra.mxu0 %v5906
    %5957 = vmatprep.subr.bf16.mxu0 0
    %5958 = vmatpush2.bf16.msra.mxu0 %v5905
    %5959 = vmatprep.subr.bf16.mxu0 0
    %5960 = vmatpush2.bf16.msra.mxu0 %v5904
    %5961 = vmatprep.mubr.bf16.mxu0 %v5927
    %5962 = vmatmul.mubr.bf16.gmra.mxu0 %v5833
    %v5963 = vpop.f32.mrf.mxu0
    %v5964 = vadd.f32 0.0, %v5963
    %v5965 = vpop.f32.mrf.mxu0
    %v5966 = vpop.f32.mrf.mxu0
    %v5967 = vpop.f32.mrf.mxu0
    %5968 = vdwg.mxu0
    %v5969 = vadd.f32 %v5802, %v5964
    %v5970 = vld [vmem:[%s2829] sm:$0xf]
    %v5971 = vld [vmem:[%s2829 + $0x4] sm:$0xf]
    %v5972 = vld [vmem:[%s2829 + $0x8] sm:$0xf]
    %v5973 = vld [vmem:[%s2829 + $0xc] sm:$0xf]
    %v5974 = vld [vmem:[%s2829 + $0x10] sm:$0xf]
    %v5975 = vld [vmem:[%s2829 + $0x14] sm:$0xf]
    %v5976 = vld [vmem:[%s2829 + $0x18] sm:$0xf]
    %v5977 = vld [vmem:[%s2829 + $0x1c] sm:$0xf]
    %v5978 = vld [vmem:[%s2829 + $0x20] sm:$0xf]
    %v5979 = vld [vmem:[%s2829 + $0x24] sm:$0xf]
    %v5980 = vld [vmem:[%s2829 + $0x28] sm:$0xf]
    %v5981 = vld [vmem:[%s2829 + $0x2c] sm:$0xf]
    %v5982 = vld [vmem:[%s2829 + $0x30] sm:$0xf]
    %v5983 = vld [vmem:[%s2829 + $0x34] sm:$0xf]
    %v5984 = vld [vmem:[%s2829 + $0x38] sm:$0xf]
    %v5985 = vld [vmem:[%s2829 + $0x3c] sm:$0xf]
    %v5986 = vld [vmem:[%s2829 + $0x40] sm:$0xf]
    %v5987 = vld [vmem:[%s2829 + $0x44] sm:$0xf]
    %v5988 = vld [vmem:[%s2829 + $0x48] sm:$0xf]
    %v5989 = vld [vmem:[%s2829 + $0x4c] sm:$0xf]
    %v5990 = vld [vmem:[%s2829 + $0x50] sm:$0xf]
    %v5991 = vld [vmem:[%s2829 + $0x54] sm:$0xf]
    %v5992 = vld [vmem:[%s2829 + $0x58] sm:$0xf]
    %v5993 = vld [vmem:[%s2829 + $0x5c] sm:$0xf]
    %v5994 = vld [vmem:[%s2829 + $0x60] sm:$0xf]
    %v5995 = vld [vmem:[%s2829 + $0x64] sm:$0xf]
    %v5996 = vld [vmem:[%s2829 + $0x68] sm:$0xf]
    %v5997 = vld [vmem:[%s2829 + $0x6c] sm:$0xf]
    %v5998 = vld [vmem:[%s2829 + $0x70] sm:$0xf]
    %v5999 = vld [vmem:[%s2829 + $0x74] sm:$0xf]
    %v6030 = vunpack.c.l.b16 %v5970
    %v6031 = vunpack.c.l.b16 %v5971
    %v6032 = vunpack.c.l.b16 %v5972
    %v6033 = vunpack.c.l.b16 %v5973
    %v6034 = vunpack.c.l.b16 %v5974
    %v6035 = vunpack.c.l.b16 %v5975
    %v6036 = vunpack.c.l.b16 %v5976
    %v6037 = vunpack.c.l.b16 %v5977
    %v6038 = vunpack.c.l.b16 %v5978
    %v6039 = vunpack.c.l.b16 %v5979
    %v6040 = vunpack.c.l.b16 %v5980
    %v6041 = vunpack.c.l.b16 %v5981
    %v6042 = vunpack.c.l.b16 %v5982
    %v6043 = vunpack.c.l.b16 %v5983
    %v6044 = vunpack.c.l.b16 %v5984
    %v6045 = vunpack.c.l.b16 %v5985
    %v6046 = vunpack.c.l.b16 %v5986
    %v6047 = vunpack.c.l.b16 %v5987
    %v6048 = vunpack.c.l.b16 %v5988
    %v6049 = vunpack.c.l.b16 %v5989
    %v6050 = vunpack.c.l.b16 %v5990
    %v6051 = vunpack.c.l.b16 %v5991
    %v6052 = vunpack.c.l.b16 %v5992
    %v6053 = vunpack.c.l.b16 %v5993
    %v6054 = vunpack.c.l.b16 %v5994
    %v6055 = vunpack.c.l.b16 %v5995
    %v6056 = vunpack.c.l.b16 %v5996
    %v6057 = vunpack.c.l.b16 %v5997
    %v6058 = vunpack.c.l.b16 %v5998
    %v6059 = vunpack.c.l.b16 %v5999
    %v6060 = vpack.c.b16 %v6031, %v6030
    %v6061 = vpack.c.b16 %v6033, %v6032
    %v6062 = vpack.c.b16 %v6035, %v6034
    %v6063 = vpack.c.b16 %v6037, %v6036
    %v6064 = vpack.c.b16 %v6039, %v6038
    %v6065 = vpack.c.b16 %v6041, %v6040
    %v6066 = vpack.c.b16 %v6043, %v6042
    %v6067 = vpack.c.b16 %v6045, %v6044
    %v6068 = vpack.c.b16 %v6047, %v6046
    %v6069 = vpack.c.b16 %v6049, %v6048
    %v6070 = vpack.c.b16 %v6051, %v6050
    %v6071 = vpack.c.b16 %v6053, %v6052
    %v6072 = vpack.c.b16 %v6055, %v6054
    %v6073 = vpack.c.b16 %v6057, %v6056
    %v6074 = vpack.c.b16 %v6059, %v6058
    %v6091 = vsel %vm2141, %v5304, 0
    %6093 = vmatprep.subr.bf16.mxu0 0
    %6094 = vmatpush1.bf16.msra.mxu0 %v6067
    %6095 = vmatprep.subr.bf16.mxu0 0
    %6096 = vmatpush1.bf16.msra.mxu0 %v6066
    %6097 = vmatprep.subr.bf16.mxu0 0
    %6098 = vmatpush1.bf16.msra.mxu0 %v6065
    %6099 = vmatprep.subr.bf16.mxu0 0
    %6100 = vmatpush1.bf16.msra.mxu0 %v6064
    %6101 = vmatprep.subr.bf16.mxu0 0
    %6102 = vmatpush1.bf16.msra.mxu0 %v6063
    %6103 = vmatprep.subr.bf16.mxu0 0
    %6104 = vmatpush1.bf16.msra.mxu0 %v6062
    %6105 = vmatprep.subr.bf16.mxu0 0
    %6106 = vmatpush1.bf16.msra.mxu0 %v6061
    %6107 = vmatprep.subr.bf16.mxu0 0
    %6108 = vmatpush1.bf16.msra.mxu0 %v6060
    %6109 = vmatprep.subr.bf16.mxu0 0
    %6110 = vmatpush2.bf16.msra.mxu0 0
    %6111 = vmatprep.subr.bf16.mxu0 0
    %6112 = vmatpush2.bf16.msra.mxu0 %v6074
    %6113 = vmatprep.subr.bf16.mxu0 0
    %6114 = vmatpush2.bf16.msra.mxu0 %v6073
    %6115 = vmatprep.subr.bf16.mxu0 0
    %6116 = vmatpush2.bf16.msra.mxu0 %v6072
    %6117 = vmatprep.subr.bf16.mxu0 0
    %6118 = vmatpush2.bf16.msra.mxu0 %v6071
    %6119 = vmatprep.subr.bf16.mxu0 0
    %6120 = vmatpush2.bf16.msra.mxu0 %v6070
    %6121 = vmatprep.subr.bf16.mxu0 0
    %6122 = vmatpush2.bf16.msra.mxu0 %v6069
    %6123 = vmatprep.subr.bf16.mxu0 0
    %6124 = vmatpush2.bf16.msra.mxu0 %v6068
    %6125 = vmatprep.mubr.bf16.mxu0 %v6091
    %6126 = vmatmul.mubr.bf16.gmra.mxu0 %v5303
    %v6127 = vpop.f32.mrf.mxu0
    %v6128 = vadd.f32 0.0, %v6127
    %v6129 = vpop.f32.mrf.mxu0
    %v6130 = vpop.f32.mrf.mxu0
    %v6131 = vpop.f32.mrf.mxu0
    %6132 = vdwg.mxu0
    %v6133 = vadd.f32 %v5969, %v6128
    %v6134 = vld [vmem:[%s6] sm:$0x1]
    %v6135 = vadd.f32 %v6133, %v6134
    %v6136 = vmax.f32 %v6135, 0.0
    %v6137 = vpack.c.bf16 %v6136, %v6136
    %v6138 = vld [vmem:[%s7] sm:$0xf]
    %v6139 = vld [vmem:[%s7 + $0x4] sm:$0xf]
    %v6140 = vld [vmem:[%s7 + $0x8] sm:$0xf]
    %v6141 = vld [vmem:[%s7 + $0xc] sm:$0xf]
    %v6142 = vld [vmem:[%s7 + $0x10] sm:$0xf]
    %v6143 = vld [vmem:[%s7 + $0x14] sm:$0xf]
    %v6144 = vld [vmem:[%s7 + $0x18] sm:$0xf]
    %v6145 = vld [vmem:[%s7 + $0x1c] sm:$0xf]
    %v6146 = vld [vmem:[%s7 + $0x20] sm:$0xf]
    %v6147 = vld [vmem:[%s7 + $0x24] sm:$0xf]
    %v6148 = vld [vmem:[%s7 + $0x28] sm:$0xf]
    %v6149 = vld [vmem:[%s7 + $0x2c] sm:$0xf]
    %v6150 = vld [vmem:[%s7 + $0x30] sm:$0xf]
    %v6151 = vld [vmem:[%s7 + $0x34] sm:$0xf]
    %v6152 = vld [vmem:[%s7 + $0x38] sm:$0xf]
    %v6153 = vld [vmem:[%s8] sm:$0x1]
    %v6169 = vunpack.c.l.b16 %v6138
    %v6170 = vunpack.c.l.b16 %v6139
    %v6171 = vunpack.c.l.b16 %v6140
    %v6172 = vunpack.c.l.b16 %v6141
    %v6173 = vunpack.c.l.b16 %v6142
    %v6174 = vunpack.c.l.b16 %v6143
    %v6175 = vunpack.c.l.b16 %v6144
    %v6176 = vunpack.c.l.b16 %v6145
    %v6177 = vunpack.c.l.b16 %v6146
    %v6178 = vunpack.c.l.b16 %v6147
    %v6179 = vunpack.c.l.b16 %v6148
    %v6180 = vunpack.c.l.b16 %v6149
    %v6181 = vunpack.c.l.b16 %v6150
    %v6182 = vunpack.c.l.b16 %v6151
    %v6183 = vunpack.c.l.b16 %v6152
    %v6184 = vpack.c.b16 %v6170, %v6169
    %v6185 = vpack.c.b16 %v6172, %v6171
    %v6186 = vpack.c.b16 %v6174, %v6173
    %v6187 = vpack.c.b16 %v6176, %v6175
    %v6188 = vpack.c.b16 %v6178, %v6177
    %v6189 = vpack.c.b16 %v6180, %v6179
    %v6190 = vpack.c.b16 %v6182, %v6181
    %v6191 = vpack.c.b16 %v6183, %v6183
    %v6200 = vsel %vm3059, %v6137, 0
    %v6203 = vsel %vm3063, %v6191, 0
    %6205 = vmatprep.subr.bf16.mxu0 0
    %6206 = vmatpush1.bf16.msra.mxu0 %v6203
    %6207 = vmatprep.subr.bf16.mxu0 0
    %6208 = vmatpush1.bf16.msra.mxu0 %v6190
    %6209 = vmatprep.subr.bf16.mxu0 0
    %6210 = vmatpush1.bf16.msra.mxu0 %v6189
    %6211 = vmatprep.subr.bf16.mxu0 0
    %6212 = vmatpush1.bf16.msra.mxu0 %v6188
    %6213 = vmatprep.subr.bf16.mxu0 0
    %6214 = vmatpush1.bf16.msra.mxu0 %v6187
    %6215 = vmatprep.subr.bf16.mxu0 0
    %6216 = vmatpush1.bf16.msra.mxu0 %v6186
    %6217 = vmatprep.subr.bf16.mxu0 0
    %6218 = vmatpush1.bf16.msra.mxu0 %v6185
    %6219 = vmatprep.subr.bf16.mxu0 0
    %6220 = vmatpush1.bf16.msra.mxu0 %v6184
    %6221 = vmatprep.subr.bf16.mxu0 0
    %6222 = vmatpush2.bf16.msra.mxu0 0
    %6223 = vmatprep.subr.bf16.mxu0 0
    %6224 = vmatpush2.bf16.msra.mxu0 0
    %6225 = vmatprep.subr.bf16.mxu0 0
    %6226 = vmatpush2.bf16.msra.mxu0 0
    %6227 = vmatprep.subr.bf16.mxu0 0
    %6228 = vmatpush2.bf16.msra.mxu0 0
    %6229 = vmatprep.subr.bf16.mxu0 0
    %6230 = vmatpush2.bf16.msra.mxu0 0
    %6231 = vmatprep.subr.bf16.mxu0 0
    %6232 = vmatpush2.bf16.msra.mxu0 0
    %6233 = vmatprep.subr.bf16.mxu0 0
    %6234 = vmatpush2.bf16.msra.mxu0 0
    %6235 = vmatprep.subr.bf16.mxu0 0
    %6236 = vmatpush2.bf16.msra.mxu0 0
    %6237 = vmatprep.mubr.bf16.mxu0 0
    %6238 = vmatmul.mubr.bf16.gmra.mxu0 %v6200
    %v6239 = vpop.f32.mrf.mxu0
    %v6240 = vadd.f32 %v6153, %v6239
    %v6241 = vpop.f32.mrf.mxu0
    %v6242 = vpop.f32.mrf.mxu0
    %v6243 = vpop.f32.mrf.mxu0
    %6244 = vdwg.mxu0
    %v6245 = vmax.f32 %v6240, 0.0
    %v6246 = vpack.c.bf16 %v6245, %v6245
    %v6247 = vld [vmem:[%s9] sm:$0xf]
    %v6248 = vld [vmem:[%s9 + $0x4] sm:$0xf]
    %v6249 = vld [vmem:[%s9 + $0x8] sm:$0xf]
    %v6250 = vld [vmem:[%s9 + $0xc] sm:$0xf]
    %v6251 = vld [vmem:[%s9 + $0x10] sm:$0xf]
    %v6252 = vld [vmem:[%s9 + $0x14] sm:$0xf]
    %v6253 = vld [vmem:[%s9 + $0x18] sm:$0xf]
    %v6254 = vld [vmem:[%s9 + $0x1c] sm:$0xf]
    %v6255 = vld [vmem:[%s9 + $0x20] sm:$0xf]
    %v6256 = vld [vmem:[%s9 + $0x24] sm:$0xf]
    %v6257 = vld [vmem:[%s9 + $0x28] sm:$0x3]
    %v6258 = vld [vmem:[%s10] sm:$0x1]
    %v6270 = vunpack.c.l.b16 %v6247
    %v6271 = vunpack.c.l.b16 %v6248
    %v6272 = vunpack.c.l.b16 %v6249
    %v6273 = vunpack.c.l.b16 %v6250
    %v6274 = vunpack.c.l.b16 %v6251
    %v6275 = vunpack.c.l.b16 %v6252
    %v6276 = vunpack.c.l.b16 %v6253
    %v6277 = vunpack.c.l.b16 %v6254
    %v6278 = vunpack.c.l.b16 %v6255
    %v6279 = vunpack.c.l.b16 %v6256
    %v6280 = vunpack.c.l.b16 %v6257
    %v6281 = vpack.c.b16 %v6271, %v6270
    %v6282 = vpack.c.b16 %v6273, %v6272
    %v6283 = vpack.c.b16 %v6275, %v6274
    %v6284 = vpack.c.b16 %v6277, %v6276
    %v6285 = vpack.c.b16 %v6279, %v6278
    %v6286 = vpack.c.b16 %v6280, %v6280
    %v6293 = vsel %vm3154, %v6246, 0
    %v6296 = vsel %vm3158, %v6286, 0
    %6298 = vmatprep.subr.bf16.mxu0 0
    %6299 = vmatpush1.bf16.msra.mxu0 0
    %6300 = vmatprep.subr.bf16.mxu0 0
    %6301 = vmatpush1.bf16.msra.mxu0 0
    %6302 = vmatprep.subr.bf16.mxu0 0
    %6303 = vmatpush1.bf16.msra.mxu0 %v6296
    %6304 = vmatprep.subr.bf16.mxu0 0
    %6305 = vmatpush1.bf16.msra.mxu0 %v6285
    %6306 = vmatprep.subr.bf16.mxu0 0
    %6307 = vmatpush1.bf16.msra.mxu0 %v6284
    %6308 = vmatprep.subr.bf16.mxu0 0
    %6309 = vmatpush1.bf16.msra.mxu0 %v6283
    %6310 = vmatprep.subr.bf16.mxu0 0
    %6311 = vmatpush1.bf16.msra.mxu0 %v6282
    %6312 = vmatprep.subr.bf16.mxu0 0
    %6313 = vmatpush1.bf16.msra.mxu0 %v6281
    %6314 = vmatprep.subr.bf16.mxu0 0
    %6315 = vmatpush2.bf16.msra.mxu0 0
    %6316 = vmatprep.subr.bf16.mxu0 0
    %6317 = vmatpush2.bf16.msra.mxu0 0
    %6318 = vmatprep.subr.bf16.mxu0 0
    %6319 = vmatpush2.bf16.msra.mxu0 0
    %6320 = vmatprep.subr.bf16.mxu0 0
    %6321 = vmatpush2.bf16.msra.mxu0 0
    %6322 = vmatprep.subr.bf16.mxu0 0
    %6323 = vmatpush2.bf16.msra.mxu0 0
    %6324 = vmatprep.subr.bf16.mxu0 0
    %6325 = vmatpush2.bf16.msra.mxu0 0
    %6326 = vmatprep.subr.bf16.mxu0 0
    %6327 = vmatpush2.bf16.msra.mxu0 0
    %6328 = vmatprep.subr.bf16.mxu0 0
    %6329 = vmatpush2.bf16.msra.mxu0 0
    %6330 = vmatprep.mubr.bf16.mxu0 0
    %6331 = vmatmul.mubr.bf16.gmra.mxu0 %v6293
    %v6332 = vpop.f32.mrf.mxu0
    %v6333 = vadd.f32 %v6258, %v6332
    %v6334 = vpop.f32.mrf.mxu0
    %v6335 = vpop.f32.mrf.mxu0
    %v6336 = vpop.f32.mrf.mxu0
    %6337 = vdwg.mxu0
    %s6338 = scalar_lea.vmem [#allocation2], 1
    %6339 = vst.msk [vmem:[%s6338] sm:$0x1] %vm3202, %v6333
    // Predicated region
    $region46: #{netmp_forward.1} parent=1 // pred_check
      _
    $region47: #{netmp_forward.1} parent=1 // pred_check_branch
      %6341 = sbr.rel (0) target = $region49
    $region48: #{netmp_forward.1} parent=1 // pred_region
      %s6343 = ssub.s32 32, 32
      %6344 = vsyncadd [#allocation3], %s6343
      %s6345 = sshll.u32 [#allocation2], 4
      %s6346 = int_to_ptr.vmem [resolvable:$true] %s6345
      %6351 = dma.vmem_to_hbm [thread:$0]  %s6346, 32, %s11, [#allocation3], 16, 16, 1
    $region49: #{netmp_forward.1} parent=1 // pred_fallthru
      _
    // Predicated region
    $region50: #{netmp_forward.1} parent=1 // pred_check
      _
    $region51: #{netmp_forward.1} parent=1 // pred_check_branch
      %6353 = sbr.rel (0) target = $region53
    $region52: #{netmp_forward.1} parent=1 // pred_region
      %6354 = dma.done [#allocation3], 32
    $region53: #{netmp_forward.1} parent=1 // pred_fallthru
      _
    %6355 = vsyncpa [#allocation3], 1

</llo_original>
